<compile_context>
chip_gen: v7x
topology: tpu7x:2x2x1
jax: 0.10.0
libtpu: 0.0.40
codegen_flags: <defaults>
</compile_context>

<pallas_src>
import jax
import jax.numpy as jnp
from jax.experimental import pallas as pl
from jax.experimental.pallas import tpu as pltpu


# ----------------------------------------------------------------------------
# Fused kernel: BiLSTM recurrence + 3-head attention + output linear.
# ----------------------------------------------------------------------------
def contextualized_kernel(x_ref, sm_ref, tm_ref,
                          wx_ref, wh_ref, bg_ref,
                          watt_ref, wo_ref, bo_ref,
                          out_ref,
                          xpf_s, xpb_s, hf_s, hb_s):
    T, BT, E = x_ref.shape
    H = hf_s.shape[-1]
    G = 4 * H
    f32 = jnp.float32
    bf16 = jnp.bfloat16

    # ---------------- hoisted input projection (both directions, one big matmul) ----------
    x2d = x_ref[...].reshape(T * BT, E).astype(bf16)
    xp = jnp.dot(x2d, wx_ref[...], preferred_element_type=f32) + bg_ref[...]   # [T*BT, 8H]
    xpf_s[...] = xp[:, :G].reshape(T, BT, G)
    xpb_s[...] = xp[:, G:].reshape(T, BT, G)

    wh = wh_ref[...]                       # [2H, 8H] bf16, block-diagonal (fwd|bwd gates)

    def gate_math(gates, h, c, m):
        i_g = jax.nn.sigmoid(gates[:, 0:H])
        f_g = jax.nn.sigmoid(gates[:, H:2 * H])
        g_g = jnp.tanh(gates[:, 2 * H:3 * H])
        o_g = jax.nn.sigmoid(gates[:, 3 * H:4 * H])
        c_new = f_g * c + i_g * g_g
        h_new = o_g * jnp.tanh(c_new)
        # masked (padding) steps pass the state through unchanged
        h2 = h + m * (h_new - h)
        c2 = c + m * (c_new - c)
        return h2, c2

    # ---------------- fused fwd/bwd recurrence: ONE MXU push per step ----------------
    def body(i, carry):
        hf, cf, hb, cb = carry
        r = T - 1 - i
        hcat = jnp.concatenate([hf, hb], axis=1).astype(bf16)            # [BT, 2H]
        gh = jnp.dot(hcat, wh, preferred_element_type=f32)               # [BT, 8H]
        gf = xpf_s[i] + gh[:, :G]
        gb = xpb_s[r] + gh[:, G:]
        hf, cf = gate_math(gf, hf, cf, sm_ref[i])
        hb, cb = gate_math(gb, hb, cb, sm_ref[r])
        hf_s[i] = hf.astype(bf16)          # dense time-major [BT, H] stores
        hb_s[r] = hb.astype(bf16)
        return hf, cf, hb, cb

    z = jnp.zeros((BT, H), f32)
    unroll = True if T <= 16 else 8
    jax.lax.fori_loop(0, T, body, (z, z, z, z), unroll=unroll)

    # ---------------- attention: target-mean query, 3 bilinear heads ----------------
    h_f = hf_s[...].astype(f32)            # [T, BT, H]
    h_b = hb_s[...].astype(f32)
    tm = tm_ref[...]                       # [T, BT, 1] target-span mask
    sm = sm_ref[...]                       # [T, BT, 1] sequence mask

    cnt = jnp.sum(tm, axis=0)                                   # [BT, 1]
    inv_cnt = 1.0 / jnp.maximum(cnt, 1.0)                       # exact divide (guarded)
    tgt_f = jnp.sum(h_f * tm, axis=0) * inv_cnt                 # [BT, H]
    tgt_b = jnp.sum(h_b * tm, axis=0) * inv_cnt
    tgt = jnp.concatenate([tgt_f, tgt_b], axis=1).astype(bf16)  # [BT, 2H]

    # one matmul gives all 3 heads' projections, columns packed [pf0|pf1|pf2|pb0|pb1|pb2]
    proj = jnp.dot(tgt, watt_ref[...], preferred_element_type=f32)       # [BT, 6H]

    neg = (1.0 - sm) * (-1e9)                                   # [T, BT, 1] additive mask
    ctx_f, ctx_b = [], []
    for k in range(3):
        pf_k = proj[:, k * H:(k + 1) * H]
        pb_k = proj[:, (3 + k) * H:(4 + k) * H]
        s_k = (jnp.sum(h_f * pf_k[None, :, :], axis=-1, keepdims=True)
               + jnp.sum(h_b * pb_k[None, :, :], axis=-1, keepdims=True)
               + neg)                                           # [T, BT, 1]
        s_k = s_k - jnp.max(s_k, axis=0, keepdims=True)
        e_k = jnp.exp(s_k)
        a_k = e_k * pl.reciprocal(jnp.sum(e_k, axis=0, keepdims=True), approx=True)
        ctx_f.append(jnp.sum(a_k * h_f, axis=0))                # [BT, H]
        ctx_b.append(jnp.sum(a_k * h_b, axis=0))

    # [f_s|f_l|f_r|b_s|b_l|b_r] -> matches the row-reordered output weight
    ctx_all = jnp.concatenate(ctx_f + ctx_b, axis=1).astype(bf16)        # [BT, 6H]

    # ---------------- output linear: single lane-dense matmul (Lpad = 128k) ----------------
    out_ref[...] = (jnp.dot(ctx_all, wo_ref[...], preferred_element_type=f32)
                    + bo_ref[...])


# ----------------------------------------------------------------------------
# Tiling helpers.
# ----------------------------------------------------------------------------
def _vmem_bytes(T, BT, E, H, Lpad):
    G = 4 * H
    scratch = 2 * T * BT * G * 4 + 2 * T * BT * H * 2            # xp (f32) + hidden (bf16)
    io = 2 * (T * BT * E * 4 + 2 * T * BT * 4 + BT * Lpad * 4)   # double-buffered tiles
    weights = 2 * ((E * 2 * G + 2 * H * 2 * G + 2 * H * 6 * H + 6 * H * Lpad) * 2
                   + (2 * G + Lpad) * 4)
    return scratch + io + weights


def _pick_bt(B, T, E, H, Lpad, budget=40 * 1024 * 1024):
    """Largest batch tile (multiple of 8) that divides B, fits the VMEM budget, and keeps
    >=2 grid steps when B >= 16 (so both v7x TensorCores get work)."""
    for bt in (128, 64, 32, 16, 8):
        if B % bt == 0 and _vmem_bytes(T, bt, E, H, Lpad) <= budget:
            if B >= 16 and B // bt < 2:
                continue
            return bt
    return B   # tiny / odd batches: one grid step over the whole batch (full-dim block)


# ----------------------------------------------------------------------------
# Wrapper: batch-tiled grid, single fused pallas_call.
# ----------------------------------------------------------------------------
def contextualized_pallas(x_tbe, smask_tm, tmask_tm,
                          wx_comb, wh_blk, b_comb, w_att, wo_rep, bo_pad):
    T, B, E = x_tbe.shape
    H = wo_rep.shape[0] // 6
    Lpad = wo_rep.shape[1]
    G = 4 * H
    BT = _pick_bt(B, T, E, H, Lpad)
    assert B % BT == 0
    nb = B // BT

    def full(shape):
        nd = len(shape)
        return pl.BlockSpec(shape, lambda b, _nd=nd: (0,) * _nd)

    grid_spec = pltpu.PrefetchScalarGridSpec(
        num_scalar_prefetch=0,
        grid=(nb,),
        in_specs=[
            pl.BlockSpec((T, BT, E), lambda b: (0, b, 0)),    # embeddings   (time-major)
            pl.BlockSpec((T, BT, 1), lambda b: (0, b, 0)),    # seq mask     (time-major)
            pl.BlockSpec((T, BT, 1), lambda b: (0, b, 0)),    # target mask  (time-major)
            full(wx_comb.shape), full(wh_blk.shape), full(b_comb.shape),
            full(w_att.shape), full(wo_rep.shape), full(bo_pad.shape),
        ],
        out_specs=pl.BlockSpec((BT, Lpad), lambda b: (b, 0)),
        scratch_shapes=[
            pltpu.VMEM((T, BT, G), jnp.float32),   # hoisted input projection, fwd gates
            pltpu.VMEM((T, BT, G), jnp.float32),   # hoisted input projection, bwd gates
            pltpu.VMEM((T, BT, H), jnp.bfloat16),  # fwd hidden states (time-major)
            pltpu.VMEM((T, BT, H), jnp.bfloat16),  # bwd hidden states (time-major)
        ],
    )
    est = _vmem_bytes(T, BT, E, H, Lpad)
    vmem_limit = int(min(48 * 1024 * 1024, max(32 * 1024 * 1024, 2 * est)))
    return pl.pallas_call(
        contextualized_kernel,
        out_shape=jax.ShapeDtypeStruct((B, Lpad), jnp.float32),
        grid_spec=grid_spec,
        compiler_params=pltpu.CompilerParams(
            dimension_semantics=("parallel",),
            vmem_limit_bytes=vmem_limit,
        ),
    )(x_tbe, smask_tm, tmask_tm, wx_comb, wh_blk, b_comb, w_att, wo_rep, bo_pad)


@jax.jit
def contextualized_forward(w, start, end, length, params):
    """Full forward pass. Glue (embedding lookup, masks, weight repacking) in plain JAX."""
    B, T = w.shape
    H = params["whf"].shape[0]
    L = params["wo"].shape[1]
    bf16 = jnp.bfloat16

    emb = jnp.take(params["embed"], w, axis=0)                            # [B, T, E]
    t_idx = jnp.arange(T)[None, :]
    smask = (t_idx < length[:, None]).astype(jnp.float32)                 # [B, T]
    tmask = ((t_idx >= start[:, None]) & (t_idx < end[:, None])).astype(jnp.float32)

    x_tbe = jnp.transpose(emb, (1, 0, 2))                                 # [T, B, E]
    smask_tm = jnp.transpose(smask, (1, 0))[:, :, None]                   # [T, B, 1]
    tmask_tm = jnp.transpose(tmask, (1, 0))[:, :, None]                   # [T, B, 1]

    # ---- one-time weight repacking (outside the kernel) ----
    # input projection for both directions: x @ [Wxf | Wxb]
    wx_comb = jnp.concatenate([params["wxf"], params["wxb"]], axis=1).astype(bf16)   # [E, 8H]
    b_comb = jnp.concatenate([params["bf"], params["bb"]], axis=1)                   # [1, 8H]
    # block-diagonal recurrent weight -> ONE h@Wh matmul per step for both directions
    zh = jnp.zeros((H, 4 * H), jnp.float32)
    wh_blk = jnp.concatenate(
        [jnp.concatenate([params["whf"], zh], axis=1),
         jnp.concatenate([zh, params["whb"]], axis=1)], axis=0).astype(bf16)         # [2H, 8H]
    # attention heads packed column-wise as [pf_s|pf_l|pf_r|pb_s|pb_l|pb_r]
    ws, wl, wr = params["ws"], params["wl"], params["wr"]
    w_att = jnp.concatenate([ws[:, :H], wl[:, :H], wr[:, :H],
                             ws[:, H:], wl[:, H:], wr[:, H:]], axis=1).astype(bf16)  # [2H, 6H]
    # output weight rows reordered to [f_s,f_l,f_r,b_s,b_l,b_r]; label dim padded to 128
    wo = params["wo"]
    wo_rep = jnp.concatenate([wo[0:H], wo[2 * H:3 * H], wo[4 * H:5 * H],
                              wo[H:2 * H], wo[3 * H:4 * H], wo[5 * H:6 * H]], axis=0)
    Lpad = ((max(L, 1) + 127) // 128) * 128
    wo_rep = jnp.pad(wo_rep, ((0, 0), (0, Lpad - L))).astype(bf16)                   # [6H, Lpad]
    bo_pad = jnp.pad(params["bo"], ((0, 0), (0, Lpad - L)))                          # [1, Lpad]

    out = contextualized_pallas(x_tbe, smask_tm, tmask_tm,
                                wx_comb, wh_blk, b_comb, w_att, wo_rep, bo_pad)
    return out[:, :L]


# ----------------------------------------------------------------------------
# Pure-JAX reference (f32) for a sanity check
# ----------------------------------------------------------------------------
def _lstm_ref(x_bte, mask_bt, wx, wh, b):
    B, T, _ = x_bte.shape
    H = wh.shape[0]

    def step(carry, inp):
        h, c = carry
        x_t, m_t = inp
        gates = x_t @ wx + h @ wh + b
        i = jax.nn.sigmoid(gates[:, :H])
        f = jax.nn.sigmoid(gates[:, H:2 * H])
        g = jnp.tanh(gates[:, 2 * H:3 * H])
        o = jax.nn.sigmoid(gates[:, 3 * H:])
        c_new = f * c + i * g
        h_new = o * jnp.tanh(c_new)
        m = m_t[:, None]
        h2 = m * h_new + (1 - m) * h
        c2 = m * c_new + (1 - m) * c
        return (h2, c2), h2

    init = (jnp.zeros((B, H), jnp.float32), jnp.zeros((B, H), jnp.float32))
    _, hs = jax.lax.scan(step, init,
                         (jnp.swapaxes(x_bte, 0, 1), jnp.swapaxes(mask_bt, 0, 1)))
    return jnp.swapaxes(hs, 0, 1)


def reference_forward(w, start, end, length, params):
    B, T = w.shape
    emb = jnp.take(params["embed"], w, axis=0)
    t_idx = jnp.arange(T)[None, :]
    smask = (t_idx < length[:, None]).astype(jnp.float32)
    tmask = ((t_idx >= start[:, None]) & (t_idx < end[:, None])).astype(jnp.float32)

    hf = _lstm_ref(emb, smask, params["wxf"], params["whf"], params["bf"])
    hb = _lstm_ref(emb[:, ::-1], smask[:, ::-1],
                   params["wxb"], params["whb"], params["bb"])[:, ::-1]
    h = jnp.concatenate([hf, hb], axis=-1)                               # [B, T, 2H]

    tcnt = jnp.maximum(jnp.sum(tmask, 1, keepdims=True), 1.0)
    tgt = jnp.sum(h * tmask[:, :, None], 1) / tcnt
    neg = (1.0 - smask) * (-1e9)

    def head(wmat):
        proj = tgt @ wmat
        scores = jnp.einsum("btd,bd->bt", h, proj) + neg
        alpha = jax.nn.softmax(scores, axis=-1)
        return jnp.einsum("bt,btd->bd", alpha, h)

    cat = jnp.concatenate([head(params["ws"]), head(params["wl"]), head(params["wr"])], 1)
    return cat @ params["wo"] + params["bo"]


# ----------------------------------------------------------------------------
# Main
# ----------------------------------------------------------------------------
if __name__ == "__main__":
    B, T, V, E, H, L = 32, 8, 20, 32, 32, 3          # hidden_dim = H, label_size = L
    D = 2 * H
    PAD = 0

    key = jax.random.PRNGKey(0)
    ks = jax.random.split(key, 12)
    init = lambda k, s: (0.1 * jax.random.normal(k, s)).astype(jnp.float32)

    embed = init(ks[0], (V, E)).at[PAD].set(0.0)     # padding_idx row zeroed
    params = dict(
        embed=embed,
        wxf=init(ks[1], (E, 4 * H)), whf=init(ks[2], (H, 4 * H)), bf=init(ks[3], (1, 4 * H)),
        wxb=init(ks[4], (E, 4 * H)), whb=init(ks[5], (H, 4 * H)), bb=init(ks[6], (1, 4 * H)),
        ws=init(ks[7], (D, D)), wl=init(ks[8], (D, D)), wr=init(ks[9], (D, D)),
        wo=init(ks[10], (3 * D, L)), bo=init(ks[11], (1, L)),
    )

    # deterministic token ids / span bounds consistent with `length`
    dk = jax.random.split(jax.random.PRNGKey(1), 4)
    length = jax.random.randint(dk[0], (B,), 1, T + 1)
    start = jax.random.randint(dk[1], (B,), 0, T) % length
    span = jax.random.randint(dk[2], (B,), 1, 4)
    end = jnp.minimum(start + span, length)
    w = jax.random.randint(dk[3], (B, T), 1, V)
    w = jnp.where(jnp.arange(T)[None, :] < length[:, None], w, PAD)

    out = contextualized_forward(w, start, end, length, params)
    out = jax.block_until_ready(out)

    ref = reference_forward(w, start, end, length, params)
    assert out.shape == (B, L), out.shape
    assert bool(jnp.all(jnp.isfinite(out)))
    assert bool(jnp.allclose(out, ref, rtol=3e-2, atol=3e-2)), (out, ref)

    print("KERNEL_OK")
</pallas_src>

<mosaic_0001>
module attributes {stable_mosaic.version = 11 : i64} {
  func.func @contextualized_kernel(%arg0: i32, %arg1: memref<8x16x32xf32, #tpu.memory_space<vmem>>, %arg2: memref<8x16x1xf32, #tpu.memory_space<vmem>>, %arg3: memref<8x16x1xf32, #tpu.memory_space<vmem>>, %arg4: memref<32x256xbf16, #tpu.memory_space<vmem>>, %arg5: memref<64x256xbf16, #tpu.memory_space<vmem>>, %arg6: memref<1x256xf32, #tpu.memory_space<vmem>>, %arg7: memref<64x192xbf16, #tpu.memory_space<vmem>>, %arg8: memref<192x128xbf16, #tpu.memory_space<vmem>>, %arg9: memref<1x128xf32, #tpu.memory_space<vmem>>, %arg10: memref<16x128xf32, #tpu.memory_space<vmem>>, %arg11: memref<8x16x128xf32, #tpu.memory_space<vmem>>, %arg12: memref<8x16x128xf32, #tpu.memory_space<vmem>>, %arg13: memref<8x16x32xbf16, #tpu.memory_space<vmem>>, %arg14: memref<8x16x32xbf16, #tpu.memory_space<vmem>>) attributes {dimension_semantics = [#tpu.dimension_semantics<parallel>], iteration_bounds = array<i64: 2>, scalar_prefetch = 0 : i64, scratch_operands = 4 : i64, tpu.core_type = #tpu.core_type<tc>, window_params = [{transform_indices = @transform_0, window_bounds = array<i64: 8, 16, 32>}, {transform_indices = @transform_1, window_bounds = array<i64: 8, 16, 1>}, {transform_indices = @transform_2, window_bounds = array<i64: 8, 16, 1>}, {pipeline_mode = #tpu.pipeline_mode<synchronous>, transform_indices = @transform_3, window_bounds = array<i64: 32, 256>}, {pipeline_mode = #tpu.pipeline_mode<synchronous>, transform_indices = @transform_4, window_bounds = array<i64: 64, 256>}, {pipeline_mode = #tpu.pipeline_mode<synchronous>, transform_indices = @transform_5, window_bounds = array<i64: 1, 256>}, {pipeline_mode = #tpu.pipeline_mode<synchronous>, transform_indices = @transform_6, window_bounds = array<i64: 64, 192>}, {pipeline_mode = #tpu.pipeline_mode<synchronous>, transform_indices = @transform_7, window_bounds = array<i64: 192, 128>}, {pipeline_mode = #tpu.pipeline_mode<synchronous>, transform_indices = @transform_8, window_bounds = array<i64: 1, 128>}, {transform_indices = @transform_9, window_bounds = array<i64: 16, 128>}]} {
    %c0 = arith.constant 0 : index
    %c0_0 = arith.constant 0 : index
    %c0_1 = arith.constant 0 : index
    %0 = vector.load %arg1[%c0, %c0_0, %c0_1] : memref<8x16x32xf32, #tpu.memory_space<vmem>>, vector<8x16x32xf32>
    %1 = vector.shape_cast %0 : vector<8x16x32xf32> to vector<128x32xf32>
    %2 = arith.truncf %1 : vector<128x32xf32> to vector<128x32xbf16>
    %c0_2 = arith.constant 0 : index
    %c0_3 = arith.constant 0 : index
    %3 = vector.load %arg4[%c0_2, %c0_3] : memref<32x256xbf16, #tpu.memory_space<vmem>>, vector<32x256xbf16>
    %cst = arith.constant dense<0.000000e+00> : vector<128x256xf32>
    %4 = tpu.matmul %2, %3, %cst {dimension_numbers = #tpu.dot_dimension_numbers<[1], [0], [0], [1], [0, 0, 1, 1], [], []>} : vector<128x32xbf16>, vector<32x256xbf16>, vector<128x256xf32> -> vector<128x256xf32>
    %c0_4 = arith.constant 0 : index
    %c0_5 = arith.constant 0 : index
    %5 = vector.load %arg6[%c0_4, %c0_5] : memref<1x256xf32, #tpu.memory_space<vmem>>, vector<1x256xf32>
    %6 = vector.broadcast %5 : vector<1x256xf32> to vector<128x256xf32>
    %7 = arith.addf %4, %6 : vector<128x256xf32>
    %8 = vector.extract_strided_slice %7 {offsets = [0, 0], sizes = [128, 128], strides = [1, 1]} : vector<128x256xf32> to vector<128x128xf32>
    %9 = vector.shape_cast %8 : vector<128x128xf32> to vector<8x16x128xf32>
    %c0_6 = arith.constant 0 : index
    %c0_7 = arith.constant 0 : index
    %c0_8 = arith.constant 0 : index
    %10 = vector.load %arg11[%c0_6, %c0_7, %c0_8] : memref<8x16x128xf32, #tpu.memory_space<vmem>>, vector<8x16x128xf32>
    tpu.vector_store %arg11[%c0_6, %c0_7, %c0_8], %9 {strides = array<i32>} : memref<8x16x128xf32, #tpu.memory_space<vmem>>, vector<8x16x128xf32>,
    %11 = vector.extract_strided_slice %7 {offsets = [0, 128], sizes = [128, 128], strides = [1, 1]} : vector<128x256xf32> to vector<128x128xf32>
    %12 = vector.shape_cast %11 : vector<128x128xf32> to vector<8x16x128xf32>
    %c0_9 = arith.constant 0 : index
    %c0_10 = arith.constant 0 : index
    %c0_11 = arith.constant 0 : index
    %13 = vector.load %arg12[%c0_9, %c0_10, %c0_11] : memref<8x16x128xf32, #tpu.memory_space<vmem>>, vector<8x16x128xf32>
    tpu.vector_store %arg12[%c0_9, %c0_10, %c0_11], %12 {strides = array<i32>} : memref<8x16x128xf32, #tpu.memory_space<vmem>>, vector<8x16x128xf32>,
    %c0_12 = arith.constant 0 : index
    %c0_13 = arith.constant 0 : index
    %14 = vector.load %arg5[%c0_12, %c0_13] : memref<64x256xbf16, #tpu.memory_space<vmem>>, vector<64x256xbf16>
    %cst_14 = arith.constant 0.000000e+00 : f32
    %15 = vector.broadcast %cst_14 : f32 to vector<16x32xf32>
    %c0_i32 = arith.constant 0 : i32
    %c7_i32 = arith.constant 7 : i32
    %16 = arith.subi %c7_i32, %c0_i32 : i32
    %17 = tpu.concatenate %15, %15 in 1 : vector<16x32xf32>, vector<16x32xf32> -> vector<16x64xf32>
    %18 = arith.truncf %17 : vector<16x64xf32> to vector<16x64xbf16>
    %cst_15 = arith.constant dense<0.000000e+00> : vector<16x256xf32>
    %19 = tpu.matmul %18, %14, %cst_15 {dimension_numbers = #tpu.dot_dimension_numbers<[1], [0], [0], [1], [0, 0, 1, 1], [], []>} : vector<16x64xbf16>, vector<64x256xbf16>, vector<16x256xf32> -> vector<16x256xf32>
    %20 = arith.index_cast %c0_i32 : i32 to index
    %c0_16 = arith.constant 0 : index
    %c0_17 = arith.constant 0 : index
    %21 = vector.load %arg11[%20, %c0_16, %c0_17] : memref<8x16x128xf32, #tpu.memory_space<vmem>>, vector<1x16x128xf32>
    %22 = vector.shape_cast %21 : vector<1x16x128xf32> to vector<16x128xf32>
    %23 = vector.extract_strided_slice %19 {offsets = [0, 0], sizes = [16, 128], strides = [1, 1]} : vector<16x256xf32> to vector<16x128xf32>
    %24 = arith.addf %22, %23 : vector<16x128xf32>
    %25 = arith.index_cast %16 : i32 to index
    %c0_18 = arith.constant 0 : index
    %c0_19 = arith.constant 0 : index
    %26 = vector.load %arg12[%25, %c0_18, %c0_19] : memref<8x16x128xf32, #tpu.memory_space<vmem>>, vector<1x16x128xf32>
    %27 = vector.shape_cast %26 : vector<1x16x128xf32> to vector<16x128xf32>
    %28 = vector.extract_strided_slice %19 {offsets = [0, 128], sizes = [16, 128], strides = [1, 1]} : vector<16x256xf32> to vector<16x128xf32>
    %29 = arith.addf %27, %28 : vector<16x128xf32>
    %30 = arith.index_cast %c0_i32 : i32 to index
    %c0_20 = arith.constant 0 : index
    %c0_21 = arith.constant 0 : index
    %31 = vector.load %arg2[%30, %c0_20, %c0_21] : memref<8x16x1xf32, #tpu.memory_space<vmem>>, vector<1x16x1xf32>
    %32 = vector.shape_cast %31 : vector<1x16x1xf32> to vector<16x1xf32>
    %33 = vector.extract_strided_slice %24 {offsets = [0, 0], sizes = [16, 32], strides = [1, 1]} : vector<16x128xf32> to vector<16x32xf32>
    %34 = arith.negf %33 : vector<16x32xf32>
    %35 = math.exp %34 : vector<16x32xf32>
    %cst_22 = arith.constant 1.000000e+00 : f32
    %36 = vector.broadcast %cst_22 : f32 to vector<16x32xf32>
    %37 = arith.addf %36, %35 : vector<16x32xf32>
    %38 = arith.divf %36, %37 : vector<16x32xf32>
    %39 = vector.extract_strided_slice %24 {offsets = [0, 32], sizes = [16, 32], strides = [1, 1]} : vector<16x128xf32> to vector<16x32xf32>
    %40 = arith.negf %39 : vector<16x32xf32>
    %41 = math.exp %40 : vector<16x32xf32>
    %cst_23 = arith.constant 1.000000e+00 : f32
    %42 = vector.broadcast %cst_23 : f32 to vector<16x32xf32>
    %43 = arith.addf %42, %41 : vector<16x32xf32>
    %44 = arith.divf %42, %43 : vector<16x32xf32>
    %45 = vector.extract_strided_slice %24 {offsets = [0, 64], sizes = [16, 32], strides = [1, 1]} : vector<16x128xf32> to vector<16x32xf32>
    %46 = math.tanh %45 : vector<16x32xf32>
    %47 = vector.extract_strided_slice %24 {offsets = [0, 96], sizes = [16, 32], strides = [1, 1]} : vector<16x128xf32> to vector<16x32xf32>
    %48 = arith.negf %47 : vector<16x32xf32>
    %49 = math.exp %48 : vector<16x32xf32>
    %cst_24 = arith.constant 1.000000e+00 : f32
    %50 = vector.broadcast %cst_24 : f32 to vector<16x32xf32>
    %51 = arith.addf %50, %49 : vector<16x32xf32>
    %52 = arith.divf %50, %51 : vector<16x32xf32>
    %53 = arith.mulf %44, %15 : vector<16x32xf32>
    %54 = arith.mulf %38, %46 : vector<16x32xf32>
    %55 = arith.addf %53, %54 : vector<16x32xf32>
    %56 = math.tanh %55 : vector<16x32xf32>
    %57 = arith.mulf %52, %56 : vector<16x32xf32>
    %58 = arith.subf %57, %15 : vector<16x32xf32>
    %59 = vector.broadcast %32 : vector<16x1xf32> to vector<16x32xf32>
    %60 = arith.mulf %59, %58 : vector<16x32xf32>
    %61 = arith.addf %15, %60 : vector<16x32xf32>
    %62 = arith.subf %55, %15 : vector<16x32xf32>
    %63 = vector.broadcast %32 : vector<16x1xf32> to vector<16x32xf32>
    %64 = arith.mulf %63, %62 : vector<16x32xf32>
    %65 = arith.addf %15, %64 : vector<16x32xf32>
    %66 = arith.index_cast %16 : i32 to index
    %c0_25 = arith.constant 0 : index
    %c0_26 = arith.constant 0 : index
    %67 = vector.load %arg2[%66, %c0_25, %c0_26] : memref<8x16x1xf32, #tpu.memory_space<vmem>>, vector<1x16x1xf32>
    %68 = vector.shape_cast %67 : vector<1x16x1xf32> to vector<16x1xf32>
    %69 = vector.extract_strided_slice %29 {offsets = [0, 0], sizes = [16, 32], strides = [1, 1]} : vector<16x128xf32> to vector<16x32xf32>
    %70 = arith.negf %69 : vector<16x32xf32>
    %71 = math.exp %70 : vector<16x32xf32>
    %cst_27 = arith.constant 1.000000e+00 : f32
    %72 = vector.broadcast %cst_27 : f32 to vector<16x32xf32>
    %73 = arith.addf %72, %71 : vector<16x32xf32>
    %74 = arith.divf %72, %73 : vector<16x32xf32>
    %75 = vector.extract_strided_slice %29 {offsets = [0, 32], sizes = [16, 32], strides = [1, 1]} : vector<16x128xf32> to vector<16x32xf32>
    %76 = arith.negf %75 : vector<16x32xf32>
    %77 = math.exp %76 : vector<16x32xf32>
    %cst_28 = arith.constant 1.000000e+00 : f32
    %78 = vector.broadcast %cst_28 : f32 to vector<16x32xf32>
    %79 = arith.addf %78, %77 : vector<16x32xf32>
    %80 = arith.divf %78, %79 : vector<16x32xf32>
    %81 = vector.extract_strided_slice %29 {offsets = [0, 64], sizes = [16, 32], strides = [1, 1]} : vector<16x128xf32> to vector<16x32xf32>
    %82 = math.tanh %81 : vector<16x32xf32>
    %83 = vector.extract_strided_slice %29 {offsets = [0, 96], sizes = [16, 32], strides = [1, 1]} : vector<16x128xf32> to vector<16x32xf32>
    %84 = arith.negf %83 : vector<16x32xf32>
    %85 = math.exp %84 : vector<16x32xf32>
    %cst_29 = arith.constant 1.000000e+00 : f32
    %86 = vector.broadcast %cst_29 : f32 to vector<16x32xf32>
    %87 = arith.addf %86, %85 : vector<16x32xf32>
    %88 = arith.divf %86, %87 : vector<16x32xf32>
    %89 = arith.mulf %80, %15 : vector<16x32xf32>
    %90 = arith.mulf %74, %82 : vector<16x32xf32>
    %91 = arith.addf %89, %90 : vector<16x32xf32>
    %92 = math.tanh %91 : vector<16x32xf32>
    %93 = arith.mulf %88, %92 : vector<16x32xf32>
    %94 = arith.subf %93, %15 : vector<16x32xf32>
    %95 = vector.broadcast %68 : vector<16x1xf32> to vector<16x32xf32>
    %96 = arith.mulf %95, %94 : vector<16x32xf32>
    %97 = arith.addf %15, %96 : vector<16x32xf32>
    %98 = arith.subf %91, %15 : vector<16x32xf32>
    %99 = vector.broadcast %68 : vector<16x1xf32> to vector<16x32xf32>
    %100 = arith.mulf %99, %98 : vector<16x32xf32>
    %101 = arith.addf %15, %100 : vector<16x32xf32>
    %102 = arith.truncf %61 : vector<16x32xf32> to vector<16x32xbf16>
    %103 = arith.index_cast %c0_i32 : i32 to index
    %c0_30 = arith.constant 0 : index
    %c0_31 = arith.constant 0 : index
    %104 = vector.load %arg13[%103, %c0_30, %c0_31] : memref<8x16x32xbf16, #tpu.memory_space<vmem>>, vector<1x16x32xbf16>
    %105 = vector.shape_cast %104 : vector<1x16x32xbf16> to vector<16x32xbf16>
    %106 = vector.shape_cast %102 : vector<16x32xbf16> to vector<1x16x32xbf16>
    tpu.vector_store %arg13[%103, %c0_30, %c0_31], %106 {strides = array<i32>} : memref<8x16x32xbf16, #tpu.memory_space<vmem>>, vector<1x16x32xbf16>,
    %107 = arith.truncf %97 : vector<16x32xf32> to vector<16x32xbf16>
    %108 = arith.index_cast %16 : i32 to index
    %c0_32 = arith.constant 0 : index
    %c0_33 = arith.constant 0 : index
    %109 = vector.load %arg14[%108, %c0_32, %c0_33] : memref<8x16x32xbf16, #tpu.memory_space<vmem>>, vector<1x16x32xbf16>
    %110 = vector.shape_cast %109 : vector<1x16x32xbf16> to vector<16x32xbf16>
    %111 = vector.shape_cast %107 : vector<16x32xbf16> to vector<1x16x32xbf16>
    tpu.vector_store %arg14[%108, %c0_32, %c0_33], %111 {strides = array<i32>} : memref<8x16x32xbf16, #tpu.memory_space<vmem>>, vector<1x16x32xbf16>,
    %c1_i32 = arith.constant 1 : i32
    %c7_i32_34 = arith.constant 7 : i32
    %112 = arith.subi %c7_i32_34, %c1_i32 : i32
    %113 = tpu.concatenate %61, %97 in 1 : vector<16x32xf32>, vector<16x32xf32> -> vector<16x64xf32>
    %114 = arith.truncf %113 : vector<16x64xf32> to vector<16x64xbf16>
    %cst_35 = arith.constant dense<0.000000e+00> : vector<16x256xf32>
    %115 = tpu.matmul %114, %14, %cst_35 {dimension_numbers = #tpu.dot_dimension_numbers<[1], [0], [0], [1], [0, 0, 1, 1], [], []>} : vector<16x64xbf16>, vector<64x256xbf16>, vector<16x256xf32> -> vector<16x256xf32>
    %116 = arith.index_cast %c1_i32 : i32 to index
    %c0_36 = arith.constant 0 : index
    %c0_37 = arith.constant 0 : index
    %117 = vector.load %arg11[%116, %c0_36, %c0_37] : memref<8x16x128xf32, #tpu.memory_space<vmem>>, vector<1x16x128xf32>
    %118 = vector.shape_cast %117 : vector<1x16x128xf32> to vector<16x128xf32>
    %119 = vector.extract_strided_slice %115 {offsets = [0, 0], sizes = [16, 128], strides = [1, 1]} : vector<16x256xf32> to vector<16x128xf32>
    %120 = arith.addf %118, %119 : vector<16x128xf32>
    %121 = arith.index_cast %112 : i32 to index
    %c0_38 = arith.constant 0 : index
    %c0_39 = arith.constant 0 : index
    %122 = vector.load %arg12[%121, %c0_38, %c0_39] : memref<8x16x128xf32, #tpu.memory_space<vmem>>, vector<1x16x128xf32>
    %123 = vector.shape_cast %122 : vector<1x16x128xf32> to vector<16x128xf32>
    %124 = vector.extract_strided_slice %115 {offsets = [0, 128], sizes = [16, 128], strides = [1, 1]} : vector<16x256xf32> to vector<16x128xf32>
    %125 = arith.addf %123, %124 : vector<16x128xf32>
    %126 = arith.index_cast %c1_i32 : i32 to index
    %c0_40 = arith.constant 0 : index
    %c0_41 = arith.constant 0 : index
    %127 = vector.load %arg2[%126, %c0_40, %c0_41] : memref<8x16x1xf32, #tpu.memory_space<vmem>>, vector<1x16x1xf32>
    %128 = vector.shape_cast %127 : vector<1x16x1xf32> to vector<16x1xf32>
    %129 = vector.extract_strided_slice %120 {offsets = [0, 0], sizes = [16, 32], strides = [1, 1]} : vector<16x128xf32> to vector<16x32xf32>
    %130 = arith.negf %129 : vector<16x32xf32>
    %131 = math.exp %130 : vector<16x32xf32>
    %cst_42 = arith.constant 1.000000e+00 : f32
    %132 = vector.broadcast %cst_42 : f32 to vector<16x32xf32>
    %133 = arith.addf %132, %131 : vector<16x32xf32>
    %134 = arith.divf %132, %133 : vector<16x32xf32>
    %135 = vector.extract_strided_slice %120 {offsets = [0, 32], sizes = [16, 32], strides = [1, 1]} : vector<16x128xf32> to vector<16x32xf32>
    %136 = arith.negf %135 : vector<16x32xf32>
    %137 = math.exp %136 : vector<16x32xf32>
    %cst_43 = arith.constant 1.000000e+00 : f32
    %138 = vector.broadcast %cst_43 : f32 to vector<16x32xf32>
    %139 = arith.addf %138, %137 : vector<16x32xf32>
    %140 = arith.divf %138, %139 : vector<16x32xf32>
    %141 = vector.extract_strided_slice %120 {offsets = [0, 64], sizes = [16, 32], strides = [1, 1]} : vector<16x128xf32> to vector<16x32xf32>
    %142 = math.tanh %141 : vector<16x32xf32>
    %143 = vector.extract_strided_slice %120 {offsets = [0, 96], sizes = [16, 32], strides = [1, 1]} : vector<16x128xf32> to vector<16x32xf32>
    %144 = arith.negf %143 : vector<16x32xf32>
    %145 = math.exp %144 : vector<16x32xf32>
    %cst_44 = arith.constant 1.000000e+00 : f32
    %146 = vector.broadcast %cst_44 : f32 to vector<16x32xf32>
    %147 = arith.addf %146, %145 : vector<16x32xf32>
    %148 = arith.divf %146, %147 : vector<16x32xf32>
    %149 = arith.mulf %140, %65 : vector<16x32xf32>
    %150 = arith.mulf %134, %142 : vector<16x32xf32>
    %151 = arith.addf %149, %150 : vector<16x32xf32>
    %152 = math.tanh %151 : vector<16x32xf32>
    %153 = arith.mulf %148, %152 : vector<16x32xf32>
    %154 = arith.subf %153, %61 : vector<16x32xf32>
    %155 = vector.broadcast %128 : vector<16x1xf32> to vector<16x32xf32>
    %156 = arith.mulf %155, %154 : vector<16x32xf32>
    %157 = arith.addf %61, %156 : vector<16x32xf32>
    %158 = arith.subf %151, %65 : vector<16x32xf32>
    %159 = vector.broadcast %128 : vector<16x1xf32> to vector<16x32xf32>
    %160 = arith.mulf %159, %158 : vector<16x32xf32>
    %161 = arith.addf %65, %160 : vector<16x32xf32>
    %162 = arith.index_cast %112 : i32 to index
    %c0_45 = arith.constant 0 : index
    %c0_46 = arith.constant 0 : index
    %163 = vector.load %arg2[%162, %c0_45, %c0_46] : memref<8x16x1xf32, #tpu.memory_space<vmem>>, vector<1x16x1xf32>
    %164 = vector.shape_cast %163 : vector<1x16x1xf32> to vector<16x1xf32>
    %165 = vector.extract_strided_slice %125 {offsets = [0, 0], sizes = [16, 32], strides = [1, 1]} : vector<16x128xf32> to vector<16x32xf32>
    %166 = arith.negf %165 : vector<16x32xf32>
    %167 = math.exp %166 : vector<16x32xf32>
    %cst_47 = arith.constant 1.000000e+00 : f32
    %168 = vector.broadcast %cst_47 : f32 to vector<16x32xf32>
    %169 = arith.addf %168, %167 : vector<16x32xf32>
    %170 = arith.divf %168, %169 : vector<16x32xf32>
    %171 = vector.extract_strided_slice %125 {offsets = [0, 32], sizes = [16, 32], strides = [1, 1]} : vector<16x128xf32> to vector<16x32xf32>
    %172 = arith.negf %171 : vector<16x32xf32>
    %173 = math.exp %172 : vector<16x32xf32>
    %cst_48 = arith.constant 1.000000e+00 : f32
    %174 = vector.broadcast %cst_48 : f32 to vector<16x32xf32>
    %175 = arith.addf %174, %173 : vector<16x32xf32>
    %176 = arith.divf %174, %175 : vector<16x32xf32>
    %177 = vector.extract_strided_slice %125 {offsets = [0, 64], sizes = [16, 32], strides = [1, 1]} : vector<16x128xf32> to vector<16x32xf32>
    %178 = math.tanh %177 : vector<16x32xf32>
    %179 = vector.extract_strided_slice %125 {offsets = [0, 96], sizes = [16, 32], strides = [1, 1]} : vector<16x128xf32> to vector<16x32xf32>
    %180 = arith.negf %179 : vector<16x32xf32>
    %181 = math.exp %180 : vector<16x32xf32>
    %cst_49 = arith.constant 1.000000e+00 : f32
    %182 = vector.broadcast %cst_49 : f32 to vector<16x32xf32>
    %183 = arith.addf %182, %181 : vector<16x32xf32>
    %184 = arith.divf %182, %183 : vector<16x32xf32>
    %185 = arith.mulf %176, %101 : vector<16x32xf32>
    %186 = arith.mulf %170, %178 : vector<16x32xf32>
    %187 = arith.addf %185, %186 : vector<16x32xf32>
    %188 = math.tanh %187 : vector<16x32xf32>
    %189 = arith.mulf %184, %188 : vector<16x32xf32>
    %190 = arith.subf %189, %97 : vector<16x32xf32>
    %191 = vector.broadcast %164 : vector<16x1xf32> to vector<16x32xf32>
    %192 = arith.mulf %191, %190 : vector<16x32xf32>
    %193 = arith.addf %97, %192 : vector<16x32xf32>
    %194 = arith.subf %187, %101 : vector<16x32xf32>
    %195 = vector.broadcast %164 : vector<16x1xf32> to vector<16x32xf32>
    %196 = arith.mulf %195, %194 : vector<16x32xf32>
    %197 = arith.addf %101, %196 : vector<16x32xf32>
    %198 = arith.truncf %157 : vector<16x32xf32> to vector<16x32xbf16>
    %199 = arith.index_cast %c1_i32 : i32 to index
    %c0_50 = arith.constant 0 : index
    %c0_51 = arith.constant 0 : index
    %200 = vector.load %arg13[%199, %c0_50, %c0_51] : memref<8x16x32xbf16, #tpu.memory_space<vmem>>, vector<1x16x32xbf16>
    %201 = vector.shape_cast %200 : vector<1x16x32xbf16> to vector<16x32xbf16>
    %202 = vector.shape_cast %198 : vector<16x32xbf16> to vector<1x16x32xbf16>
    tpu.vector_store %arg13[%199, %c0_50, %c0_51], %202 {strides = array<i32>} : memref<8x16x32xbf16, #tpu.memory_space<vmem>>, vector<1x16x32xbf16>,
    %203 = arith.truncf %193 : vector<16x32xf32> to vector<16x32xbf16>
    %204 = arith.index_cast %112 : i32 to index
    %c0_52 = arith.constant 0 : index
    %c0_53 = arith.constant 0 : index
    %205 = vector.load %arg14[%204, %c0_52, %c0_53] : memref<8x16x32xbf16, #tpu.memory_space<vmem>>, vector<1x16x32xbf16>
    %206 = vector.shape_cast %205 : vector<1x16x32xbf16> to vector<16x32xbf16>
    %207 = vector.shape_cast %203 : vector<16x32xbf16> to vector<1x16x32xbf16>
    tpu.vector_store %arg14[%204, %c0_52, %c0_53], %207 {strides = array<i32>} : memref<8x16x32xbf16, #tpu.memory_space<vmem>>, vector<1x16x32xbf16>,
    %c2_i32 = arith.constant 2 : i32
    %c7_i32_54 = arith.constant 7 : i32
    %208 = arith.subi %c7_i32_54, %c2_i32 : i32
    %209 = tpu.concatenate %157, %193 in 1 : vector<16x32xf32>, vector<16x32xf32> -> vector<16x64xf32>
    %210 = arith.truncf %209 : vector<16x64xf32> to vector<16x64xbf16>
    %cst_55 = arith.constant dense<0.000000e+00> : vector<16x256xf32>
    %211 = tpu.matmul %210, %14, %cst_55 {dimension_numbers = #tpu.dot_dimension_numbers<[1], [0], [0], [1], [0, 0, 1, 1], [], []>} : vector<16x64xbf16>, vector<64x256xbf16>, vector<16x256xf32> -> vector<16x256xf32>
    %212 = arith.index_cast %c2_i32 : i32 to index
    %c0_56 = arith.constant 0 : index
    %c0_57 = arith.constant 0 : index
    %213 = vector.load %arg11[%212, %c0_56, %c0_57] : memref<8x16x128xf32, #tpu.memory_space<vmem>>, vector<1x16x128xf32>
    %214 = vector.shape_cast %213 : vector<1x16x128xf32> to vector<16x128xf32>
    %215 = vector.extract_strided_slice %211 {offsets = [0, 0], sizes = [16, 128], strides = [1, 1]} : vector<16x256xf32> to vector<16x128xf32>
    %216 = arith.addf %214, %215 : vector<16x128xf32>
    %217 = arith.index_cast %208 : i32 to index
    %c0_58 = arith.constant 0 : index
    %c0_59 = arith.constant 0 : index
    %218 = vector.load %arg12[%217, %c0_58, %c0_59] : memref<8x16x128xf32, #tpu.memory_space<vmem>>, vector<1x16x128xf32>
    %219 = vector.shape_cast %218 : vector<1x16x128xf32> to vector<16x128xf32>
    %220 = vector.extract_strided_slice %211 {offsets = [0, 128], sizes = [16, 128], strides = [1, 1]} : vector<16x256xf32> to vector<16x128xf32>
    %221 = arith.addf %219, %220 : vector<16x128xf32>
    %222 = arith.index_cast %c2_i32 : i32 to index
    %c0_60 = arith.constant 0 : index
    %c0_61 = arith.constant 0 : index
    %223 = vector.load %arg2[%222, %c0_60, %c0_61] : memref<8x16x1xf32, #tpu.memory_space<vmem>>, vector<1x16x1xf32>
    %224 = vector.shape_cast %223 : vector<1x16x1xf32> to vector<16x1xf32>
    %225 = vector.extract_strided_slice %216 {offsets = [0, 0], sizes = [16, 32], strides = [1, 1]} : vector<16x128xf32> to vector<16x32xf32>
    %226 = arith.negf %225 : vector<16x32xf32>
    %227 = math.exp %226 : vector<16x32xf32>
    %cst_62 = arith.constant 1.000000e+00 : f32
    %228 = vector.broadcast %cst_62 : f32 to vector<16x32xf32>
    %229 = arith.addf %228, %227 : vector<16x32xf32>
    %230 = arith.divf %228, %229 : vector<16x32xf32>
    %231 = vector.extract_strided_slice %216 {offsets = [0, 32], sizes = [16, 32], strides = [1, 1]} : vector<16x128xf32> to vector<16x32xf32>
    %232 = arith.negf %231 : vector<16x32xf32>
    %233 = math.exp %232 : vector<16x32xf32>
    %cst_63 = arith.constant 1.000000e+00 : f32
    %234 = vector.broadcast %cst_63 : f32 to vector<16x32xf32>
    %235 = arith.addf %234, %233 : vector<16x32xf32>
    %236 = arith.divf %234, %235 : vector<16x32xf32>
    %237 = vector.extract_strided_slice %216 {offsets = [0, 64], sizes = [16, 32], strides = [1, 1]} : vector<16x128xf32> to vector<16x32xf32>
    %238 = math.tanh %237 : vector<16x32xf32>
    %239 = vector.extract_strided_slice %216 {offsets = [0, 96], sizes = [16, 32], strides = [1, 1]} : vector<16x128xf32> to vector<16x32xf32>
    %240 = arith.negf %239 : vector<16x32xf32>
    %241 = math.exp %240 : vector<16x32xf32>
    %cst_64 = arith.constant 1.000000e+00 : f32
    %242 = vector.broadcast %cst_64 : f32 to vector<16x32xf32>
    %243 = arith.addf %242, %241 : vector<16x32xf32>
    %244 = arith.divf %242, %243 : vector<16x32xf32>
    %245 = arith.mulf %236, %161 : vector<16x32xf32>
    %246 = arith.mulf %230, %238 : vector<16x32xf32>
    %247 = arith.addf %245, %246 : vector<16x32xf32>
    %248 = math.tanh %247 : vector<16x32xf32>
    %249 = arith.mulf %244, %248 : vector<16x32xf32>
    %250 = arith.subf %249, %157 : vector<16x32xf32>
    %251 = vector.broadcast %224 : vector<16x1xf32> to vector<16x32xf32>
    %252 = arith.mulf %251, %250 : vector<16x32xf32>
    %253 = arith.addf %157, %252 : vector<16x32xf32>
    %254 = arith.subf %247, %161 : vector<16x32xf32>
    %255 = vector.broadcast %224 : vector<16x1xf32> to vector<16x32xf32>
    %256 = arith.mulf %255, %254 : vector<16x32xf32>
    %257 = arith.addf %161, %256 : vector<16x32xf32>
    %258 = arith.index_cast %208 : i32 to index
    %c0_65 = arith.constant 0 : index
    %c0_66 = arith.constant 0 : index
    %259 = vector.load %arg2[%258, %c0_65, %c0_66] : memref<8x16x1xf32, #tpu.memory_space<vmem>>, vector<1x16x1xf32>
    %260 = vector.shape_cast %259 : vector<1x16x1xf32> to vector<16x1xf32>
    %261 = vector.extract_strided_slice %221 {offsets = [0, 0], sizes = [16, 32], strides = [1, 1]} : vector<16x128xf32> to vector<16x32xf32>
    %262 = arith.negf %261 : vector<16x32xf32>
    %263 = math.exp %262 : vector<16x32xf32>
    %cst_67 = arith.constant 1.000000e+00 : f32
    %264 = vector.broadcast %cst_67 : f32 to vector<16x32xf32>
    %265 = arith.addf %264, %263 : vector<16x32xf32>
    %266 = arith.divf %264, %265 : vector<16x32xf32>
    %267 = vector.extract_strided_slice %221 {offsets = [0, 32], sizes = [16, 32], strides = [1, 1]} : vector<16x128xf32> to vector<16x32xf32>
    %268 = arith.negf %267 : vector<16x32xf32>
    %269 = math.exp %268 : vector<16x32xf32>
    %cst_68 = arith.constant 1.000000e+00 : f32
    %270 = vector.broadcast %cst_68 : f32 to vector<16x32xf32>
    %271 = arith.addf %270, %269 : vector<16x32xf32>
    %272 = arith.divf %270, %271 : vector<16x32xf32>
    %273 = vector.extract_strided_slice %221 {offsets = [0, 64], sizes = [16, 32], strides = [1, 1]} : vector<16x128xf32> to vector<16x32xf32>
    %274 = math.tanh %273 : vector<16x32xf32>
    %275 = vector.extract_strided_slice %221 {offsets = [0, 96], sizes = [16, 32], strides = [1, 1]} : vector<16x128xf32> to vector<16x32xf32>
    %276 = arith.negf %275 : vector<16x32xf32>
    %277 = math.exp %276 : vector<16x32xf32>
    %cst_69 = arith.constant 1.000000e+00 : f32
    %278 = vector.broadcast %cst_69 : f32 to vector<16x32xf32>
    %279 = arith.addf %278, %277 : vector<16x32xf32>
    %280 = arith.divf %278, %279 : vector<16x32xf32>
    %281 = arith.mulf %272, %197 : vector<16x32xf32>
    %282 = arith.mulf %266, %274 : vector<16x32xf32>
    %283 = arith.addf %281, %282 : vector<16x32xf32>
    %284 = math.tanh %283 : vector<16x32xf32>
    %285 = arith.mulf %280, %284 : vector<16x32xf32>
    %286 = arith.subf %285, %193 : vector<16x32xf32>
    %287 = vector.broadcast %260 : vector<16x1xf32> to vector<16x32xf32>
    %288 = arith.mulf %287, %286 : vector<16x32xf32>
    %289 = arith.addf %193, %288 : vector<16x32xf32>
    %290 = arith.subf %283, %197 : vector<16x32xf32>
    %291 = vector.broadcast %260 : vector<16x1xf32> to vector<16x32xf32>
    %292 = arith.mulf %291, %290 : vector<16x32xf32>
    %293 = arith.addf %197, %292 : vector<16x32xf32>
    %294 = arith.truncf %253 : vector<16x32xf32> to vector<16x32xbf16>
    %295 = arith.index_cast %c2_i32 : i32 to index
    %c0_70 = arith.constant 0 : index
    %c0_71 = arith.constant 0 : index
    %296 = vector.load %arg13[%295, %c0_70, %c0_71] : memref<8x16x32xbf16, #tpu.memory_space<vmem>>, vector<1x16x32xbf16>
    %297 = vector.shape_cast %296 : vector<1x16x32xbf16> to vector<16x32xbf16>
    %298 = vector.shape_cast %294 : vector<16x32xbf16> to vector<1x16x32xbf16>
    tpu.vector_store %arg13[%295, %c0_70, %c0_71], %298 {strides = array<i32>} : memref<8x16x32xbf16, #tpu.memory_space<vmem>>, vector<1x16x32xbf16>,
    %299 = arith.truncf %289 : vector<16x32xf32> to vector<16x32xbf16>
    %300 = arith.index_cast %208 : i32 to index
    %c0_72 = arith.constant 0 : index
    %c0_73 = arith.constant 0 : index
    %301 = vector.load %arg14[%300, %c0_72, %c0_73] : memref<8x16x32xbf16, #tpu.memory_space<vmem>>, vector<1x16x32xbf16>
    %302 = vector.shape_cast %301 : vector<1x16x32xbf16> to vector<16x32xbf16>
    %303 = vector.shape_cast %299 : vector<16x32xbf16> to vector<1x16x32xbf16>
    tpu.vector_store %arg14[%300, %c0_72, %c0_73], %303 {strides = array<i32>} : memref<8x16x32xbf16, #tpu.memory_space<vmem>>, vector<1x16x32xbf16>,
    %c3_i32 = arith.constant 3 : i32
    %c7_i32_74 = arith.constant 7 : i32
    %304 = arith.subi %c7_i32_74, %c3_i32 : i32
    %305 = tpu.concatenate %253, %289 in 1 : vector<16x32xf32>, vector<16x32xf32> -> vector<16x64xf32>
    %306 = arith.truncf %305 : vector<16x64xf32> to vector<16x64xbf16>
    %cst_75 = arith.constant dense<0.000000e+00> : vector<16x256xf32>
    %307 = tpu.matmul %306, %14, %cst_75 {dimension_numbers = #tpu.dot_dimension_numbers<[1], [0], [0], [1], [0, 0, 1, 1], [], []>} : vector<16x64xbf16>, vector<64x256xbf16>, vector<16x256xf32> -> vector<16x256xf32>
    %308 = arith.index_cast %c3_i32 : i32 to index
    %c0_76 = arith.constant 0 : index
    %c0_77 = arith.constant 0 : index
    %309 = vector.load %arg11[%308, %c0_76, %c0_77] : memref<8x16x128xf32, #tpu.memory_space<vmem>>, vector<1x16x128xf32>
    %310 = vector.shape_cast %309 : vector<1x16x128xf32> to vector<16x128xf32>
    %311 = vector.extract_strided_slice %307 {offsets = [0, 0], sizes = [16, 128], strides = [1, 1]} : vector<16x256xf32> to vector<16x128xf32>
    %312 = arith.addf %310, %311 : vector<16x128xf32>
    %313 = arith.index_cast %304 : i32 to index
    %c0_78 = arith.constant 0 : index
    %c0_79 = arith.constant 0 : index
    %314 = vector.load %arg12[%313, %c0_78, %c0_79] : memref<8x16x128xf32, #tpu.memory_space<vmem>>, vector<1x16x128xf32>
    %315 = vector.shape_cast %314 : vector<1x16x128xf32> to vector<16x128xf32>
    %316 = vector.extract_strided_slice %307 {offsets = [0, 128], sizes = [16, 128], strides = [1, 1]} : vector<16x256xf32> to vector<16x128xf32>
    %317 = arith.addf %315, %316 : vector<16x128xf32>
    %318 = arith.index_cast %c3_i32 : i32 to index
    %c0_80 = arith.constant 0 : index
    %c0_81 = arith.constant 0 : index
    %319 = vector.load %arg2[%318, %c0_80, %c0_81] : memref<8x16x1xf32, #tpu.memory_space<vmem>>, vector<1x16x1xf32>
    %320 = vector.shape_cast %319 : vector<1x16x1xf32> to vector<16x1xf32>
    %321 = vector.extract_strided_slice %312 {offsets = [0, 0], sizes = [16, 32], strides = [1, 1]} : vector<16x128xf32> to vector<16x32xf32>
    %322 = arith.negf %321 : vector<16x32xf32>
    %323 = math.exp %322 : vector<16x32xf32>
    %cst_82 = arith.constant 1.000000e+00 : f32
    %324 = vector.broadcast %cst_82 : f32 to vector<16x32xf32>
    %325 = arith.addf %324, %323 : vector<16x32xf32>
    %326 = arith.divf %324, %325 : vector<16x32xf32>
    %327 = vector.extract_strided_slice %312 {offsets = [0, 32], sizes = [16, 32], strides = [1, 1]} : vector<16x128xf32> to vector<16x32xf32>
    %328 = arith.negf %327 : vector<16x32xf32>
    %329 = math.exp %328 : vector<16x32xf32>
    %cst_83 = arith.constant 1.000000e+00 : f32
    %330 = vector.broadcast %cst_83 : f32 to vector<16x32xf32>
    %331 = arith.addf %330, %329 : vector<16x32xf32>
    %332 = arith.divf %330, %331 : vector<16x32xf32>
    %333 = vector.extract_strided_slice %312 {offsets = [0, 64], sizes = [16, 32], strides = [1, 1]} : vector<16x128xf32> to vector<16x32xf32>
    %334 = math.tanh %333 : vector<16x32xf32>
    %335 = vector.extract_strided_slice %312 {offsets = [0, 96], sizes = [16, 32], strides = [1, 1]} : vector<16x128xf32> to vector<16x32xf32>
    %336 = arith.negf %335 : vector<16x32xf32>
    %337 = math.exp %336 : vector<16x32xf32>
    %cst_84 = arith.constant 1.000000e+00 : f32
    %338 = vector.broadcast %cst_84 : f32 to vector<16x32xf32>
    %339 = arith.addf %338, %337 : vector<16x32xf32>
    %340 = arith.divf %338, %339 : vector<16x32xf32>
    %341 = arith.mulf %332, %257 : vector<16x32xf32>
    %342 = arith.mulf %326, %334 : vector<16x32xf32>
    %343 = arith.addf %341, %342 : vector<16x32xf32>
    %344 = math.tanh %343 : vector<16x32xf32>
    %345 = arith.mulf %340, %344 : vector<16x32xf32>
    %346 = arith.subf %345, %253 : vector<16x32xf32>
    %347 = vector.broadcast %320 : vector<16x1xf32> to vector<16x32xf32>
    %348 = arith.mulf %347, %346 : vector<16x32xf32>
    %349 = arith.addf %253, %348 : vector<16x32xf32>
    %350 = arith.subf %343, %257 : vector<16x32xf32>
    %351 = vector.broadcast %320 : vector<16x1xf32> to vector<16x32xf32>
    %352 = arith.mulf %351, %350 : vector<16x32xf32>
    %353 = arith.addf %257, %352 : vector<16x32xf32>
    %354 = arith.index_cast %304 : i32 to index
    %c0_85 = arith.constant 0 : index
    %c0_86 = arith.constant 0 : index
    %355 = vector.load %arg2[%354, %c0_85, %c0_86] : memref<8x16x1xf32, #tpu.memory_space<vmem>>, vector<1x16x1xf32>
    %356 = vector.shape_cast %355 : vector<1x16x1xf32> to vector<16x1xf32>
    %357 = vector.extract_strided_slice %317 {offsets = [0, 0], sizes = [16, 32], strides = [1, 1]} : vector<16x128xf32> to vector<16x32xf32>
    %358 = arith.negf %357 : vector<16x32xf32>
    %359 = math.exp %358 : vector<16x32xf32>
    %cst_87 = arith.constant 1.000000e+00 : f32
    %360 = vector.broadcast %cst_87 : f32 to vector<16x32xf32>
    %361 = arith.addf %360, %359 : vector<16x32xf32>
    %362 = arith.divf %360, %361 : vector<16x32xf32>
    %363 = vector.extract_strided_slice %317 {offsets = [0, 32], sizes = [16, 32], strides = [1, 1]} : vector<16x128xf32> to vector<16x32xf32>
    %364 = arith.negf %363 : vector<16x32xf32>
    %365 = math.exp %364 : vector<16x32xf32>
    %cst_88 = arith.constant 1.000000e+00 : f32
    %366 = vector.broadcast %cst_88 : f32 to vector<16x32xf32>
    %367 = arith.addf %366, %365 : vector<16x32xf32>
    %368 = arith.divf %366, %367 : vector<16x32xf32>
    %369 = vector.extract_strided_slice %317 {offsets = [0, 64], sizes = [16, 32], strides = [1, 1]} : vector<16x128xf32> to vector<16x32xf32>
    %370 = math.tanh %369 : vector<16x32xf32>
    %371 = vector.extract_strided_slice %317 {offsets = [0, 96], sizes = [16, 32], strides = [1, 1]} : vector<16x128xf32> to vector<16x32xf32>
    %372 = arith.negf %371 : vector<16x32xf32>
    %373 = math.exp %372 : vector<16x32xf32>
    %cst_89 = arith.constant 1.000000e+00 : f32
    %374 = vector.broadcast %cst_89 : f32 to vector<16x32xf32>
    %375 = arith.addf %374, %373 : vector<16x32xf32>
    %376 = arith.divf %374, %375 : vector<16x32xf32>
    %377 = arith.mulf %368, %293 : vector<16x32xf32>
    %378 = arith.mulf %362, %370 : vector<16x32xf32>
    %379 = arith.addf %377, %378 : vector<16x32xf32>
    %380 = math.tanh %379 : vector<16x32xf32>
    %381 = arith.mulf %376, %380 : vector<16x32xf32>
    %382 = arith.subf %381, %289 : vector<16x32xf32>
    %383 = vector.broadcast %356 : vector<16x1xf32> to vector<16x32xf32>
    %384 = arith.mulf %383, %382 : vector<16x32xf32>
    %385 = arith.addf %289, %384 : vector<16x32xf32>
    %386 = arith.subf %379, %293 : vector<16x32xf32>
    %387 = vector.broadcast %356 : vector<16x1xf32> to vector<16x32xf32>
    %388 = arith.mulf %387, %386 : vector<16x32xf32>
    %389 = arith.addf %293, %388 : vector<16x32xf32>
    %390 = arith.truncf %349 : vector<16x32xf32> to vector<16x32xbf16>
    %391 = arith.index_cast %c3_i32 : i32 to index
    %c0_90 = arith.constant 0 : index
    %c0_91 = arith.constant 0 : index
    %392 = vector.load %arg13[%391, %c0_90, %c0_91] : memref<8x16x32xbf16, #tpu.memory_space<vmem>>, vector<1x16x32xbf16>
    %393 = vector.shape_cast %392 : vector<1x16x32xbf16> to vector<16x32xbf16>
    %394 = vector.shape_cast %390 : vector<16x32xbf16> to vector<1x16x32xbf16>
    tpu.vector_store %arg13[%391, %c0_90, %c0_91], %394 {strides = array<i32>} : memref<8x16x32xbf16, #tpu.memory_space<vmem>>, vector<1x16x32xbf16>,
    %395 = arith.truncf %385 : vector<16x32xf32> to vector<16x32xbf16>
    %396 = arith.index_cast %304 : i32 to index
    %c0_92 = arith.constant 0 : index
    %c0_93 = arith.constant 0 : index
    %397 = vector.load %arg14[%396, %c0_92, %c0_93] : memref<8x16x32xbf16, #tpu.memory_space<vmem>>, vector<1x16x32xbf16>
    %398 = vector.shape_cast %397 : vector<1x16x32xbf16> to vector<16x32xbf16>
    %399 = vector.shape_cast %395 : vector<16x32xbf16> to vector<1x16x32xbf16>
    tpu.vector_store %arg14[%396, %c0_92, %c0_93], %399 {strides = array<i32>} : memref<8x16x32xbf16, #tpu.memory_space<vmem>>, vector<1x16x32xbf16>,
    %c4_i32 = arith.constant 4 : i32
    %c7_i32_94 = arith.constant 7 : i32
    %400 = arith.subi %c7_i32_94, %c4_i32 : i32
    %401 = tpu.concatenate %349, %385 in 1 : vector<16x32xf32>, vector<16x32xf32> -> vector<16x64xf32>
    %402 = arith.truncf %401 : vector<16x64xf32> to vector<16x64xbf16>
    %cst_95 = arith.constant dense<0.000000e+00> : vector<16x256xf32>
    %403 = tpu.matmul %402, %14, %cst_95 {dimension_numbers = #tpu.dot_dimension_numbers<[1], [0], [0], [1], [0, 0, 1, 1], [], []>} : vector<16x64xbf16>, vector<64x256xbf16>, vector<16x256xf32> -> vector<16x256xf32>
    %404 = arith.index_cast %c4_i32 : i32 to index
    %c0_96 = arith.constant 0 : index
    %c0_97 = arith.constant 0 : index
    %405 = vector.load %arg11[%404, %c0_96, %c0_97] : memref<8x16x128xf32, #tpu.memory_space<vmem>>, vector<1x16x128xf32>
    %406 = vector.shape_cast %405 : vector<1x16x128xf32> to vector<16x128xf32>
    %407 = vector.extract_strided_slice %403 {offsets = [0, 0], sizes = [16, 128], strides = [1, 1]} : vector<16x256xf32> to vector<16x128xf32>
    %408 = arith.addf %406, %407 : vector<16x128xf32>
    %409 = arith.index_cast %400 : i32 to index
    %c0_98 = arith.constant 0 : index
    %c0_99 = arith.constant 0 : index
    %410 = vector.load %arg12[%409, %c0_98, %c0_99] : memref<8x16x128xf32, #tpu.memory_space<vmem>>, vector<1x16x128xf32>
    %411 = vector.shape_cast %410 : vector<1x16x128xf32> to vector<16x128xf32>
    %412 = vector.extract_strided_slice %403 {offsets = [0, 128], sizes = [16, 128], strides = [1, 1]} : vector<16x256xf32> to vector<16x128xf32>
    %413 = arith.addf %411, %412 : vector<16x128xf32>
    %414 = arith.index_cast %c4_i32 : i32 to index
    %c0_100 = arith.constant 0 : index
    %c0_101 = arith.constant 0 : index
    %415 = vector.load %arg2[%414, %c0_100, %c0_101] : memref<8x16x1xf32, #tpu.memory_space<vmem>>, vector<1x16x1xf32>
    %416 = vector.shape_cast %415 : vector<1x16x1xf32> to vector<16x1xf32>
    %417 = vector.extract_strided_slice %408 {offsets = [0, 0], sizes = [16, 32], strides = [1, 1]} : vector<16x128xf32> to vector<16x32xf32>
    %418 = arith.negf %417 : vector<16x32xf32>
    %419 = math.exp %418 : vector<16x32xf32>
    %cst_102 = arith.constant 1.000000e+00 : f32
    %420 = vector.broadcast %cst_102 : f32 to vector<16x32xf32>
    %421 = arith.addf %420, %419 : vector<16x32xf32>
    %422 = arith.divf %420, %421 : vector<16x32xf32>
    %423 = vector.extract_strided_slice %408 {offsets = [0, 32], sizes = [16, 32], strides = [1, 1]} : vector<16x128xf32> to vector<16x32xf32>
    %424 = arith.negf %423 : vector<16x32xf32>
    %425 = math.exp %424 : vector<16x32xf32>
    %cst_103 = arith.constant 1.000000e+00 : f32
    %426 = vector.broadcast %cst_103 : f32 to vector<16x32xf32>
    %427 = arith.addf %426, %425 : vector<16x32xf32>
    %428 = arith.divf %426, %427 : vector<16x32xf32>
    %429 = vector.extract_strided_slice %408 {offsets = [0, 64], sizes = [16, 32], strides = [1, 1]} : vector<16x128xf32> to vector<16x32xf32>
    %430 = math.tanh %429 : vector<16x32xf32>
    %431 = vector.extract_strided_slice %408 {offsets = [0, 96], sizes = [16, 32], strides = [1, 1]} : vector<16x128xf32> to vector<16x32xf32>
    %432 = arith.negf %431 : vector<16x32xf32>
    %433 = math.exp %432 : vector<16x32xf32>
    %cst_104 = arith.constant 1.000000e+00 : f32
    %434 = vector.broadcast %cst_104 : f32 to vector<16x32xf32>
    %435 = arith.addf %434, %433 : vector<16x32xf32>
    %436 = arith.divf %434, %435 : vector<16x32xf32>
    %437 = arith.mulf %428, %353 : vector<16x32xf32>
    %438 = arith.mulf %422, %430 : vector<16x32xf32>
    %439 = arith.addf %437, %438 : vector<16x32xf32>
    %440 = math.tanh %439 : vector<16x32xf32>
    %441 = arith.mulf %436, %440 : vector<16x32xf32>
    %442 = arith.subf %441, %349 : vector<16x32xf32>
    %443 = vector.broadcast %416 : vector<16x1xf32> to vector<16x32xf32>
    %444 = arith.mulf %443, %442 : vector<16x32xf32>
    %445 = arith.addf %349, %444 : vector<16x32xf32>
    %446 = arith.subf %439, %353 : vector<16x32xf32>
    %447 = vector.broadcast %416 : vector<16x1xf32> to vector<16x32xf32>
    %448 = arith.mulf %447, %446 : vector<16x32xf32>
    %449 = arith.addf %353, %448 : vector<16x32xf32>
    %450 = arith.index_cast %400 : i32 to index
    %c0_105 = arith.constant 0 : index
    %c0_106 = arith.constant 0 : index
    %451 = vector.load %arg2[%450, %c0_105, %c0_106] : memref<8x16x1xf32, #tpu.memory_space<vmem>>, vector<1x16x1xf32>
    %452 = vector.shape_cast %451 : vector<1x16x1xf32> to vector<16x1xf32>
    %453 = vector.extract_strided_slice %413 {offsets = [0, 0], sizes = [16, 32], strides = [1, 1]} : vector<16x128xf32> to vector<16x32xf32>
    %454 = arith.negf %453 : vector<16x32xf32>
    %455 = math.exp %454 : vector<16x32xf32>
    %cst_107 = arith.constant 1.000000e+00 : f32
    %456 = vector.broadcast %cst_107 : f32 to vector<16x32xf32>
    %457 = arith.addf %456, %455 : vector<16x32xf32>
    %458 = arith.divf %456, %457 : vector<16x32xf32>
    %459 = vector.extract_strided_slice %413 {offsets = [0, 32], sizes = [16, 32], strides = [1, 1]} : vector<16x128xf32> to vector<16x32xf32>
    %460 = arith.negf %459 : vector<16x32xf32>
    %461 = math.exp %460 : vector<16x32xf32>
    %cst_108 = arith.constant 1.000000e+00 : f32
    %462 = vector.broadcast %cst_108 : f32 to vector<16x32xf32>
    %463 = arith.addf %462, %461 : vector<16x32xf32>
    %464 = arith.divf %462, %463 : vector<16x32xf32>
    %465 = vector.extract_strided_slice %413 {offsets = [0, 64], sizes = [16, 32], strides = [1, 1]} : vector<16x128xf32> to vector<16x32xf32>
    %466 = math.tanh %465 : vector<16x32xf32>
    %467 = vector.extract_strided_slice %413 {offsets = [0, 96], sizes = [16, 32], strides = [1, 1]} : vector<16x128xf32> to vector<16x32xf32>
    %468 = arith.negf %467 : vector<16x32xf32>
    %469 = math.exp %468 : vector<16x32xf32>
    %cst_109 = arith.constant 1.000000e+00 : f32
    %470 = vector.broadcast %cst_109 : f32 to vector<16x32xf32>
    %471 = arith.addf %470, %469 : vector<16x32xf32>
    %472 = arith.divf %470, %471 : vector<16x32xf32>
    %473 = arith.mulf %464, %389 : vector<16x32xf32>
    %474 = arith.mulf %458, %466 : vector<16x32xf32>
    %475 = arith.addf %473, %474 : vector<16x32xf32>
    %476 = math.tanh %475 : vector<16x32xf32>
    %477 = arith.mulf %472, %476 : vector<16x32xf32>
    %478 = arith.subf %477, %385 : vector<16x32xf32>
    %479 = vector.broadcast %452 : vector<16x1xf32> to vector<16x32xf32>
    %480 = arith.mulf %479, %478 : vector<16x32xf32>
    %481 = arith.addf %385, %480 : vector<16x32xf32>
    %482 = arith.subf %475, %389 : vector<16x32xf32>
    %483 = vector.broadcast %452 : vector<16x1xf32> to vector<16x32xf32>
    %484 = arith.mulf %483, %482 : vector<16x32xf32>
    %485 = arith.addf %389, %484 : vector<16x32xf32>
    %486 = arith.truncf %445 : vector<16x32xf32> to vector<16x32xbf16>
    %487 = arith.index_cast %c4_i32 : i32 to index
    %c0_110 = arith.constant 0 : index
    %c0_111 = arith.constant 0 : index
    %488 = vector.load %arg13[%487, %c0_110, %c0_111] : memref<8x16x32xbf16, #tpu.memory_space<vmem>>, vector<1x16x32xbf16>
    %489 = vector.shape_cast %488 : vector<1x16x32xbf16> to vector<16x32xbf16>
    %490 = vector.shape_cast %486 : vector<16x32xbf16> to vector<1x16x32xbf16>
    tpu.vector_store %arg13[%487, %c0_110, %c0_111], %490 {strides = array<i32>} : memref<8x16x32xbf16, #tpu.memory_space<vmem>>, vector<1x16x32xbf16>,
    %491 = arith.truncf %481 : vector<16x32xf32> to vector<16x32xbf16>
    %492 = arith.index_cast %400 : i32 to index
    %c0_112 = arith.constant 0 : index
    %c0_113 = arith.constant 0 : index
    %493 = vector.load %arg14[%492, %c0_112, %c0_113] : memref<8x16x32xbf16, #tpu.memory_space<vmem>>, vector<1x16x32xbf16>
    %494 = vector.shape_cast %493 : vector<1x16x32xbf16> to vector<16x32xbf16>
    %495 = vector.shape_cast %491 : vector<16x32xbf16> to vector<1x16x32xbf16>
    tpu.vector_store %arg14[%492, %c0_112, %c0_113], %495 {strides = array<i32>} : memref<8x16x32xbf16, #tpu.memory_space<vmem>>, vector<1x16x32xbf16>,
    %c5_i32 = arith.constant 5 : i32
    %c7_i32_114 = arith.constant 7 : i32
    %496 = arith.subi %c7_i32_114, %c5_i32 : i32
    %497 = tpu.concatenate %445, %481 in 1 : vector<16x32xf32>, vector<16x32xf32> -> vector<16x64xf32>
    %498 = arith.truncf %497 : vector<16x64xf32> to vector<16x64xbf16>
    %cst_115 = arith.constant dense<0.000000e+00> : vector<16x256xf32>
    %499 = tpu.matmul %498, %14, %cst_115 {dimension_numbers = #tpu.dot_dimension_numbers<[1], [0], [0], [1], [0, 0, 1, 1], [], []>} : vector<16x64xbf16>, vector<64x256xbf16>, vector<16x256xf32> -> vector<16x256xf32>
    %500 = arith.index_cast %c5_i32 : i32 to index
    %c0_116 = arith.constant 0 : index
    %c0_117 = arith.constant 0 : index
    %501 = vector.load %arg11[%500, %c0_116, %c0_117] : memref<8x16x128xf32, #tpu.memory_space<vmem>>, vector<1x16x128xf32>
    %502 = vector.shape_cast %501 : vector<1x16x128xf32> to vector<16x128xf32>
    %503 = vector.extract_strided_slice %499 {offsets = [0, 0], sizes = [16, 128], strides = [1, 1]} : vector<16x256xf32> to vector<16x128xf32>
    %504 = arith.addf %502, %503 : vector<16x128xf32>
    %505 = arith.index_cast %496 : i32 to index
    %c0_118 = arith.constant 0 : index
    %c0_119 = arith.constant 0 : index
    %506 = vector.load %arg12[%505, %c0_118, %c0_119] : memref<8x16x128xf32, #tpu.memory_space<vmem>>, vector<1x16x128xf32>
    %507 = vector.shape_cast %506 : vector<1x16x128xf32> to vector<16x128xf32>
    %508 = vector.extract_strided_slice %499 {offsets = [0, 128], sizes = [16, 128], strides = [1, 1]} : vector<16x256xf32> to vector<16x128xf32>
    %509 = arith.addf %507, %508 : vector<16x128xf32>
    %510 = arith.index_cast %c5_i32 : i32 to index
    %c0_120 = arith.constant 0 : index
    %c0_121 = arith.constant 0 : index
    %511 = vector.load %arg2[%510, %c0_120, %c0_121] : memref<8x16x1xf32, #tpu.memory_space<vmem>>, vector<1x16x1xf32>
    %512 = vector.shape_cast %511 : vector<1x16x1xf32> to vector<16x1xf32>
    %513 = vector.extract_strided_slice %504 {offsets = [0, 0], sizes = [16, 32], strides = [1, 1]} : vector<16x128xf32> to vector<16x32xf32>
    %514 = arith.negf %513 : vector<16x32xf32>
    %515 = math.exp %514 : vector<16x32xf32>
    %cst_122 = arith.constant 1.000000e+00 : f32
    %516 = vector.broadcast %cst_122 : f32 to vector<16x32xf32>
    %517 = arith.addf %516, %515 : vector<16x32xf32>
    %518 = arith.divf %516, %517 : vector<16x32xf32>
    %519 = vector.extract_strided_slice %504 {offsets = [0, 32], sizes = [16, 32], strides = [1, 1]} : vector<16x128xf32> to vector<16x32xf32>
    %520 = arith.negf %519 : vector<16x32xf32>
    %521 = math.exp %520 : vector<16x32xf32>
    %cst_123 = arith.constant 1.000000e+00 : f32
    %522 = vector.broadcast %cst_123 : f32 to vector<16x32xf32>
    %523 = arith.addf %522, %521 : vector<16x32xf32>
    %524 = arith.divf %522, %523 : vector<16x32xf32>
    %525 = vector.extract_strided_slice %504 {offsets = [0, 64], sizes = [16, 32], strides = [1, 1]} : vector<16x128xf32> to vector<16x32xf32>
    %526 = math.tanh %525 : vector<16x32xf32>
    %527 = vector.extract_strided_slice %504 {offsets = [0, 96], sizes = [16, 32], strides = [1, 1]} : vector<16x128xf32> to vector<16x32xf32>
    %528 = arith.negf %527 : vector<16x32xf32>
    %529 = math.exp %528 : vector<16x32xf32>
    %cst_124 = arith.constant 1.000000e+00 : f32
    %530 = vector.broadcast %cst_124 : f32 to vector<16x32xf32>
    %531 = arith.addf %530, %529 : vector<16x32xf32>
    %532 = arith.divf %530, %531 : vector<16x32xf32>
    %533 = arith.mulf %524, %449 : vector<16x32xf32>
    %534 = arith.mulf %518, %526 : vector<16x32xf32>
    %535 = arith.addf %533, %534 : vector<16x32xf32>
    %536 = math.tanh %535 : vector<16x32xf32>
    %537 = arith.mulf %532, %536 : vector<16x32xf32>
    %538 = arith.subf %537, %445 : vector<16x32xf32>
    %539 = vector.broadcast %512 : vector<16x1xf32> to vector<16x32xf32>
    %540 = arith.mulf %539, %538 : vector<16x32xf32>
    %541 = arith.addf %445, %540 : vector<16x32xf32>
    %542 = arith.subf %535, %449 : vector<16x32xf32>
    %543 = vector.broadcast %512 : vector<16x1xf32> to vector<16x32xf32>
    %544 = arith.mulf %543, %542 : vector<16x32xf32>
    %545 = arith.addf %449, %544 : vector<16x32xf32>
    %546 = arith.index_cast %496 : i32 to index
    %c0_125 = arith.constant 0 : index
    %c0_126 = arith.constant 0 : index
    %547 = vector.load %arg2[%546, %c0_125, %c0_126] : memref<8x16x1xf32, #tpu.memory_space<vmem>>, vector<1x16x1xf32>
    %548 = vector.shape_cast %547 : vector<1x16x1xf32> to vector<16x1xf32>
    %549 = vector.extract_strided_slice %509 {offsets = [0, 0], sizes = [16, 32], strides = [1, 1]} : vector<16x128xf32> to vector<16x32xf32>
    %550 = arith.negf %549 : vector<16x32xf32>
    %551 = math.exp %550 : vector<16x32xf32>
    %cst_127 = arith.constant 1.000000e+00 : f32
    %552 = vector.broadcast %cst_127 : f32 to vector<16x32xf32>
    %553 = arith.addf %552, %551 : vector<16x32xf32>
    %554 = arith.divf %552, %553 : vector<16x32xf32>
    %555 = vector.extract_strided_slice %509 {offsets = [0, 32], sizes = [16, 32], strides = [1, 1]} : vector<16x128xf32> to vector<16x32xf32>
    %556 = arith.negf %555 : vector<16x32xf32>
    %557 = math.exp %556 : vector<16x32xf32>
    %cst_128 = arith.constant 1.000000e+00 : f32
    %558 = vector.broadcast %cst_128 : f32 to vector<16x32xf32>
    %559 = arith.addf %558, %557 : vector<16x32xf32>
    %560 = arith.divf %558, %559 : vector<16x32xf32>
    %561 = vector.extract_strided_slice %509 {offsets = [0, 64], sizes = [16, 32], strides = [1, 1]} : vector<16x128xf32> to vector<16x32xf32>
    %562 = math.tanh %561 : vector<16x32xf32>
    %563 = vector.extract_strided_slice %509 {offsets = [0, 96], sizes = [16, 32], strides = [1, 1]} : vector<16x128xf32> to vector<16x32xf32>
    %564 = arith.negf %563 : vector<16x32xf32>
    %565 = math.exp %564 : vector<16x32xf32>
    %cst_129 = arith.constant 1.000000e+00 : f32
    %566 = vector.broadcast %cst_129 : f32 to vector<16x32xf32>
    %567 = arith.addf %566, %565 : vector<16x32xf32>
    %568 = arith.divf %566, %567 : vector<16x32xf32>
    %569 = arith.mulf %560, %485 : vector<16x32xf32>
    %570 = arith.mulf %554, %562 : vector<16x32xf32>
    %571 = arith.addf %569, %570 : vector<16x32xf32>
    %572 = math.tanh %571 : vector<16x32xf32>
    %573 = arith.mulf %568, %572 : vector<16x32xf32>
    %574 = arith.subf %573, %481 : vector<16x32xf32>
    %575 = vector.broadcast %548 : vector<16x1xf32> to vector<16x32xf32>
    %576 = arith.mulf %575, %574 : vector<16x32xf32>
    %577 = arith.addf %481, %576 : vector<16x32xf32>
    %578 = arith.subf %571, %485 : vector<16x32xf32>
    %579 = vector.broadcast %548 : vector<16x1xf32> to vector<16x32xf32>
    %580 = arith.mulf %579, %578 : vector<16x32xf32>
    %581 = arith.addf %485, %580 : vector<16x32xf32>
    %582 = arith.truncf %541 : vector<16x32xf32> to vector<16x32xbf16>
    %583 = arith.index_cast %c5_i32 : i32 to index
    %c0_130 = arith.constant 0 : index
    %c0_131 = arith.constant 0 : index
    %584 = vector.load %arg13[%583, %c0_130, %c0_131] : memref<8x16x32xbf16, #tpu.memory_space<vmem>>, vector<1x16x32xbf16>
    %585 = vector.shape_cast %584 : vector<1x16x32xbf16> to vector<16x32xbf16>
    %586 = vector.shape_cast %582 : vector<16x32xbf16> to vector<1x16x32xbf16>
    tpu.vector_store %arg13[%583, %c0_130, %c0_131], %586 {strides = array<i32>} : memref<8x16x32xbf16, #tpu.memory_space<vmem>>, vector<1x16x32xbf16>,
    %587 = arith.truncf %577 : vector<16x32xf32> to vector<16x32xbf16>
    %588 = arith.index_cast %496 : i32 to index
    %c0_132 = arith.constant 0 : index
    %c0_133 = arith.constant 0 : index
    %589 = vector.load %arg14[%588, %c0_132, %c0_133] : memref<8x16x32xbf16, #tpu.memory_space<vmem>>, vector<1x16x32xbf16>
    %590 = vector.shape_cast %589 : vector<1x16x32xbf16> to vector<16x32xbf16>
    %591 = vector.shape_cast %587 : vector<16x32xbf16> to vector<1x16x32xbf16>
    tpu.vector_store %arg14[%588, %c0_132, %c0_133], %591 {strides = array<i32>} : memref<8x16x32xbf16, #tpu.memory_space<vmem>>, vector<1x16x32xbf16>,
    %c6_i32 = arith.constant 6 : i32
    %c7_i32_134 = arith.constant 7 : i32
    %592 = arith.subi %c7_i32_134, %c6_i32 : i32
    %593 = tpu.concatenate %541, %577 in 1 : vector<16x32xf32>, vector<16x32xf32> -> vector<16x64xf32>
    %594 = arith.truncf %593 : vector<16x64xf32> to vector<16x64xbf16>
    %cst_135 = arith.constant dense<0.000000e+00> : vector<16x256xf32>
    %595 = tpu.matmul %594, %14, %cst_135 {dimension_numbers = #tpu.dot_dimension_numbers<[1], [0], [0], [1], [0, 0, 1, 1], [], []>} : vector<16x64xbf16>, vector<64x256xbf16>, vector<16x256xf32> -> vector<16x256xf32>
    %596 = arith.index_cast %c6_i32 : i32 to index
    %c0_136 = arith.constant 0 : index
    %c0_137 = arith.constant 0 : index
    %597 = vector.load %arg11[%596, %c0_136, %c0_137] : memref<8x16x128xf32, #tpu.memory_space<vmem>>, vector<1x16x128xf32>
    %598 = vector.shape_cast %597 : vector<1x16x128xf32> to vector<16x128xf32>
    %599 = vector.extract_strided_slice %595 {offsets = [0, 0], sizes = [16, 128], strides = [1, 1]} : vector<16x256xf32> to vector<16x128xf32>
    %600 = arith.addf %598, %599 : vector<16x128xf32>
    %601 = arith.index_cast %592 : i32 to index
    %c0_138 = arith.constant 0 : index
    %c0_139 = arith.constant 0 : index
    %602 = vector.load %arg12[%601, %c0_138, %c0_139] : memref<8x16x128xf32, #tpu.memory_space<vmem>>, vector<1x16x128xf32>
    %603 = vector.shape_cast %602 : vector<1x16x128xf32> to vector<16x128xf32>
    %604 = vector.extract_strided_slice %595 {offsets = [0, 128], sizes = [16, 128], strides = [1, 1]} : vector<16x256xf32> to vector<16x128xf32>
    %605 = arith.addf %603, %604 : vector<16x128xf32>
    %606 = arith.index_cast %c6_i32 : i32 to index
    %c0_140 = arith.constant 0 : index
    %c0_141 = arith.constant 0 : index
    %607 = vector.load %arg2[%606, %c0_140, %c0_141] : memref<8x16x1xf32, #tpu.memory_space<vmem>>, vector<1x16x1xf32>
    %608 = vector.shape_cast %607 : vector<1x16x1xf32> to vector<16x1xf32>
    %609 = vector.extract_strided_slice %600 {offsets = [0, 0], sizes = [16, 32], strides = [1, 1]} : vector<16x128xf32> to vector<16x32xf32>
    %610 = arith.negf %609 : vector<16x32xf32>
    %611 = math.exp %610 : vector<16x32xf32>
    %cst_142 = arith.constant 1.000000e+00 : f32
    %612 = vector.broadcast %cst_142 : f32 to vector<16x32xf32>
    %613 = arith.addf %612, %611 : vector<16x32xf32>
    %614 = arith.divf %612, %613 : vector<16x32xf32>
    %615 = vector.extract_strided_slice %600 {offsets = [0, 32], sizes = [16, 32], strides = [1, 1]} : vector<16x128xf32> to vector<16x32xf32>
    %616 = arith.negf %615 : vector<16x32xf32>
    %617 = math.exp %616 : vector<16x32xf32>
    %cst_143 = arith.constant 1.000000e+00 : f32
    %618 = vector.broadcast %cst_143 : f32 to vector<16x32xf32>
    %619 = arith.addf %618, %617 : vector<16x32xf32>
    %620 = arith.divf %618, %619 : vector<16x32xf32>
    %621 = vector.extract_strided_slice %600 {offsets = [0, 64], sizes = [16, 32], strides = [1, 1]} : vector<16x128xf32> to vector<16x32xf32>
    %622 = math.tanh %621 : vector<16x32xf32>
    %623 = vector.extract_strided_slice %600 {offsets = [0, 96], sizes = [16, 32], strides = [1, 1]} : vector<16x128xf32> to vector<16x32xf32>
    %624 = arith.negf %623 : vector<16x32xf32>
    %625 = math.exp %624 : vector<16x32xf32>
    %cst_144 = arith.constant 1.000000e+00 : f32
    %626 = vector.broadcast %cst_144 : f32 to vector<16x32xf32>
    %627 = arith.addf %626, %625 : vector<16x32xf32>
    %628 = arith.divf %626, %627 : vector<16x32xf32>
    %629 = arith.mulf %620, %545 : vector<16x32xf32>
    %630 = arith.mulf %614, %622 : vector<16x32xf32>
    %631 = arith.addf %629, %630 : vector<16x32xf32>
    %632 = math.tanh %631 : vector<16x32xf32>
    %633 = arith.mulf %628, %632 : vector<16x32xf32>
    %634 = arith.subf %633, %541 : vector<16x32xf32>
    %635 = vector.broadcast %608 : vector<16x1xf32> to vector<16x32xf32>
    %636 = arith.mulf %635, %634 : vector<16x32xf32>
    %637 = arith.addf %541, %636 : vector<16x32xf32>
    %638 = arith.subf %631, %545 : vector<16x32xf32>
    %639 = vector.broadcast %608 : vector<16x1xf32> to vector<16x32xf32>
    %640 = arith.mulf %639, %638 : vector<16x32xf32>
    %641 = arith.addf %545, %640 : vector<16x32xf32>
    %642 = arith.index_cast %592 : i32 to index
    %c0_145 = arith.constant 0 : index
    %c0_146 = arith.constant 0 : index
    %643 = vector.load %arg2[%642, %c0_145, %c0_146] : memref<8x16x1xf32, #tpu.memory_space<vmem>>, vector<1x16x1xf32>
    %644 = vector.shape_cast %643 : vector<1x16x1xf32> to vector<16x1xf32>
    %645 = vector.extract_strided_slice %605 {offsets = [0, 0], sizes = [16, 32], strides = [1, 1]} : vector<16x128xf32> to vector<16x32xf32>
    %646 = arith.negf %645 : vector<16x32xf32>
    %647 = math.exp %646 : vector<16x32xf32>
    %cst_147 = arith.constant 1.000000e+00 : f32
    %648 = vector.broadcast %cst_147 : f32 to vector<16x32xf32>
    %649 = arith.addf %648, %647 : vector<16x32xf32>
    %650 = arith.divf %648, %649 : vector<16x32xf32>
    %651 = vector.extract_strided_slice %605 {offsets = [0, 32], sizes = [16, 32], strides = [1, 1]} : vector<16x128xf32> to vector<16x32xf32>
    %652 = arith.negf %651 : vector<16x32xf32>
    %653 = math.exp %652 : vector<16x32xf32>
    %cst_148 = arith.constant 1.000000e+00 : f32
    %654 = vector.broadcast %cst_148 : f32 to vector<16x32xf32>
    %655 = arith.addf %654, %653 : vector<16x32xf32>
    %656 = arith.divf %654, %655 : vector<16x32xf32>
    %657 = vector.extract_strided_slice %605 {offsets = [0, 64], sizes = [16, 32], strides = [1, 1]} : vector<16x128xf32> to vector<16x32xf32>
    %658 = math.tanh %657 : vector<16x32xf32>
    %659 = vector.extract_strided_slice %605 {offsets = [0, 96], sizes = [16, 32], strides = [1, 1]} : vector<16x128xf32> to vector<16x32xf32>
    %660 = arith.negf %659 : vector<16x32xf32>
    %661 = math.exp %660 : vector<16x32xf32>
    %cst_149 = arith.constant 1.000000e+00 : f32
    %662 = vector.broadcast %cst_149 : f32 to vector<16x32xf32>
    %663 = arith.addf %662, %661 : vector<16x32xf32>
    %664 = arith.divf %662, %663 : vector<16x32xf32>
    %665 = arith.mulf %656, %581 : vector<16x32xf32>
    %666 = arith.mulf %650, %658 : vector<16x32xf32>
    %667 = arith.addf %665, %666 : vector<16x32xf32>
    %668 = math.tanh %667 : vector<16x32xf32>
    %669 = arith.mulf %664, %668 : vector<16x32xf32>
    %670 = arith.subf %669, %577 : vector<16x32xf32>
    %671 = vector.broadcast %644 : vector<16x1xf32> to vector<16x32xf32>
    %672 = arith.mulf %671, %670 : vector<16x32xf32>
    %673 = arith.addf %577, %672 : vector<16x32xf32>
    %674 = arith.subf %667, %581 : vector<16x32xf32>
    %675 = vector.broadcast %644 : vector<16x1xf32> to vector<16x32xf32>
    %676 = arith.mulf %675, %674 : vector<16x32xf32>
    %677 = arith.addf %581, %676 : vector<16x32xf32>
    %678 = arith.truncf %637 : vector<16x32xf32> to vector<16x32xbf16>
    %679 = arith.index_cast %c6_i32 : i32 to index
    %c0_150 = arith.constant 0 : index
    %c0_151 = arith.constant 0 : index
    %680 = vector.load %arg13[%679, %c0_150, %c0_151] : memref<8x16x32xbf16, #tpu.memory_space<vmem>>, vector<1x16x32xbf16>
    %681 = vector.shape_cast %680 : vector<1x16x32xbf16> to vector<16x32xbf16>
    %682 = vector.shape_cast %678 : vector<16x32xbf16> to vector<1x16x32xbf16>
    tpu.vector_store %arg13[%679, %c0_150, %c0_151], %682 {strides = array<i32>} : memref<8x16x32xbf16, #tpu.memory_space<vmem>>, vector<1x16x32xbf16>,
    %683 = arith.truncf %673 : vector<16x32xf32> to vector<16x32xbf16>
    %684 = arith.index_cast %592 : i32 to index
    %c0_152 = arith.constant 0 : index
    %c0_153 = arith.constant 0 : index
    %685 = vector.load %arg14[%684, %c0_152, %c0_153] : memref<8x16x32xbf16, #tpu.memory_space<vmem>>, vector<1x16x32xbf16>
    %686 = vector.shape_cast %685 : vector<1x16x32xbf16> to vector<16x32xbf16>
    %687 = vector.shape_cast %683 : vector<16x32xbf16> to vector<1x16x32xbf16>
    tpu.vector_store %arg14[%684, %c0_152, %c0_153], %687 {strides = array<i32>} : memref<8x16x32xbf16, #tpu.memory_space<vmem>>, vector<1x16x32xbf16>,
    %c7_i32_154 = arith.constant 7 : i32
    %c7_i32_155 = arith.constant 7 : i32
    %688 = arith.subi %c7_i32_155, %c7_i32_154 : i32
    %689 = tpu.concatenate %637, %673 in 1 : vector<16x32xf32>, vector<16x32xf32> -> vector<16x64xf32>
    %690 = arith.truncf %689 : vector<16x64xf32> to vector<16x64xbf16>
    %cst_156 = arith.constant dense<0.000000e+00> : vector<16x256xf32>
    %691 = tpu.matmul %690, %14, %cst_156 {dimension_numbers = #tpu.dot_dimension_numbers<[1], [0], [0], [1], [0, 0, 1, 1], [], []>} : vector<16x64xbf16>, vector<64x256xbf16>, vector<16x256xf32> -> vector<16x256xf32>
    %692 = arith.index_cast %c7_i32_154 : i32 to index
    %c0_157 = arith.constant 0 : index
    %c0_158 = arith.constant 0 : index
    %693 = vector.load %arg11[%692, %c0_157, %c0_158] : memref<8x16x128xf32, #tpu.memory_space<vmem>>, vector<1x16x128xf32>
    %694 = vector.shape_cast %693 : vector<1x16x128xf32> to vector<16x128xf32>
    %695 = vector.extract_strided_slice %691 {offsets = [0, 0], sizes = [16, 128], strides = [1, 1]} : vector<16x256xf32> to vector<16x128xf32>
    %696 = arith.addf %694, %695 : vector<16x128xf32>
    %697 = arith.index_cast %688 : i32 to index
    %c0_159 = arith.constant 0 : index
    %c0_160 = arith.constant 0 : index
    %698 = vector.load %arg12[%697, %c0_159, %c0_160] : memref<8x16x128xf32, #tpu.memory_space<vmem>>, vector<1x16x128xf32>
    %699 = vector.shape_cast %698 : vector<1x16x128xf32> to vector<16x128xf32>
    %700 = vector.extract_strided_slice %691 {offsets = [0, 128], sizes = [16, 128], strides = [1, 1]} : vector<16x256xf32> to vector<16x128xf32>
    %701 = arith.addf %699, %700 : vector<16x128xf32>
    %702 = arith.index_cast %c7_i32_154 : i32 to index
    %c0_161 = arith.constant 0 : index
    %c0_162 = arith.constant 0 : index
    %703 = vector.load %arg2[%702, %c0_161, %c0_162] : memref<8x16x1xf32, #tpu.memory_space<vmem>>, vector<1x16x1xf32>
    %704 = vector.shape_cast %703 : vector<1x16x1xf32> to vector<16x1xf32>
    %705 = vector.extract_strided_slice %696 {offsets = [0, 0], sizes = [16, 32], strides = [1, 1]} : vector<16x128xf32> to vector<16x32xf32>
    %706 = arith.negf %705 : vector<16x32xf32>
    %707 = math.exp %706 : vector<16x32xf32>
    %cst_163 = arith.constant 1.000000e+00 : f32
    %708 = vector.broadcast %cst_163 : f32 to vector<16x32xf32>
    %709 = arith.addf %708, %707 : vector<16x32xf32>
    %710 = arith.divf %708, %709 : vector<16x32xf32>
    %711 = vector.extract_strided_slice %696 {offsets = [0, 32], sizes = [16, 32], strides = [1, 1]} : vector<16x128xf32> to vector<16x32xf32>
    %712 = arith.negf %711 : vector<16x32xf32>
    %713 = math.exp %712 : vector<16x32xf32>
    %cst_164 = arith.constant 1.000000e+00 : f32
    %714 = vector.broadcast %cst_164 : f32 to vector<16x32xf32>
    %715 = arith.addf %714, %713 : vector<16x32xf32>
    %716 = arith.divf %714, %715 : vector<16x32xf32>
    %717 = vector.extract_strided_slice %696 {offsets = [0, 64], sizes = [16, 32], strides = [1, 1]} : vector<16x128xf32> to vector<16x32xf32>
    %718 = math.tanh %717 : vector<16x32xf32>
    %719 = vector.extract_strided_slice %696 {offsets = [0, 96], sizes = [16, 32], strides = [1, 1]} : vector<16x128xf32> to vector<16x32xf32>
    %720 = arith.negf %719 : vector<16x32xf32>
    %721 = math.exp %720 : vector<16x32xf32>
    %cst_165 = arith.constant 1.000000e+00 : f32
    %722 = vector.broadcast %cst_165 : f32 to vector<16x32xf32>
    %723 = arith.addf %722, %721 : vector<16x32xf32>
    %724 = arith.divf %722, %723 : vector<16x32xf32>
    %725 = arith.mulf %716, %641 : vector<16x32xf32>
    %726 = arith.mulf %710, %718 : vector<16x32xf32>
    %727 = arith.addf %725, %726 : vector<16x32xf32>
    %728 = math.tanh %727 : vector<16x32xf32>
    %729 = arith.mulf %724, %728 : vector<16x32xf32>
    %730 = arith.subf %729, %637 : vector<16x32xf32>
    %731 = vector.broadcast %704 : vector<16x1xf32> to vector<16x32xf32>
    %732 = arith.mulf %731, %730 : vector<16x32xf32>
    %733 = arith.addf %637, %732 : vector<16x32xf32>
    %734 = arith.subf %727, %641 : vector<16x32xf32>
    %735 = vector.broadcast %704 : vector<16x1xf32> to vector<16x32xf32>
    %736 = arith.mulf %735, %734 : vector<16x32xf32>
    %737 = arith.addf %641, %736 : vector<16x32xf32>
    %738 = arith.index_cast %688 : i32 to index
    %c0_166 = arith.constant 0 : index
    %c0_167 = arith.constant 0 : index
    %739 = vector.load %arg2[%738, %c0_166, %c0_167] : memref<8x16x1xf32, #tpu.memory_space<vmem>>, vector<1x16x1xf32>
    %740 = vector.shape_cast %739 : vector<1x16x1xf32> to vector<16x1xf32>
    %741 = vector.extract_strided_slice %701 {offsets = [0, 0], sizes = [16, 32], strides = [1, 1]} : vector<16x128xf32> to vector<16x32xf32>
    %742 = arith.negf %741 : vector<16x32xf32>
    %743 = math.exp %742 : vector<16x32xf32>
    %cst_168 = arith.constant 1.000000e+00 : f32
    %744 = vector.broadcast %cst_168 : f32 to vector<16x32xf32>
    %745 = arith.addf %744, %743 : vector<16x32xf32>
    %746 = arith.divf %744, %745 : vector<16x32xf32>
    %747 = vector.extract_strided_slice %701 {offsets = [0, 32], sizes = [16, 32], strides = [1, 1]} : vector<16x128xf32> to vector<16x32xf32>
    %748 = arith.negf %747 : vector<16x32xf32>
    %749 = math.exp %748 : vector<16x32xf32>
    %cst_169 = arith.constant 1.000000e+00 : f32
    %750 = vector.broadcast %cst_169 : f32 to vector<16x32xf32>
    %751 = arith.addf %750, %749 : vector<16x32xf32>
    %752 = arith.divf %750, %751 : vector<16x32xf32>
    %753 = vector.extract_strided_slice %701 {offsets = [0, 64], sizes = [16, 32], strides = [1, 1]} : vector<16x128xf32> to vector<16x32xf32>
    %754 = math.tanh %753 : vector<16x32xf32>
    %755 = vector.extract_strided_slice %701 {offsets = [0, 96], sizes = [16, 32], strides = [1, 1]} : vector<16x128xf32> to vector<16x32xf32>
    %756 = arith.negf %755 : vector<16x32xf32>
    %757 = math.exp %756 : vector<16x32xf32>
    %cst_170 = arith.constant 1.000000e+00 : f32
    %758 = vector.broadcast %cst_170 : f32 to vector<16x32xf32>
    %759 = arith.addf %758, %757 : vector<16x32xf32>
    %760 = arith.divf %758, %759 : vector<16x32xf32>
    %761 = arith.mulf %752, %677 : vector<16x32xf32>
    %762 = arith.mulf %746, %754 : vector<16x32xf32>
    %763 = arith.addf %761, %762 : vector<16x32xf32>
    %764 = math.tanh %763 : vector<16x32xf32>
    %765 = arith.mulf %760, %764 : vector<16x32xf32>
    %766 = arith.subf %765, %673 : vector<16x32xf32>
    %767 = vector.broadcast %740 : vector<16x1xf32> to vector<16x32xf32>
    %768 = arith.mulf %767, %766 : vector<16x32xf32>
    %769 = arith.addf %673, %768 : vector<16x32xf32>
    %770 = arith.subf %763, %677 : vector<16x32xf32>
    %771 = vector.broadcast %740 : vector<16x1xf32> to vector<16x32xf32>
    %772 = arith.mulf %771, %770 : vector<16x32xf32>
    %773 = arith.addf %677, %772 : vector<16x32xf32>
    %774 = arith.truncf %733 : vector<16x32xf32> to vector<16x32xbf16>
    %775 = arith.index_cast %c7_i32_154 : i32 to index
    %c0_171 = arith.constant 0 : index
    %c0_172 = arith.constant 0 : index
    %776 = vector.load %arg13[%775, %c0_171, %c0_172] : memref<8x16x32xbf16, #tpu.memory_space<vmem>>, vector<1x16x32xbf16>
    %777 = vector.shape_cast %776 : vector<1x16x32xbf16> to vector<16x32xbf16>
    %778 = vector.shape_cast %774 : vector<16x32xbf16> to vector<1x16x32xbf16>
    tpu.vector_store %arg13[%775, %c0_171, %c0_172], %778 {strides = array<i32>} : memref<8x16x32xbf16, #tpu.memory_space<vmem>>, vector<1x16x32xbf16>,
    %779 = arith.truncf %769 : vector<16x32xf32> to vector<16x32xbf16>
    %780 = arith.index_cast %688 : i32 to index
    %c0_173 = arith.constant 0 : index
    %c0_174 = arith.constant 0 : index
    %781 = vector.load %arg14[%780, %c0_173, %c0_174] : memref<8x16x32xbf16, #tpu.memory_space<vmem>>, vector<1x16x32xbf16>
    %782 = vector.shape_cast %781 : vector<1x16x32xbf16> to vector<16x32xbf16>
    %783 = vector.shape_cast %779 : vector<16x32xbf16> to vector<1x16x32xbf16>
    tpu.vector_store %arg14[%780, %c0_173, %c0_174], %783 {strides = array<i32>} : memref<8x16x32xbf16, #tpu.memory_space<vmem>>, vector<1x16x32xbf16>,
    %c8_i32 = arith.constant 8 : i32
    %c0_175 = arith.constant 0 : index
    %c0_176 = arith.constant 0 : index
    %c0_177 = arith.constant 0 : index
    %784 = vector.load %arg13[%c0_175, %c0_176, %c0_177] : memref<8x16x32xbf16, #tpu.memory_space<vmem>>, vector<8x16x32xbf16>
    %785 = arith.extf %784 : vector<8x16x32xbf16> to vector<8x16x32xf32>
    %c0_178 = arith.constant 0 : index
    %c0_179 = arith.constant 0 : index
    %c0_180 = arith.constant 0 : index
    %786 = vector.load %arg14[%c0_178, %c0_179, %c0_180] : memref<8x16x32xbf16, #tpu.memory_space<vmem>>, vector<8x16x32xbf16>
    %787 = arith.extf %786 : vector<8x16x32xbf16> to vector<8x16x32xf32>
    %c0_181 = arith.constant 0 : index
    %c0_182 = arith.constant 0 : index
    %c0_183 = arith.constant 0 : index
    %788 = vector.load %arg3[%c0_181, %c0_182, %c0_183] : memref<8x16x1xf32, #tpu.memory_space<vmem>>, vector<8x16x1xf32>
    %c0_184 = arith.constant 0 : index
    %c0_185 = arith.constant 0 : index
    %c0_186 = arith.constant 0 : index
    %789 = vector.load %arg2[%c0_184, %c0_185, %c0_186] : memref<8x16x1xf32, #tpu.memory_space<vmem>>, vector<8x16x1xf32>
    %cst_187 = arith.constant dense<0.000000e+00> : vector<16x1xf32>
    %790 = vector.multi_reduction <add>, %788, %cst_187 [0] : vector<8x16x1xf32> to vector<16x1xf32>
    %cst_188 = arith.constant 1.000000e+00 : f32
    %791 = vector.broadcast %cst_188 : f32 to vector<16x1xf32>
    %792 = arith.maximumf %790, %791 : vector<16x1xf32>
    %cst_189 = arith.constant 1.000000e+00 : f32
    %793 = vector.broadcast %cst_189 : f32 to vector<16x1xf32>
    %794 = arith.divf %793, %792 : vector<16x1xf32>
    %795 = vector.broadcast %788 : vector<8x16x1xf32> to vector<8x16x32xf32>
    %796 = arith.mulf %785, %795 : vector<8x16x32xf32>
    %cst_190 = arith.constant dense<0.000000e+00> : vector<16x32xf32>
    %797 = vector.multi_reduction <add>, %796, %cst_190 [0] : vector<8x16x32xf32> to vector<16x32xf32>
    %798 = vector.broadcast %794 : vector<16x1xf32> to vector<16x32xf32>
    %799 = arith.mulf %797, %798 : vector<16x32xf32>
    %800 = vector.broadcast %788 : vector<8x16x1xf32> to vector<8x16x32xf32>
    %801 = arith.mulf %787, %800 : vector<8x16x32xf32>
    %cst_191 = arith.constant dense<0.000000e+00> : vector<16x32xf32>
    %802 = vector.multi_reduction <add>, %801, %cst_191 [0] : vector<8x16x32xf32> to vector<16x32xf32>
    %803 = vector.broadcast %794 : vector<16x1xf32> to vector<16x32xf32>
    %804 = arith.mulf %802, %803 : vector<16x32xf32>
    %805 = tpu.concatenate %799, %804 in 1 : vector<16x32xf32>, vector<16x32xf32> -> vector<16x64xf32>
    %806 = arith.truncf %805 : vector<16x64xf32> to vector<16x64xbf16>
    %c0_192 = arith.constant 0 : index
    %c0_193 = arith.constant 0 : index
    %807 = vector.load %arg7[%c0_192, %c0_193] : memref<64x192xbf16, #tpu.memory_space<vmem>>, vector<64x192xbf16>
    %cst_194 = arith.constant dense<0.000000e+00> : vector<16x192xf32>
    %808 = tpu.matmul %806, %807, %cst_194 {dimension_numbers = #tpu.dot_dimension_numbers<[1], [0], [0], [1], [0, 0, 1, 1], [], []>} : vector<16x64xbf16>, vector<64x192xbf16>, vector<16x192xf32> -> vector<16x192xf32>
    %cst_195 = arith.constant 1.000000e+00 : f32
    %809 = vector.broadcast %cst_195 : f32 to vector<8x16x1xf32>
    %810 = arith.subf %809, %789 : vector<8x16x1xf32>
    %cst_196 = arith.constant -1.000000e+09 : f32
    %811 = vector.broadcast %cst_196 : f32 to vector<8x16x1xf32>
    %812 = arith.mulf %810, %811 : vector<8x16x1xf32>
    %813 = vector.extract_strided_slice %808 {offsets = [0, 0], sizes = [16, 32], strides = [1, 1]} : vector<16x192xf32> to vector<16x32xf32>
    %814 = vector.extract_strided_slice %808 {offsets = [0, 96], sizes = [16, 32], strides = [1, 1]} : vector<16x192xf32> to vector<16x32xf32>
    %815 = vector.shape_cast %813 : vector<16x32xf32> to vector<1x16x32xf32>
    %816 = vector.broadcast %815 : vector<1x16x32xf32> to vector<8x16x32xf32>
    %817 = arith.mulf %785, %816 : vector<8x16x32xf32>
    %cst_197 = arith.constant dense<0.000000e+00> : vector<8x16xf32>
    %818 = vector.multi_reduction <add>, %817, %cst_197 [2] : vector<8x16x32xf32> to vector<8x16xf32>
    %819 = vector.shape_cast %818 : vector<8x16xf32> to vector<8x16x1xf32>
    %820 = vector.shape_cast %814 : vector<16x32xf32> to vector<1x16x32xf32>
    %821 = vector.broadcast %820 : vector<1x16x32xf32> to vector<8x16x32xf32>
    %822 = arith.mulf %787, %821 : vector<8x16x32xf32>
    %cst_198 = arith.constant dense<0.000000e+00> : vector<8x16xf32>
    %823 = vector.multi_reduction <add>, %822, %cst_198 [2] : vector<8x16x32xf32> to vector<8x16xf32>
    %824 = vector.shape_cast %823 : vector<8x16xf32> to vector<8x16x1xf32>
    %825 = arith.addf %819, %824 : vector<8x16x1xf32>
    %826 = arith.addf %825, %812 : vector<8x16x1xf32>
    %cst_199 = arith.constant dense<0xFF800000> : vector<16x1xf32>
    %827 = vector.multi_reduction <maximumf>, %826, %cst_199 [0] : vector<8x16x1xf32> to vector<16x1xf32>
    %828 = vector.shape_cast %827 : vector<16x1xf32> to vector<1x16x1xf32>
    %829 = vector.broadcast %828 : vector<1x16x1xf32> to vector<8x16x1xf32>
    %830 = arith.subf %826, %829 : vector<8x16x1xf32>
    %831 = math.exp %830 : vector<8x16x1xf32>
    %cst_200 = arith.constant dense<0.000000e+00> : vector<16x1xf32>
    %832 = vector.multi_reduction <add>, %831, %cst_200 [0] : vector<8x16x1xf32> to vector<16x1xf32>
    %833 = vector.shape_cast %832 : vector<16x1xf32> to vector<1x16x1xf32>
    %834 = tpu.reciprocal %833 {approx = true} : vector<1x16x1xf32> -> vector<1x16x1xf32>
    %835 = vector.broadcast %834 : vector<1x16x1xf32> to vector<8x16x1xf32>
    %836 = arith.mulf %831, %835 : vector<8x16x1xf32>
    %837 = vector.broadcast %836 : vector<8x16x1xf32> to vector<8x16x32xf32>
    %838 = arith.mulf %837, %785 : vector<8x16x32xf32>
    %cst_201 = arith.constant dense<0.000000e+00> : vector<16x32xf32>
    %839 = vector.multi_reduction <add>, %838, %cst_201 [0] : vector<8x16x32xf32> to vector<16x32xf32>
    %840 = vector.broadcast %836 : vector<8x16x1xf32> to vector<8x16x32xf32>
    %841 = arith.mulf %840, %787 : vector<8x16x32xf32>
    %cst_202 = arith.constant dense<0.000000e+00> : vector<16x32xf32>
    %842 = vector.multi_reduction <add>, %841, %cst_202 [0] : vector<8x16x32xf32> to vector<16x32xf32>
    %843 = vector.extract_strided_slice %808 {offsets = [0, 32], sizes = [16, 32], strides = [1, 1]} : vector<16x192xf32> to vector<16x32xf32>
    %844 = vector.extract_strided_slice %808 {offsets = [0, 128], sizes = [16, 32], strides = [1, 1]} : vector<16x192xf32> to vector<16x32xf32>
    %845 = vector.shape_cast %843 : vector<16x32xf32> to vector<1x16x32xf32>
    %846 = vector.broadcast %845 : vector<1x16x32xf32> to vector<8x16x32xf32>
    %847 = arith.mulf %785, %846 : vector<8x16x32xf32>
    %cst_203 = arith.constant dense<0.000000e+00> : vector<8x16xf32>
    %848 = vector.multi_reduction <add>, %847, %cst_203 [2] : vector<8x16x32xf32> to vector<8x16xf32>
    %849 = vector.shape_cast %848 : vector<8x16xf32> to vector<8x16x1xf32>
    %850 = vector.shape_cast %844 : vector<16x32xf32> to vector<1x16x32xf32>
    %851 = vector.broadcast %850 : vector<1x16x32xf32> to vector<8x16x32xf32>
    %852 = arith.mulf %787, %851 : vector<8x16x32xf32>
    %cst_204 = arith.constant dense<0.000000e+00> : vector<8x16xf32>
    %853 = vector.multi_reduction <add>, %852, %cst_204 [2] : vector<8x16x32xf32> to vector<8x16xf32>
    %854 = vector.shape_cast %853 : vector<8x16xf32> to vector<8x16x1xf32>
    %855 = arith.addf %849, %854 : vector<8x16x1xf32>
    %856 = arith.addf %855, %812 : vector<8x16x1xf32>
    %cst_205 = arith.constant dense<0xFF800000> : vector<16x1xf32>
    %857 = vector.multi_reduction <maximumf>, %856, %cst_205 [0] : vector<8x16x1xf32> to vector<16x1xf32>
    %858 = vector.shape_cast %857 : vector<16x1xf32> to vector<1x16x1xf32>
    %859 = vector.broadcast %858 : vector<1x16x1xf32> to vector<8x16x1xf32>
    %860 = arith.subf %856, %859 : vector<8x16x1xf32>
    %861 = math.exp %860 : vector<8x16x1xf32>
    %cst_206 = arith.constant dense<0.000000e+00> : vector<16x1xf32>
    %862 = vector.multi_reduction <add>, %861, %cst_206 [0] : vector<8x16x1xf32> to vector<16x1xf32>
    %863 = vector.shape_cast %862 : vector<16x1xf32> to vector<1x16x1xf32>
    %864 = tpu.reciprocal %863 {approx = true} : vector<1x16x1xf32> -> vector<1x16x1xf32>
    %865 = vector.broadcast %864 : vector<1x16x1xf32> to vector<8x16x1xf32>
    %866 = arith.mulf %861, %865 : vector<8x16x1xf32>
    %867 = vector.broadcast %866 : vector<8x16x1xf32> to vector<8x16x32xf32>
    %868 = arith.mulf %867, %785 : vector<8x16x32xf32>
    %cst_207 = arith.constant dense<0.000000e+00> : vector<16x32xf32>
    %869 = vector.multi_reduction <add>, %868, %cst_207 [0] : vector<8x16x32xf32> to vector<16x32xf32>
    %870 = vector.broadcast %866 : vector<8x16x1xf32> to vector<8x16x32xf32>
    %871 = arith.mulf %870, %787 : vector<8x16x32xf32>
    %cst_208 = arith.constant dense<0.000000e+00> : vector<16x32xf32>
    %872 = vector.multi_reduction <add>, %871, %cst_208 [0] : vector<8x16x32xf32> to vector<16x32xf32>
    %873 = vector.extract_strided_slice %808 {offsets = [0, 64], sizes = [16, 32], strides = [1, 1]} : vector<16x192xf32> to vector<16x32xf32>
    %874 = vector.extract_strided_slice %808 {offsets = [0, 160], sizes = [16, 32], strides = [1, 1]} : vector<16x192xf32> to vector<16x32xf32>
    %875 = vector.shape_cast %873 : vector<16x32xf32> to vector<1x16x32xf32>
    %876 = vector.broadcast %875 : vector<1x16x32xf32> to vector<8x16x32xf32>
    %877 = arith.mulf %785, %876 : vector<8x16x32xf32>
    %cst_209 = arith.constant dense<0.000000e+00> : vector<8x16xf32>
    %878 = vector.multi_reduction <add>, %877, %cst_209 [2] : vector<8x16x32xf32> to vector<8x16xf32>
    %879 = vector.shape_cast %878 : vector<8x16xf32> to vector<8x16x1xf32>
    %880 = vector.shape_cast %874 : vector<16x32xf32> to vector<1x16x32xf32>
    %881 = vector.broadcast %880 : vector<1x16x32xf32> to vector<8x16x32xf32>
    %882 = arith.mulf %787, %881 : vector<8x16x32xf32>
    %cst_210 = arith.constant dense<0.000000e+00> : vector<8x16xf32>
    %883 = vector.multi_reduction <add>, %882, %cst_210 [2] : vector<8x16x32xf32> to vector<8x16xf32>
    %884 = vector.shape_cast %883 : vector<8x16xf32> to vector<8x16x1xf32>
    %885 = arith.addf %879, %884 : vector<8x16x1xf32>
    %886 = arith.addf %885, %812 : vector<8x16x1xf32>
    %cst_211 = arith.constant dense<0xFF800000> : vector<16x1xf32>
    %887 = vector.multi_reduction <maximumf>, %886, %cst_211 [0] : vector<8x16x1xf32> to vector<16x1xf32>
    %888 = vector.shape_cast %887 : vector<16x1xf32> to vector<1x16x1xf32>
    %889 = vector.broadcast %888 : vector<1x16x1xf32> to vector<8x16x1xf32>
    %890 = arith.subf %886, %889 : vector<8x16x1xf32>
    %891 = math.exp %890 : vector<8x16x1xf32>
    %cst_212 = arith.constant dense<0.000000e+00> : vector<16x1xf32>
    %892 = vector.multi_reduction <add>, %891, %cst_212 [0] : vector<8x16x1xf32> to vector<16x1xf32>
    %893 = vector.shape_cast %892 : vector<16x1xf32> to vector<1x16x1xf32>
    %894 = tpu.reciprocal %893 {approx = true} : vector<1x16x1xf32> -> vector<1x16x1xf32>
    %895 = vector.broadcast %894 : vector<1x16x1xf32> to vector<8x16x1xf32>
    %896 = arith.mulf %891, %895 : vector<8x16x1xf32>
    %897 = vector.broadcast %896 : vector<8x16x1xf32> to vector<8x16x32xf32>
    %898 = arith.mulf %897, %785 : vector<8x16x32xf32>
    %cst_213 = arith.constant dense<0.000000e+00> : vector<16x32xf32>
    %899 = vector.multi_reduction <add>, %898, %cst_213 [0] : vector<8x16x32xf32> to vector<16x32xf32>
    %900 = vector.broadcast %896 : vector<8x16x1xf32> to vector<8x16x32xf32>
    %901 = arith.mulf %900, %787 : vector<8x16x32xf32>
    %cst_214 = arith.constant dense<0.000000e+00> : vector<16x32xf32>
    %902 = vector.multi_reduction <add>, %901, %cst_214 [0] : vector<8x16x32xf32> to vector<16x32xf32>
    %903 = tpu.concatenate %839, %869, %899, %842, %872, %902 in 1 : vector<16x32xf32>, vector<16x32xf32>, vector<16x32xf32>, vector<16x32xf32>, vector<16x32xf32>, vector<16x32xf32> -> vector<16x192xf32>
    %904 = arith.truncf %903 : vector<16x192xf32> to vector<16x192xbf16>
    %c0_215 = arith.constant 0 : index
    %c0_216 = arith.constant 0 : index
    %905 = vector.load %arg8[%c0_215, %c0_216] : memref<192x128xbf16, #tpu.memory_space<vmem>>, vector<192x128xbf16>
    %cst_217 = arith.constant dense<0.000000e+00> : vector<16x128xf32>
    %906 = tpu.matmul %904, %905, %cst_217 {dimension_numbers = #tpu.dot_dimension_numbers<[1], [0], [0], [1], [0, 0, 1, 1], [], []>} : vector<16x192xbf16>, vector<192x128xbf16>, vector<16x128xf32> -> vector<16x128xf32>
    %c0_218 = arith.constant 0 : index
    %c0_219 = arith.constant 0 : index
    %907 = vector.load %arg9[%c0_218, %c0_219] : memref<1x128xf32, #tpu.memory_space<vmem>>, vector<1x128xf32>
    %908 = vector.broadcast %907 : vector<1x128xf32> to vector<16x128xf32>
    %909 = arith.addf %906, %908 : vector<16x128xf32>
    %c0_220 = arith.constant 0 : index
    %c0_221 = arith.constant 0 : index
    %910 = vector.load %arg10[%c0_220, %c0_221] : memref<16x128xf32, #tpu.memory_space<vmem>>, vector<16x128xf32>
    tpu.vector_store %arg10[%c0_220, %c0_221], %909 {strides = array<i32>} : memref<16x128xf32, #tpu.memory_space<vmem>>, vector<16x128xf32>,
    return
  }
  func.func @transform_0(%arg0: i32) -> (i32, i32, i32) {
    %c0_i32 = arith.constant 0 : i32
    %c0_i32_0 = arith.constant 0 : i32
    %c0_i32_1 = arith.constant 0 : i32
    return %c0_i32, %arg0, %c0_i32_0 : i32, i32, i32
  }
  func.func @transform_1(%arg0: i32) -> (i32, i32, i32) {
    %c0_i32 = arith.constant 0 : i32
    %c0_i32_0 = arith.constant 0 : i32
    %c0_i32_1 = arith.constant 0 : i32
    return %c0_i32, %arg0, %c0_i32_0 : i32, i32, i32
  }
  func.func @transform_2(%arg0: i32) -> (i32, i32, i32) {
    %c0_i32 = arith.constant 0 : i32
    %c0_i32_0 = arith.constant 0 : i32
    %c0_i32_1 = arith.constant 0 : i32
    return %c0_i32, %arg0, %c0_i32_0 : i32, i32, i32
  }
  func.func @transform_3(%arg0: i32) -> (i32, i32) {
    %c0_i32 = arith.constant 0 : i32
    %c0_i32_0 = arith.constant 0 : i32
    %c0_i32_1 = arith.constant 0 : i32
    return %c0_i32, %c0_i32_0 : i32, i32
  }
  func.func @transform_4(%arg0: i32) -> (i32, i32) {
    %c0_i32 = arith.constant 0 : i32
    %c0_i32_0 = arith.constant 0 : i32
    %c0_i32_1 = arith.constant 0 : i32
    return %c0_i32, %c0_i32_0 : i32, i32
  }
  func.func @transform_5(%arg0: i32) -> (i32, i32) {
    %c0_i32 = arith.constant 0 : i32
    %c0_i32_0 = arith.constant 0 : i32
    %c0_i32_1 = arith.constant 0 : i32
    return %c0_i32, %c0_i32_0 : i32, i32
  }
  func.func @transform_6(%arg0: i32) -> (i32, i32) {
    %c0_i32 = arith.constant 0 : i32
    %c0_i32_0 = arith.constant 0 : i32
    %c0_i32_1 = arith.constant 0 : i32
    return %c0_i32, %c0_i32_0 : i32, i32
  }
  func.func @transform_7(%arg0: i32) -> (i32, i32) {
    %c0_i32 = arith.constant 0 : i32
    %c0_i32_0 = arith.constant 0 : i32
    %c0_i32_1 = arith.constant 0 : i32
    return %c0_i32, %c0_i32_0 : i32, i32
  }
  func.func @transform_8(%arg0: i32) -> (i32, i32) {
    %c0_i32 = arith.constant 0 : i32
    %c0_i32_0 = arith.constant 0 : i32
    %c0_i32_1 = arith.constant 0 : i32
    return %c0_i32, %c0_i32_0 : i32, i32
  }
  func.func @transform_9(%arg0: i32) -> (i32, i32) {
    %c0_i32 = arith.constant 0 : i32
    %c0_i32_0 = arith.constant 0 : i32
    return %arg0, %c0_i32 : i32, i32
  }
}

</mosaic_0001>

<llo_original>
// kernel: contextualized_forward.1
$region0: #{contextualized_forward.1}
  #allocation0 [shape = 'u32[]', space=smem, size = 0x4, offset = 0x4, fixed_abs, tag = 'smem constant byte address 0x4 - core index']
  #allocation1 [shape = 'u32[144,128]{1,0:T(1,128)}', space=vmem, size = 0x12000, scoped, tag = 'internal scratch']
  #allocation2 [shape = 'f32[8,16,128]{2,1,0:T(8,128)}', space=vmem, size = 0x10000, scoped, tag = 'scratch operand']
  #allocation3 [shape = 'f32[8,16,128]{2,1,0:T(8,128)}', space=vmem, size = 0x10000, scoped, tag = 'scratch operand']
  #allocation4 [shape = 'bf16[8,16,32]{2,1,0:T(16,128)(2,1)}', space=vmem, size = 0x8000, scoped, tag = 'scratch operand']
  #allocation5 [shape = 'bf16[8,16,32]{2,1,0:T(16,128)(2,1)}', space=vmem, size = 0x8000, scoped, tag = 'scratch operand']
  %s0 = inlined_call_operand.vmem [shape: f32[8,32,32], index: 0, kind: input, shape index: {}]
  %s1 = inlined_call_operand.vmem [shape: f32[8,32,1], index: 1, kind: input, shape index: {}]
  %s2 = inlined_call_operand.vmem [shape: f32[8,32,1], index: 2, kind: input, shape index: {}]
  %s3 = inlined_call_operand.vmem [shape: bf16[32,256], index: 3, kind: input, shape index: {}]
  %s4 = inlined_call_operand.vmem [shape: bf16[64,256], index: 4, kind: input, shape index: {}]
  %s5 = inlined_call_operand.vmem [shape: f32[1,256], index: 5, kind: input, shape index: {}]
  %s6 = inlined_call_operand.vmem [shape: bf16[64,192], index: 6, kind: input, shape index: {}]
  %s7 = inlined_call_operand.vmem [shape: bf16[192,128], index: 7, kind: input, shape index: {}]
  %s8 = inlined_call_operand.vmem [shape: f32[1,128], index: 8, kind: input, shape index: {}]
  %s9 = inlined_call_operand.vmem [shape: f32[32,128], index: 9, kind: output, shape index: {}]
  %s10 = sld [smem:[#allocation0]]
  $region183: #{contextualized_forward.1} parent=0
    _
  %s12 = ssub.s32 1, %s10
  %s13 = scalar_select 0, %s12, %s10
  $region1: #{contextualized_forward.1} parent=0
    #allocation6 [shape = 'u8[131072]{0}', space=vmem, size = 0x20000, scoped, tag = 'input window, operand 0']
    #allocation7 [shape = 'u8[131072]{0}', space=vmem, size = 0x20000, scoped, tag = 'input window, operand 1']
    #allocation8 [shape = 'u8[131072]{0}', space=vmem, size = 0x20000, scoped, tag = 'input window, operand 2']
    loop: start=0, step=1, limit=4
    $region2: #{contextualized_forward.1} parent=1 // loop_pre_header
      _
    $region3: #{contextualized_forward.1} parent=1 // loop_header
      %s15 = sphi 0, %s19
      %p16 = scmp.ge.s32.totalorder %s15, 4
      %s25 = sphi 0, %s27
      %s28 = sphi 0, %s25
      %s29 = sphi 0, %s28
      %s45 = sphi 0, %s29
      %s51 = sphi 0, %s53
      %s54 = sphi 0, %s51
      %s55 = sphi 0, %s54
      %s71 = sphi 0, %s55
      %s77 = sphi 0, %s79
      %s80 = sphi 0, %s77
      %s81 = sphi 0, %s80
      %s97 = sphi 0, %s81
      %s101 = sphi 0, %s101
      %s103 = sphi 0, %s101
      %s104 = sphi 0, %s103
      %s118 = sphi 0, %s104
      %s122 = sphi 0, %s122
      %s124 = sphi 0, %s122
      %s125 = sphi 0, %s124
      %s139 = sphi 0, %s125
      %s143 = sphi 0, %s143
      %s145 = sphi 0, %s143
      %s146 = sphi 0, %s145
      %s160 = sphi 0, %s146
      %s164 = sphi 0, %s164
      %s166 = sphi 0, %s164
      %s167 = sphi 0, %s166
      %s181 = sphi 0, %s167
      %s185 = sphi 0, %s185
      %s187 = sphi 0, %s185
      %s188 = sphi 0, %s187
      %s202 = sphi 0, %s188
      %s206 = sphi 0, %s206
      %s208 = sphi 0, %s206
      %s209 = sphi 0, %s208
      %s223 = sphi 0, %s209
      %s229 = sphi 0, %s231
      %s232 = sphi 0, %s229
      %s233 = sphi 0, %s232
      %s249 = sphi 0, %s233
    $region4: #{contextualized_forward.1} parent=1 // loop_header_branch
      %18 = sbr.rel (%p16) target = $region8
    $region5: #{contextualized_forward.1} parent=1 // loop_body
      %s20 = ssub.s32 %s15, 1
      %s21 = ssub.s32 %s15, 2
      %s22 = sadd.s32 %s15, 1
      %s23 = ssub.s32 %s15, %s22
      %p24 = scmp.eq.s32.totalorder %s23, 0
      %s26 = sadd.s32 %s25, 1
      %s27 = scalar_select %p24, %s25, %s26
      %p30 = pneg %p24
      %p31 = scmp.eq.s32.totalorder %s15, 1
      %p32 = por %p30, %p31
      %p33 = scmp.ne.s32.totalorder %s25, %s28
      %p34 = scmp.eq.s32.totalorder %s15, 0
      %p35 = por %p33, %p34
      %p36 = scmp.ne.s32.totalorder %s25, %s28
      %p37 = scmp.eq.s32.totalorder %s20, 1
      %p38 = por %p36, %p37
      %p39 = scmp.ne.s32.totalorder %s28, %s29
      %p40 = scmp.eq.s32.totalorder %s20, 0
      %p41 = por %p39, %p40
      %p42 = scmp.ne.s32.totalorder %s28, %s29
      %p43 = scmp.eq.s32.totalorder %s21, 1
      %p44 = por %p42, %p43
      %p46 = scmp.ne.s32.totalorder %s29, %s45
      %p47 = scmp.eq.s32.totalorder %s21, 0
      %p48 = por %p46, %p47
      %s49 = ssub.s32 %s15, %s22
      %p50 = scmp.eq.s32.totalorder %s49, 0
      %s52 = sadd.s32 %s51, 1
      %s53 = scalar_select %p50, %s51, %s52
      %p56 = pneg %p50
      %p57 = scmp.eq.s32.totalorder %s15, 1
      %p58 = por %p56, %p57
      %p59 = scmp.ne.s32.totalorder %s51, %s54
      %p60 = scmp.eq.s32.totalorder %s15, 0
      %p61 = por %p59, %p60
      %p62 = scmp.ne.s32.totalorder %s51, %s54
      %p63 = scmp.eq.s32.totalorder %s20, 1
      %p64 = por %p62, %p63
      %p65 = scmp.ne.s32.totalorder %s54, %s55
      %p66 = scmp.eq.s32.totalorder %s20, 0
      %p67 = por %p65, %p66
      %p68 = scmp.ne.s32.totalorder %s54, %s55
      %p69 = scmp.eq.s32.totalorder %s21, 1
      %p70 = por %p68, %p69
      %p72 = scmp.ne.s32.totalorder %s55, %s71
      %p73 = scmp.eq.s32.totalorder %s21, 0
      %p74 = por %p72, %p73
      %s75 = ssub.s32 %s15, %s22
      %p76 = scmp.eq.s32.totalorder %s75, 0
      %s78 = sadd.s32 %s77, 1
      %s79 = scalar_select %p76, %s77, %s78
      %p82 = pneg %p76
      %p83 = scmp.eq.s32.totalorder %s15, 1
      %p84 = por %p82, %p83
      %p85 = scmp.ne.s32.totalorder %s77, %s80
      %p86 = scmp.eq.s32.totalorder %s15, 0
      %p87 = por %p85, %p86
      %p88 = scmp.ne.s32.totalorder %s77, %s80
      %p89 = scmp.eq.s32.totalorder %s20, 1
      %p90 = por %p88, %p89
      %p91 = scmp.ne.s32.totalorder %s80, %s81
      %p92 = scmp.eq.s32.totalorder %s20, 0
      %p93 = por %p91, %p92
      %p94 = scmp.ne.s32.totalorder %s80, %s81
      %p95 = scmp.eq.s32.totalorder %s21, 1
      %p96 = por %p94, %p95
      %p98 = scmp.ne.s32.totalorder %s81, %s97
      %p99 = scmp.eq.s32.totalorder %s21, 0
      %p100 = por %p98, %p99
      %s102 = sadd.s32 %s101, 1
      %p105 = scmp.eq.s32.totalorder %s15, 1
      %p106 = scmp.ne.s32.totalorder %s101, %s103
      %p107 = scmp.eq.s32.totalorder %s15, 0
      %p108 = por %p106, %p107
      %p109 = scmp.ne.s32.totalorder %s101, %s103
      %p110 = scmp.eq.s32.totalorder %s20, 1
      %p111 = por %p109, %p110
      %p112 = scmp.ne.s32.totalorder %s103, %s104
      %p113 = scmp.eq.s32.totalorder %s20, 0
      %p114 = por %p112, %p113
      %p115 = scmp.ne.s32.totalorder %s103, %s104
      %p116 = scmp.eq.s32.totalorder %s21, 1
      %p117 = por %p115, %p116
      %p119 = scmp.ne.s32.totalorder %s104, %s118
      %p120 = scmp.eq.s32.totalorder %s21, 0
      %p121 = por %p119, %p120
      %s123 = sadd.s32 %s122, 1
      %p126 = scmp.eq.s32.totalorder %s15, 1
      %p127 = scmp.ne.s32.totalorder %s122, %s124
      %p128 = scmp.eq.s32.totalorder %s15, 0
      %p129 = por %p127, %p128
      %p130 = scmp.ne.s32.totalorder %s122, %s124
      %p131 = scmp.eq.s32.totalorder %s20, 1
      %p132 = por %p130, %p131
      %p133 = scmp.ne.s32.totalorder %s124, %s125
      %p134 = scmp.eq.s32.totalorder %s20, 0
      %p135 = por %p133, %p134
      %p136 = scmp.ne.s32.totalorder %s124, %s125
      %p137 = scmp.eq.s32.totalorder %s21, 1
      %p138 = por %p136, %p137
      %p140 = scmp.ne.s32.totalorder %s125, %s139
      %p141 = scmp.eq.s32.totalorder %s21, 0
      %p142 = por %p140, %p141
      %s144 = sadd.s32 %s143, 1
      %p147 = scmp.eq.s32.totalorder %s15, 1
      %p148 = scmp.ne.s32.totalorder %s143, %s145
      %p149 = scmp.eq.s32.totalorder %s15, 0
      %p150 = por %p148, %p149
      %p151 = scmp.ne.s32.totalorder %s143, %s145
      %p152 = scmp.eq.s32.totalorder %s20, 1
      %p153 = por %p151, %p152
      %p154 = scmp.ne.s32.totalorder %s145, %s146
      %p155 = scmp.eq.s32.totalorder %s20, 0
      %p156 = por %p154, %p155
      %p157 = scmp.ne.s32.totalorder %s145, %s146
      %p158 = scmp.eq.s32.totalorder %s21, 1
      %p159 = por %p157, %p158
      %p161 = scmp.ne.s32.totalorder %s146, %s160
      %p162 = scmp.eq.s32.totalorder %s21, 0
      %p163 = por %p161, %p162
      %s165 = sadd.s32 %s164, 1
      %p168 = scmp.eq.s32.totalorder %s15, 1
      %p169 = scmp.ne.s32.totalorder %s164, %s166
      %p170 = scmp.eq.s32.totalorder %s15, 0
      %p171 = por %p169, %p170
      %p172 = scmp.ne.s32.totalorder %s164, %s166
      %p173 = scmp.eq.s32.totalorder %s20, 1
      %p174 = por %p172, %p173
      %p175 = scmp.ne.s32.totalorder %s166, %s167
      %p176 = scmp.eq.s32.totalorder %s20, 0
      %p177 = por %p175, %p176
      %p178 = scmp.ne.s32.totalorder %s166, %s167
      %p179 = scmp.eq.s32.totalorder %s21, 1
      %p180 = por %p178, %p179
      %p182 = scmp.ne.s32.totalorder %s167, %s181
      %p183 = scmp.eq.s32.totalorder %s21, 0
      %p184 = por %p182, %p183
      %s186 = sadd.s32 %s185, 1
      %p189 = scmp.eq.s32.totalorder %s15, 1
      %p190 = scmp.ne.s32.totalorder %s185, %s187
      %p191 = scmp.eq.s32.totalorder %s15, 0
      %p192 = por %p190, %p191
      %p193 = scmp.ne.s32.totalorder %s185, %s187
      %p194 = scmp.eq.s32.totalorder %s20, 1
      %p195 = por %p193, %p194
      %p196 = scmp.ne.s32.totalorder %s187, %s188
      %p197 = scmp.eq.s32.totalorder %s20, 0
      %p198 = por %p196, %p197
      %p199 = scmp.ne.s32.totalorder %s187, %s188
      %p200 = scmp.eq.s32.totalorder %s21, 1
      %p201 = por %p199, %p200
      %p203 = scmp.ne.s32.totalorder %s188, %s202
      %p204 = scmp.eq.s32.totalorder %s21, 0
      %p205 = por %p203, %p204
      %s207 = sadd.s32 %s206, 1
      %p210 = scmp.eq.s32.totalorder %s15, 1
      %p211 = scmp.ne.s32.totalorder %s206, %s208
      %p212 = scmp.eq.s32.totalorder %s15, 0
      %p213 = por %p211, %p212
      %p214 = scmp.ne.s32.totalorder %s206, %s208
      %p215 = scmp.eq.s32.totalorder %s20, 1
      %p216 = por %p214, %p215
      %p217 = scmp.ne.s32.totalorder %s208, %s209
      %p218 = scmp.eq.s32.totalorder %s20, 0
      %p219 = por %p217, %p218
      %p220 = scmp.ne.s32.totalorder %s208, %s209
      %p221 = scmp.eq.s32.totalorder %s21, 1
      %p222 = por %p220, %p221
      %p224 = scmp.ne.s32.totalorder %s209, %s223
      %p225 = scmp.eq.s32.totalorder %s21, 0
      %p226 = por %p224, %p225
      %s227 = ssub.s32 %s15, %s22
      %p228 = scmp.eq.s32.totalorder %s227, 0
      %s230 = sadd.s32 %s229, 1
      %s231 = scalar_select %p228, %s229, %s230
      %p234 = pneg %p228
      %p235 = scmp.eq.s32.totalorder %s15, 1
      %p236 = por %p234, %p235
      %p237 = scmp.ne.s32.totalorder %s229, %s232
      %p238 = scmp.eq.s32.totalorder %s15, 0
      %p239 = por %p237, %p238
      %p240 = scmp.ne.s32.totalorder %s229, %s232
      %p241 = scmp.eq.s32.totalorder %s20, 1
      %p242 = por %p240, %p241
      %p243 = scmp.ne.s32.totalorder %s232, %s233
      %p244 = scmp.eq.s32.totalorder %s20, 0
      %p245 = por %p243, %p244
      %p246 = scmp.ne.s32.totalorder %s232, %s233
      %p247 = scmp.eq.s32.totalorder %s21, 1
      %p248 = por %p246, %p247
      %p250 = scmp.ne.s32.totalorder %s233, %s249
      %p251 = scmp.eq.s32.totalorder %s21, 0
      %p252 = por %p250, %p251
      %p253 = scmp.le.s32.totalorder 1, %s15
      %p254 = scmp.lt.s32.totalorder %s15, 3
      %p255 = pnand %p253, %p254
      %p256 = pneg %p255
      // Predicated region
      $region9: #{contextualized_forward.1} parent=5 // pred_check
        _
      $region10: #{contextualized_forward.1} parent=5 // pred_check_branch
        %258 = sbr.rel (%p255) target = $region12
      $region11: #{contextualized_forward.1} parent=5 // pred_region
        %s259 = ssub.s32 %s15, 1
        // Predicated region
        $region13: #{contextualized_forward.1} parent=11 // pred_check
          %p260 = pneg %p114
        $region14: #{contextualized_forward.1} parent=11 // pred_check_branch
          %262 = sbr.rel (%p260) target = $region16
        $region15: #{contextualized_forward.1} parent=11 // pred_region
          _
        $region16: #{contextualized_forward.1} parent=11 // pred_fallthru
          _
        // Predicated region
        $region17: #{contextualized_forward.1} parent=11 // pred_check
          %p263 = pneg %p135
        $region18: #{contextualized_forward.1} parent=11 // pred_check_branch
          %265 = sbr.rel (%p263) target = $region20
        $region19: #{contextualized_forward.1} parent=11 // pred_region
          _
        $region20: #{contextualized_forward.1} parent=11 // pred_fallthru
          _
        // Predicated region
        $region21: #{contextualized_forward.1} parent=11 // pred_check
          %p266 = pneg %p156
        $region22: #{contextualized_forward.1} parent=11 // pred_check_branch
          %268 = sbr.rel (%p266) target = $region24
        $region23: #{contextualized_forward.1} parent=11 // pred_region
          _
        $region24: #{contextualized_forward.1} parent=11 // pred_fallthru
          _
        // Predicated region
        $region25: #{contextualized_forward.1} parent=11 // pred_check
          %p269 = pneg %p177
        $region26: #{contextualized_forward.1} parent=11 // pred_check_branch
          %271 = sbr.rel (%p269) target = $region28
        $region27: #{contextualized_forward.1} parent=11 // pred_region
          _
        $region28: #{contextualized_forward.1} parent=11 // pred_fallthru
          _
        // Predicated region
        $region29: #{contextualized_forward.1} parent=11 // pred_check
          %p272 = pneg %p198
        $region30: #{contextualized_forward.1} parent=11 // pred_check_branch
          %274 = sbr.rel (%p272) target = $region32
        $region31: #{contextualized_forward.1} parent=11 // pred_region
          _
        $region32: #{contextualized_forward.1} parent=11 // pred_fallthru
          _
        // Predicated region
        $region33: #{contextualized_forward.1} parent=11 // pred_check
          %p275 = pneg %p219
        $region34: #{contextualized_forward.1} parent=11 // pred_check_branch
          %277 = sbr.rel (%p275) target = $region36
        $region35: #{contextualized_forward.1} parent=11 // pred_region
          _
        $region36: #{contextualized_forward.1} parent=11 // pred_fallthru
          _
      $region12: #{contextualized_forward.1} parent=5 // pred_fallthru
        _
      %p278 = scmp.lt.s32.totalorder %s15, 2
      // Predicated region
      $region37: #{contextualized_forward.1} parent=5 // pred_check
        %p279 = pneg %p278
      $region38: #{contextualized_forward.1} parent=5 // pred_check_branch
        %281 = sbr.rel (%p279) target = $region40
      $region39: #{contextualized_forward.1} parent=5 // pred_region
        // Predicated region
        $region41: #{contextualized_forward.1} parent=39 // pred_check
          %p282 = pneg %p35
        $region42: #{contextualized_forward.1} parent=39 // pred_check_branch
          %284 = sbr.rel (%p282) target = $region44
        $region43: #{contextualized_forward.1} parent=39 // pred_region
          %s285 = sand.u32 %s25, 1
          %s286 = sand.u32 %s25, 1
          %s287 = smul.addr %s286, 128
          %s288 = scalar_lea.vmem [#allocation6], %s287
          %s289 = smul.u32 2, %s15
          %s290 = smul.addr %s289, 8
          %s291 = scalar_lea.vmem %s0, %s290
          // Predicated region
          $region45: #{contextualized_forward.1} parent=43 // pred_check
            _
          $region46: #{contextualized_forward.1} parent=43 // pred_check_branch
            %293 = sbr.rel (0) target = $region48
          $region47: #{contextualized_forward.1} parent=43 // pred_region
            // Predicated region
            $region49: #{contextualized_forward.1} parent=47 // pred_check
              _
            $region50: #{contextualized_forward.1} parent=47 // pred_check_branch
              %295 = sbr.rel (0) target = $region52
            $region51: #{contextualized_forward.1} parent=47 // pred_region
              // Predicated region
              $region64: #{contextualized_forward.1} parent=51 // pred_check
                _
              $region65: #{contextualized_forward.1} parent=51 // pred_check_branch
                %340 = sbr.rel (0) target = $region67
              $region66: #{contextualized_forward.1} parent=51 // pred_region
                loop: start=0, step=1, limit=1
                $region68: #{contextualized_forward.1} parent=66 // loop_pre_header
                  _
                $region69: #{contextualized_forward.1} parent=66 // loop_header
                  %s342 = sphi 0, %s346
                  %p343 = scmp.ge.s32.totalorder %s342, 1
                  %s347 = sphi %s291, %s291
                  %s348 = sphi %s288, %s288
                $region70: #{contextualized_forward.1} parent=66 // loop_header_branch
                  %345 = sbr.rel (%p343) target = $region74
                $region71: #{contextualized_forward.1} parent=66 // loop_body
                  %v349 = vld [vmem:[%s347] sm:$0xff]
                  %350 = vst [vmem:[%s348] sm:$0xff] %v349
                  %v351 = vld [vmem:[%s347 + $0x8] sm:$0xff]
                  %352 = vst [vmem:[%s348 + $0x8] sm:$0xff] %v351
                  %v353 = vld [vmem:[%s347 + $0x20] sm:$0xff]
                  %354 = vst [vmem:[%s348 + $0x10] sm:$0xff] %v353
                  %v355 = vld [vmem:[%s347 + $0x28] sm:$0xff]
                  %356 = vst [vmem:[%s348 + $0x18] sm:$0xff] %v355
                  %v357 = vld [vmem:[%s347 + $0x40] sm:$0xff]
                  %358 = vst [vmem:[%s348 + $0x20] sm:$0xff] %v357
                  %v359 = vld [vmem:[%s347 + $0x48] sm:$0xff]
                  %360 = vst [vmem:[%s348 + $0x28] sm:$0xff] %v359
                  %v361 = vld [vmem:[%s347 + $0x60] sm:$0xff]
                  %362 = vst [vmem:[%s348 + $0x30] sm:$0xff] %v361
                  %v363 = vld [vmem:[%s347 + $0x68] sm:$0xff]
                  %364 = vst [vmem:[%s348 + $0x38] sm:$0xff] %v363
                  %v365 = vld [vmem:[%s347 + $0x80] sm:$0xff]
                  %366 = vst [vmem:[%s348 + $0x40] sm:$0xff] %v365
                  %v367 = vld [vmem:[%s347 + $0x88] sm:$0xff]
                  %368 = vst [vmem:[%s348 + $0x48] sm:$0xff] %v367
                  %v369 = vld [vmem:[%s347 + $0xa0] sm:$0xff]
                  %370 = vst [vmem:[%s348 + $0x50] sm:$0xff] %v369
                  %v371 = vld [vmem:[%s347 + $0xa8] sm:$0xff]
                  %372 = vst [vmem:[%s348 + $0x58] sm:$0xff] %v371
                  %v373 = vld [vmem:[%s347 + $0xc0] sm:$0xff]
                  %374 = vst [vmem:[%s348 + $0x60] sm:$0xff] %v373
                  %v375 = vld [vmem:[%s347 + $0xc8] sm:$0xff]
                  %376 = vst [vmem:[%s348 + $0x68] sm:$0xff] %v375
                  %v377 = vld [vmem:[%s347 + $0xe0] sm:$0xff]
                  %378 = vst [vmem:[%s348 + $0x70] sm:$0xff] %v377
                  %v379 = vld [vmem:[%s347 + $0xe8] sm:$0xff]
                  %380 = vst [vmem:[%s348 + $0x78] sm:$0xff] %v379
                $region72: #{contextualized_forward.1} parent=66 // loop_footer
                  %s346 = sadd.s32 1, %s342
                $region73: #{contextualized_forward.1} parent=66 // loop_footer_branch
                  %341 = sbr.rel target = $region69
                $region74: #{contextualized_forward.1} parent=66 // loop_exit
                  _
              $region67: #{contextualized_forward.1} parent=51 // pred_fallthru
                _
              // Predicated region
              $region75: #{contextualized_forward.1} parent=51 // pred_check
                _
              $region76: #{contextualized_forward.1} parent=51 // pred_check_branch
                %382 = sbr.rel target = $region78
              $region77: #{contextualized_forward.1} parent=51 // pred_region
                _
              $region78: #{contextualized_forward.1} parent=51 // pred_fallthru
                _
            $region52: #{contextualized_forward.1} parent=47 // pred_fallthru
              _
            // Predicated region
            $region53: #{contextualized_forward.1} parent=47 // pred_check
              _
            $region54: #{contextualized_forward.1} parent=47 // pred_check_branch
              %297 = sbr.rel target = $region56
            $region55: #{contextualized_forward.1} parent=47 // pred_region
              loop: start=0, step=1, limit=1
              $region57: #{contextualized_forward.1} parent=55 // loop_pre_header
                _
              $region58: #{contextualized_forward.1} parent=55 // loop_header
                %s300 = sphi 0, %s304
                %p301 = scmp.ge.s32.totalorder %s300, 1
                %s305 = sphi %s291, %s291
                %s306 = sphi %s288, %s288
              $region59: #{contextualized_forward.1} parent=55 // loop_header_branch
                %303 = sbr.rel (%p301) target = $region63
              $region60: #{contextualized_forward.1} parent=55 // loop_body
                %v307 = vld [vmem:[%s305] sm:$0xff]
                %308 = vst [vmem:[%s306] sm:$0xff] %v307
                %v309 = vld [vmem:[%s305 + $0x8] sm:$0xff]
                %310 = vst [vmem:[%s306 + $0x8] sm:$0xff] %v309
                %v311 = vld [vmem:[%s305 + $0x20] sm:$0xff]
                %312 = vst [vmem:[%s306 + $0x10] sm:$0xff] %v311
                %v313 = vld [vmem:[%s305 + $0x28] sm:$0xff]
                %314 = vst [vmem:[%s306 + $0x18] sm:$0xff] %v313
                %v315 = vld [vmem:[%s305 + $0x40] sm:$0xff]
                %316 = vst [vmem:[%s306 + $0x20] sm:$0xff] %v315
                %v317 = vld [vmem:[%s305 + $0x48] sm:$0xff]
                %318 = vst [vmem:[%s306 + $0x28] sm:$0xff] %v317
                %v319 = vld [vmem:[%s305 + $0x60] sm:$0xff]
                %320 = vst [vmem:[%s306 + $0x30] sm:$0xff] %v319
                %v321 = vld [vmem:[%s305 + $0x68] sm:$0xff]
                %322 = vst [vmem:[%s306 + $0x38] sm:$0xff] %v321
                %v323 = vld [vmem:[%s305 + $0x80] sm:$0xff]
                %324 = vst [vmem:[%s306 + $0x40] sm:$0xff] %v323
                %v325 = vld [vmem:[%s305 + $0x88] sm:$0xff]
                %326 = vst [vmem:[%s306 + $0x48] sm:$0xff] %v325
                %v327 = vld [vmem:[%s305 + $0xa0] sm:$0xff]
                %328 = vst [vmem:[%s306 + $0x50] sm:$0xff] %v327
                %v329 = vld [vmem:[%s305 + $0xa8] sm:$0xff]
                %330 = vst [vmem:[%s306 + $0x58] sm:$0xff] %v329
                %v331 = vld [vmem:[%s305 + $0xc0] sm:$0xff]
                %332 = vst [vmem:[%s306 + $0x60] sm:$0xff] %v331
                %v333 = vld [vmem:[%s305 + $0xc8] sm:$0xff]
                %334 = vst [vmem:[%s306 + $0x68] sm:$0xff] %v333
                %v335 = vld [vmem:[%s305 + $0xe0] sm:$0xff]
                %336 = vst [vmem:[%s306 + $0x70] sm:$0xff] %v335
                %v337 = vld [vmem:[%s305 + $0xe8] sm:$0xff]
                %338 = vst [vmem:[%s306 + $0x78] sm:$0xff] %v337
              $region61: #{contextualized_forward.1} parent=55 // loop_footer
                %s304 = sadd.s32 1, %s300
              $region62: #{contextualized_forward.1} parent=55 // loop_footer_branch
                %299 = sbr.rel target = $region58
              $region63: #{contextualized_forward.1} parent=55 // loop_exit
                _
            $region56: #{contextualized_forward.1} parent=47 // pred_fallthru
              _
          $region48: #{contextualized_forward.1} parent=43 // pred_fallthru
            _
          %383 = vnop
        $region44: #{contextualized_forward.1} parent=39 // pred_fallthru
          _
        // Predicated region
        $region79: #{contextualized_forward.1} parent=39 // pred_check
          %p384 = pneg %p61
        $region80: #{contextualized_forward.1} parent=39 // pred_check_branch
          %386 = sbr.rel (%p384) target = $region82
        $region81: #{contextualized_forward.1} parent=39 // pred_region
          %s387 = sand.u32 %s51, 1
          %s388 = sand.u32 %s51, 1
          %s389 = smul.addr %s388, 128
          %s390 = scalar_lea.vmem [#allocation7], %s389
          %s391 = smul.u32 2, %s15
          %s392 = smul.addr %s391, 8
          %s393 = scalar_lea.vmem %s1, %s392
          // Predicated region
          $region83: #{contextualized_forward.1} parent=81 // pred_check
            _
          $region84: #{contextualized_forward.1} parent=81 // pred_check_branch
            %395 = sbr.rel (0) target = $region86
          $region85: #{contextualized_forward.1} parent=81 // pred_region
            // Predicated region
            $region87: #{contextualized_forward.1} parent=85 // pred_check
              _
            $region88: #{contextualized_forward.1} parent=85 // pred_check_branch
              %397 = sbr.rel (0) target = $region90
            $region89: #{contextualized_forward.1} parent=85 // pred_region
              // Predicated region
              $region102: #{contextualized_forward.1} parent=89 // pred_check
                _
              $region103: #{contextualized_forward.1} parent=89 // pred_check_branch
                %442 = sbr.rel (0) target = $region105
              $region104: #{contextualized_forward.1} parent=89 // pred_region
                loop: start=0, step=1, limit=1
                $region106: #{contextualized_forward.1} parent=104 // loop_pre_header
                  _
                $region107: #{contextualized_forward.1} parent=104 // loop_header
                  %s444 = sphi 0, %s448
                  %p445 = scmp.ge.s32.totalorder %s444, 1
                  %s449 = sphi %s393, %s393
                  %s450 = sphi %s390, %s390
                $region108: #{contextualized_forward.1} parent=104 // loop_header_branch
                  %447 = sbr.rel (%p445) target = $region112
                $region109: #{contextualized_forward.1} parent=104 // loop_body
                  %v451 = vld [vmem:[%s449] sm:$0xff]
                  %452 = vst [vmem:[%s450] sm:$0xff] %v451
                  %v453 = vld [vmem:[%s449 + $0x8] sm:$0xff]
                  %454 = vst [vmem:[%s450 + $0x8] sm:$0xff] %v453
                  %v455 = vld [vmem:[%s449 + $0x20] sm:$0xff]
                  %456 = vst [vmem:[%s450 + $0x10] sm:$0xff] %v455
                  %v457 = vld [vmem:[%s449 + $0x28] sm:$0xff]
                  %458 = vst [vmem:[%s450 + $0x18] sm:$0xff] %v457
                  %v459 = vld [vmem:[%s449 + $0x40] sm:$0xff]
                  %460 = vst [vmem:[%s450 + $0x20] sm:$0xff] %v459
                  %v461 = vld [vmem:[%s449 + $0x48] sm:$0xff]
                  %462 = vst [vmem:[%s450 + $0x28] sm:$0xff] %v461
                  %v463 = vld [vmem:[%s449 + $0x60] sm:$0xff]
                  %464 = vst [vmem:[%s450 + $0x30] sm:$0xff] %v463
                  %v465 = vld [vmem:[%s449 + $0x68] sm:$0xff]
                  %466 = vst [vmem:[%s450 + $0x38] sm:$0xff] %v465
                  %v467 = vld [vmem:[%s449 + $0x80] sm:$0xff]
                  %468 = vst [vmem:[%s450 + $0x40] sm:$0xff] %v467
                  %v469 = vld [vmem:[%s449 + $0x88] sm:$0xff]
                  %470 = vst [vmem:[%s450 + $0x48] sm:$0xff] %v469
                  %v471 = vld [vmem:[%s449 + $0xa0] sm:$0xff]
                  %472 = vst [vmem:[%s450 + $0x50] sm:$0xff] %v471
                  %v473 = vld [vmem:[%s449 + $0xa8] sm:$0xff]
                  %474 = vst [vmem:[%s450 + $0x58] sm:$0xff] %v473
                  %v475 = vld [vmem:[%s449 + $0xc0] sm:$0xff]
                  %476 = vst [vmem:[%s450 + $0x60] sm:$0xff] %v475
                  %v477 = vld [vmem:[%s449 + $0xc8] sm:$0xff]
                  %478 = vst [vmem:[%s450 + $0x68] sm:$0xff] %v477
                  %v479 = vld [vmem:[%s449 + $0xe0] sm:$0xff]
                  %480 = vst [vmem:[%s450 + $0x70] sm:$0xff] %v479
                  %v481 = vld [vmem:[%s449 + $0xe8] sm:$0xff]
                  %482 = vst [vmem:[%s450 + $0x78] sm:$0xff] %v481
                $region110: #{contextualized_forward.1} parent=104 // loop_footer
                  %s448 = sadd.s32 1, %s444
                $region111: #{contextualized_forward.1} parent=104 // loop_footer_branch
                  %443 = sbr.rel target = $region107
                $region112: #{contextualized_forward.1} parent=104 // loop_exit
                  _
              $region105: #{contextualized_forward.1} parent=89 // pred_fallthru
                _
              // Predicated region
              $region113: #{contextualized_forward.1} parent=89 // pred_check
                _
              $region114: #{contextualized_forward.1} parent=89 // pred_check_branch
                %484 = sbr.rel target = $region116
              $region115: #{contextualized_forward.1} parent=89 // pred_region
                _
              $region116: #{contextualized_forward.1} parent=89 // pred_fallthru
                _
            $region90: #{contextualized_forward.1} parent=85 // pred_fallthru
              _
            // Predicated region
            $region91: #{contextualized_forward.1} parent=85 // pred_check
              _
            $region92: #{contextualized_forward.1} parent=85 // pred_check_branch
              %399 = sbr.rel target = $region94
            $region93: #{contextualized_forward.1} parent=85 // pred_region
              loop: start=0, step=1, limit=1
              $region95: #{contextualized_forward.1} parent=93 // loop_pre_header
                _
              $region96: #{contextualized_forward.1} parent=93 // loop_header
                %s402 = sphi 0, %s406
                %p403 = scmp.ge.s32.totalorder %s402, 1
                %s407 = sphi %s393, %s393
                %s408 = sphi %s390, %s390
              $region97: #{contextualized_forward.1} parent=93 // loop_header_branch
                %405 = sbr.rel (%p403) target = $region101
              $region98: #{contextualized_forward.1} parent=93 // loop_body
                %v409 = vld [vmem:[%s407] sm:$0xff]
                %410 = vst [vmem:[%s408] sm:$0xff] %v409
                %v411 = vld [vmem:[%s407 + $0x8] sm:$0xff]
                %412 = vst [vmem:[%s408 + $0x8] sm:$0xff] %v411
                %v413 = vld [vmem:[%s407 + $0x20] sm:$0xff]
                %414 = vst [vmem:[%s408 + $0x10] sm:$0xff] %v413
                %v415 = vld [vmem:[%s407 + $0x28] sm:$0xff]
                %416 = vst [vmem:[%s408 + $0x18] sm:$0xff] %v415
                %v417 = vld [vmem:[%s407 + $0x40] sm:$0xff]
                %418 = vst [vmem:[%s408 + $0x20] sm:$0xff] %v417
                %v419 = vld [vmem:[%s407 + $0x48] sm:$0xff]
                %420 = vst [vmem:[%s408 + $0x28] sm:$0xff] %v419
                %v421 = vld [vmem:[%s407 + $0x60] sm:$0xff]
                %422 = vst [vmem:[%s408 + $0x30] sm:$0xff] %v421
                %v423 = vld [vmem:[%s407 + $0x68] sm:$0xff]
                %424 = vst [vmem:[%s408 + $0x38] sm:$0xff] %v423
                %v425 = vld [vmem:[%s407 + $0x80] sm:$0xff]
                %426 = vst [vmem:[%s408 + $0x40] sm:$0xff] %v425
                %v427 = vld [vmem:[%s407 + $0x88] sm:$0xff]
                %428 = vst [vmem:[%s408 + $0x48] sm:$0xff] %v427
                %v429 = vld [vmem:[%s407 + $0xa0] sm:$0xff]
                %430 = vst [vmem:[%s408 + $0x50] sm:$0xff] %v429
                %v431 = vld [vmem:[%s407 + $0xa8] sm:$0xff]
                %432 = vst [vmem:[%s408 + $0x58] sm:$0xff] %v431
                %v433 = vld [vmem:[%s407 + $0xc0] sm:$0xff]
                %434 = vst [vmem:[%s408 + $0x60] sm:$0xff] %v433
                %v435 = vld [vmem:[%s407 + $0xc8] sm:$0xff]
                %436 = vst [vmem:[%s408 + $0x68] sm:$0xff] %v435
                %v437 = vld [vmem:[%s407 + $0xe0] sm:$0xff]
                %438 = vst [vmem:[%s408 + $0x70] sm:$0xff] %v437
                %v439 = vld [vmem:[%s407 + $0xe8] sm:$0xff]
                %440 = vst [vmem:[%s408 + $0x78] sm:$0xff] %v439
              $region99: #{contextualized_forward.1} parent=93 // loop_footer
                %s406 = sadd.s32 1, %s402
              $region100: #{contextualized_forward.1} parent=93 // loop_footer_branch
                %401 = sbr.rel target = $region96
              $region101: #{contextualized_forward.1} parent=93 // loop_exit
                _
            $region94: #{contextualized_forward.1} parent=85 // pred_fallthru
              _
          $region86: #{contextualized_forward.1} parent=81 // pred_fallthru
            _
          %485 = vnop
        $region82: #{contextualized_forward.1} parent=39 // pred_fallthru
          _
        // Predicated region
        $region117: #{contextualized_forward.1} parent=39 // pred_check
          %p486 = pneg %p87
        $region118: #{contextualized_forward.1} parent=39 // pred_check_branch
          %488 = sbr.rel (%p486) target = $region120
        $region119: #{contextualized_forward.1} parent=39 // pred_region
          %s489 = sand.u32 %s77, 1
          %s490 = sand.u32 %s77, 1
          %s491 = smul.addr %s490, 128
          %s492 = scalar_lea.vmem [#allocation8], %s491
          %s493 = smul.u32 2, %s15
          %s494 = smul.addr %s493, 8
          %s495 = scalar_lea.vmem %s2, %s494
          // Predicated region
          $region121: #{contextualized_forward.1} parent=119 // pred_check
            _
          $region122: #{contextualized_forward.1} parent=119 // pred_check_branch
            %497 = sbr.rel (0) target = $region124
          $region123: #{contextualized_forward.1} parent=119 // pred_region
            // Predicated region
            $region125: #{contextualized_forward.1} parent=123 // pred_check
              _
            $region126: #{contextualized_forward.1} parent=123 // pred_check_branch
              %499 = sbr.rel (0) target = $region128
            $region127: #{contextualized_forward.1} parent=123 // pred_region
              // Predicated region
              $region140: #{contextualized_forward.1} parent=127 // pred_check
                _
              $region141: #{contextualized_forward.1} parent=127 // pred_check_branch
                %544 = sbr.rel (0) target = $region143
              $region142: #{contextualized_forward.1} parent=127 // pred_region
                loop: start=0, step=1, limit=1
                $region144: #{contextualized_forward.1} parent=142 // loop_pre_header
                  _
                $region145: #{contextualized_forward.1} parent=142 // loop_header
                  %s546 = sphi 0, %s550
                  %p547 = scmp.ge.s32.totalorder %s546, 1
                  %s551 = sphi %s495, %s495
                  %s552 = sphi %s492, %s492
                $region146: #{contextualized_forward.1} parent=142 // loop_header_branch
                  %549 = sbr.rel (%p547) target = $region150
                $region147: #{contextualized_forward.1} parent=142 // loop_body
                  %v553 = vld [vmem:[%s551] sm:$0xff]
                  %554 = vst [vmem:[%s552] sm:$0xff] %v553
                  %v555 = vld [vmem:[%s551 + $0x8] sm:$0xff]
                  %556 = vst [vmem:[%s552 + $0x8] sm:$0xff] %v555
                  %v557 = vld [vmem:[%s551 + $0x20] sm:$0xff]
                  %558 = vst [vmem:[%s552 + $0x10] sm:$0xff] %v557
                  %v559 = vld [vmem:[%s551 + $0x28] sm:$0xff]
                  %560 = vst [vmem:[%s552 + $0x18] sm:$0xff] %v559
                  %v561 = vld [vmem:[%s551 + $0x40] sm:$0xff]
                  %562 = vst [vmem:[%s552 + $0x20] sm:$0xff] %v561
                  %v563 = vld [vmem:[%s551 + $0x48] sm:$0xff]
                  %564 = vst [vmem:[%s552 + $0x28] sm:$0xff] %v563
                  %v565 = vld [vmem:[%s551 + $0x60] sm:$0xff]
                  %566 = vst [vmem:[%s552 + $0x30] sm:$0xff] %v565
                  %v567 = vld [vmem:[%s551 + $0x68] sm:$0xff]
                  %568 = vst [vmem:[%s552 + $0x38] sm:$0xff] %v567
                  %v569 = vld [vmem:[%s551 + $0x80] sm:$0xff]
                  %570 = vst [vmem:[%s552 + $0x40] sm:$0xff] %v569
                  %v571 = vld [vmem:[%s551 + $0x88] sm:$0xff]
                  %572 = vst [vmem:[%s552 + $0x48] sm:$0xff] %v571
                  %v573 = vld [vmem:[%s551 + $0xa0] sm:$0xff]
                  %574 = vst [vmem:[%s552 + $0x50] sm:$0xff] %v573
                  %v575 = vld [vmem:[%s551 + $0xa8] sm:$0xff]
                  %576 = vst [vmem:[%s552 + $0x58] sm:$0xff] %v575
                  %v577 = vld [vmem:[%s551 + $0xc0] sm:$0xff]
                  %578 = vst [vmem:[%s552 + $0x60] sm:$0xff] %v577
                  %v579 = vld [vmem:[%s551 + $0xc8] sm:$0xff]
                  %580 = vst [vmem:[%s552 + $0x68] sm:$0xff] %v579
                  %v581 = vld [vmem:[%s551 + $0xe0] sm:$0xff]
                  %582 = vst [vmem:[%s552 + $0x70] sm:$0xff] %v581
                  %v583 = vld [vmem:[%s551 + $0xe8] sm:$0xff]
                  %584 = vst [vmem:[%s552 + $0x78] sm:$0xff] %v583
                $region148: #{contextualized_forward.1} parent=142 // loop_footer
                  %s550 = sadd.s32 1, %s546
                $region149: #{contextualized_forward.1} parent=142 // loop_footer_branch
                  %545 = sbr.rel target = $region145
                $region150: #{contextualized_forward.1} parent=142 // loop_exit
                  _
              $region143: #{contextualized_forward.1} parent=127 // pred_fallthru
                _
              // Predicated region
              $region151: #{contextualized_forward.1} parent=127 // pred_check
                _
              $region152: #{contextualized_forward.1} parent=127 // pred_check_branch
                %586 = sbr.rel target = $region154
              $region153: #{contextualized_forward.1} parent=127 // pred_region
                _
              $region154: #{contextualized_forward.1} parent=127 // pred_fallthru
                _
            $region128: #{contextualized_forward.1} parent=123 // pred_fallthru
              _
            // Predicated region
            $region129: #{contextualized_forward.1} parent=123 // pred_check
              _
            $region130: #{contextualized_forward.1} parent=123 // pred_check_branch
              %501 = sbr.rel target = $region132
            $region131: #{contextualized_forward.1} parent=123 // pred_region
              loop: start=0, step=1, limit=1
              $region133: #{contextualized_forward.1} parent=131 // loop_pre_header
                _
              $region134: #{contextualized_forward.1} parent=131 // loop_header
                %s504 = sphi 0, %s508
                %p505 = scmp.ge.s32.totalorder %s504, 1
                %s509 = sphi %s495, %s495
                %s510 = sphi %s492, %s492
              $region135: #{contextualized_forward.1} parent=131 // loop_header_branch
                %507 = sbr.rel (%p505) target = $region139
              $region136: #{contextualized_forward.1} parent=131 // loop_body
                %v511 = vld [vmem:[%s509] sm:$0xff]
                %512 = vst [vmem:[%s510] sm:$0xff] %v511
                %v513 = vld [vmem:[%s509 + $0x8] sm:$0xff]
                %514 = vst [vmem:[%s510 + $0x8] sm:$0xff] %v513
                %v515 = vld [vmem:[%s509 + $0x20] sm:$0xff]
                %516 = vst [vmem:[%s510 + $0x10] sm:$0xff] %v515
                %v517 = vld [vmem:[%s509 + $0x28] sm:$0xff]
                %518 = vst [vmem:[%s510 + $0x18] sm:$0xff] %v517
                %v519 = vld [vmem:[%s509 + $0x40] sm:$0xff]
                %520 = vst [vmem:[%s510 + $0x20] sm:$0xff] %v519
                %v521 = vld [vmem:[%s509 + $0x48] sm:$0xff]
                %522 = vst [vmem:[%s510 + $0x28] sm:$0xff] %v521
                %v523 = vld [vmem:[%s509 + $0x60] sm:$0xff]
                %524 = vst [vmem:[%s510 + $0x30] sm:$0xff] %v523
                %v525 = vld [vmem:[%s509 + $0x68] sm:$0xff]
                %526 = vst [vmem:[%s510 + $0x38] sm:$0xff] %v525
                %v527 = vld [vmem:[%s509 + $0x80] sm:$0xff]
                %528 = vst [vmem:[%s510 + $0x40] sm:$0xff] %v527
                %v529 = vld [vmem:[%s509 + $0x88] sm:$0xff]
                %530 = vst [vmem:[%s510 + $0x48] sm:$0xff] %v529
                %v531 = vld [vmem:[%s509 + $0xa0] sm:$0xff]
                %532 = vst [vmem:[%s510 + $0x50] sm:$0xff] %v531
                %v533 = vld [vmem:[%s509 + $0xa8] sm:$0xff]
                %534 = vst [vmem:[%s510 + $0x58] sm:$0xff] %v533
                %v535 = vld [vmem:[%s509 + $0xc0] sm:$0xff]
                %536 = vst [vmem:[%s510 + $0x60] sm:$0xff] %v535
                %v537 = vld [vmem:[%s509 + $0xc8] sm:$0xff]
                %538 = vst [vmem:[%s510 + $0x68] sm:$0xff] %v537
                %v539 = vld [vmem:[%s509 + $0xe0] sm:$0xff]
                %540 = vst [vmem:[%s510 + $0x70] sm:$0xff] %v539
                %v541 = vld [vmem:[%s509 + $0xe8] sm:$0xff]
                %542 = vst [vmem:[%s510 + $0x78] sm:$0xff] %v541
              $region137: #{contextualized_forward.1} parent=131 // loop_footer
                %s508 = sadd.s32 1, %s504
              $region138: #{contextualized_forward.1} parent=131 // loop_footer_branch
                %503 = sbr.rel target = $region134
              $region139: #{contextualized_forward.1} parent=131 // loop_exit
                _
            $region132: #{contextualized_forward.1} parent=123 // pred_fallthru
              _
          $region124: #{contextualized_forward.1} parent=119 // pred_fallthru
            _
          %587 = vnop
        $region120: #{contextualized_forward.1} parent=39 // pred_fallthru
          _
      $region40: #{contextualized_forward.1} parent=5 // pred_fallthru
        _
      %p588 = scmp.le.s32.totalorder 1, %s15
      %p589 = scmp.lt.s32.totalorder %s15, 3
      %p590 = pnand %p588, %p589
      %p591 = pneg %p590
      // Predicated region
      $region155: #{contextualized_forward.1} parent=5 // pred_check
        _
      $region156: #{contextualized_forward.1} parent=5 // pred_check_branch
        %593 = sbr.rel (%p590) target = $region158
      $region157: #{contextualized_forward.1} parent=5 // pred_region
        %s594 = ssub.s32 %s15, 1
        %s595 = sand.u32 %s28, 1
        %s596 = sand.u32 %s28, 1
        %s597 = smul.addr %s596, 128
        %s598 = scalar_lea.vmem [#allocation6], %s597
        // Predicated region
        $region159: #{contextualized_forward.1} parent=157 // pred_check
          %p599 = pneg %p41
        $region160: #{contextualized_forward.1} parent=157 // pred_check_branch
          %601 = sbr.rel (%p599) target = $region162
        $region161: #{contextualized_forward.1} parent=157 // pred_region
          _
        $region162: #{contextualized_forward.1} parent=157 // pred_fallthru
          _
        %s602 = sand.u32 %s54, 1
        %s603 = sand.u32 %s54, 1
        %s604 = smul.addr %s603, 128
        %s605 = scalar_lea.vmem [#allocation7], %s604
        // Predicated region
        $region163: #{contextualized_forward.1} parent=157 // pred_check
          %p606 = pneg %p67
        $region164: #{contextualized_forward.1} parent=157 // pred_check_branch
          %608 = sbr.rel (%p606) target = $region166
        $region165: #{contextualized_forward.1} parent=157 // pred_region
          _
        $region166: #{contextualized_forward.1} parent=157 // pred_fallthru
          _
        %s609 = sand.u32 %s80, 1
        %s610 = sand.u32 %s80, 1
        %s611 = smul.addr %s610, 128
        %s612 = scalar_lea.vmem [#allocation8], %s611
        // Predicated region
        $region167: #{contextualized_forward.1} parent=157 // pred_check
          %p613 = pneg %p93
        $region168: #{contextualized_forward.1} parent=157 // pred_check_branch
          %615 = sbr.rel (%p613) target = $region170
        $region169: #{contextualized_forward.1} parent=157 // pred_region
          _
        $region170: #{contextualized_forward.1} parent=157 // pred_fallthru
          _
        %s616 = sand.u32 %s28, 1
        %s617 = sand.u32 %s28, 1
        %s618 = smul.addr %s617, 128
        %s619 = scalar_lea.vmem [#allocation6], %s618
        %p620 = pneg %p41
        %p621 = pneg %p38
        %s622 = sand.u32 %s54, 1
        %s623 = sand.u32 %s54, 1
        %s624 = smul.addr %s623, 128
        %s625 = scalar_lea.vmem [#allocation7], %s624
        %p626 = pneg %p67
        %p627 = pneg %p64
        %s628 = sand.u32 %s80, 1
        %s629 = sand.u32 %s80, 1
        %s630 = smul.addr %s629, 128
        %s631 = scalar_lea.vmem [#allocation8], %s630
        %p632 = pneg %p93
        %p633 = pneg %p90
        %p634 = pneg %p114
        %p635 = pneg %p111
        %p636 = pneg %p135
        %p637 = pneg %p132
        %p638 = pneg %p156
        %p639 = pneg %p153
        %p640 = pneg %p177
        %p641 = pneg %p174
        %p642 = pneg %p198
        %p643 = pneg %p195
        %p644 = pneg %p219
        %p645 = pneg %p216
        %p646 = pneg %p245
        %p647 = pneg %p242
        %s648 = smul.u32 2, %s20
        %p649 = scmp.lt.s32.totalorder %s648, 3
        %s650 = scalar_select %p649, %s648, 3
        %s651 = smul.addr %s650, 8
        %s652 = scalar_lea.vmem %s9, %s651
        %s653 = smul.u32 2, %s20
        %s654 = smul.u32 2, %s20
        %s655 = smul.u32 2, %s20
        %s656 = smul.u32 2, %s20
        %p657 = scmp.lt.s32.totalorder %s656, 3
        %s658 = scalar_select %p657, %s656, 3
        %s659 = smul.addr %s658, 8
        %s660 = scalar_lea.vmem %s9, %s659
        %s661 = smul.u32 2, %s20
        %v663 = vld [vmem:[%s598] sm:$0xff]
        %v664 = vld [vmem:[%s598 + $0x8] sm:$0xff]
        %v665 = vld [vmem:[%s598 + $0x10] sm:$0xff]
        %v666 = vld [vmem:[%s598 + $0x18] sm:$0xff]
        %v667 = vld [vmem:[%s598 + $0x20] sm:$0xff]
        %v668 = vld [vmem:[%s598 + $0x28] sm:$0xff]
        %v669 = vld [vmem:[%s598 + $0x30] sm:$0xff]
        %v670 = vld [vmem:[%s598 + $0x38] sm:$0xff]
        %v671 = vld [vmem:[%s598 + $0x40] sm:$0xff]
        %v672 = vld [vmem:[%s598 + $0x48] sm:$0xff]
        %v673 = vld [vmem:[%s598 + $0x50] sm:$0xff]
        %v674 = vld [vmem:[%s598 + $0x58] sm:$0xff]
        %v675 = vld [vmem:[%s598 + $0x60] sm:$0xff]
        %v676 = vld [vmem:[%s598 + $0x68] sm:$0xff]
        %v677 = vld [vmem:[%s598 + $0x70] sm:$0xff]
        %v678 = vld [vmem:[%s598 + $0x78] sm:$0xff]
        %v679 = vpack.c.bf16 %v664, %v663
        %v680 = vpack.c.bf16 %v666, %v665
        %v681 = vpack.c.bf16 %v668, %v667
        %v682 = vpack.c.bf16 %v670, %v669
        %v683 = vpack.c.bf16 %v672, %v671
        %v684 = vpack.c.bf16 %v674, %v673
        %v685 = vpack.c.bf16 %v676, %v675
        %v686 = vpack.c.bf16 %v678, %v677
        %v687 = vld [vmem:[%s3] sm:$0xff]
        %v688 = vld [vmem:[%s3 + $0x8] sm:$0xff]
        %v689 = vld [vmem:[%s3 + $0x10] sm:$0xff]
        %v690 = vld [vmem:[%s3 + $0x18] sm:$0xff]
        %v691 = vld [vmem:[%s5] sm:$0x3]
        %v693 = vlaneseq
        %v694 = vshrl.u32 %v693, 7
        %v695 = vsub.s32 0, %v694
        %v696 = vrot.slane %v691, %v695
        %v697 = vlaneseq
        %v698 = vshrl.u32 %v697, 7
        %v699 = vsub.s32 1, %v698
        %v700 = vrot.slane %v691, %v699
        %v707 = vunpack.c.l.b16 %v687
        %v708 = vunpack.c.h.b16 %v687
        %v709 = vunpack.c.l.b16 %v688
        %v710 = vunpack.c.h.b16 %v688
        %v711 = vunpack.c.l.b16 %v689
        %v712 = vunpack.c.h.b16 %v689
        %v713 = vunpack.c.l.b16 %v690
        %v714 = vunpack.c.h.b16 %v690
        %v715 = vpack.c.b16 %v709, %v707
        %v716 = vpack.c.b16 %v710, %v708
        %v717 = vpack.c.b16 %v713, %v711
        %v718 = vpack.c.b16 %v714, %v712
        %vm723 = vcmask 261120
        %v725 = vsel %vm723, %v679, 0
        %v728 = vsel %vm723, %v680, 0
        %v731 = vsel %vm723, %v681, 0
        %v734 = vsel %vm723, %v682, 0
        %v737 = vsel %vm723, %v683, 0
        %v740 = vsel %vm723, %v684, 0
        %v743 = vsel %vm723, %v685, 0
        %v746 = vsel %vm723, %v686, 0
        %748 = vmatprep.subr.bf16.mxu0 %v716
        %749 = vmatpush1.bf16.msra.mxu0 %v715
        %750 = vmatprep.subr.bf16.mxu0 %v718
        %751 = vmatpush1.bf16.msra.mxu0 %v717
        %752 = vmatprep.subr.bf16.mxu0 0
        %753 = vmatpush1.bf16.msra.mxu0 0
        %754 = vmatprep.subr.bf16.mxu0 0
        %755 = vmatpush1.bf16.msra.mxu0 0
        %756 = vmatprep.subr.bf16.mxu0 0
        %757 = vmatpush1.bf16.msra.mxu0 0
        %758 = vmatprep.subr.bf16.mxu0 0
        %759 = vmatpush1.bf16.msra.mxu0 0
        %760 = vmatprep.subr.bf16.mxu0 0
        %761 = vmatpush1.bf16.msra.mxu0 0
        %762 = vmatprep.subr.bf16.mxu0 0
        %763 = vmatpush1.bf16.msra.mxu0 0
        %764 = vmatprep.subr.bf16.mxu0 0
        %765 = vmatpush1.bf16.msra.mxu0 0
        %766 = vmatprep.subr.bf16.mxu0 0
        %767 = vmatpush1.bf16.msra.mxu0 0
        %768 = vmatprep.subr.bf16.mxu0 0
        %769 = vmatpush1.bf16.msra.mxu0 0
        %770 = vmatprep.subr.bf16.mxu0 0
        %771 = vmatpush1.bf16.msra.mxu0 0
        %772 = vmatprep.subr.bf16.mxu0 0
        %773 = vmatpush1.bf16.msra.mxu0 0
        %774 = vmatprep.subr.bf16.mxu0 0
        %775 = vmatpush1.bf16.msra.mxu0 0
        %776 = vmatprep.subr.bf16.mxu0 0
        %777 = vmatpush1.bf16.msra.mxu0 0
        %778 = vmatprep.subr.bf16.mxu0 0
        %779 = vmatpush1.bf16.msra.mxu0 0
        %780 = vmatprep.mubr.bf16.mxu0 0
        %781 = vmatmul.mubr.bf16.gmra.mrb[0].mxu0 %v725
        %v782 = vpop.f32.mrb[0].mxu0
        %v783 = vadd.f32 %v696, %v782
        %v784 = vpop.f32.mrb[0].mxu0
        %v785 = vadd.f32 %v700, %v784
        %v786 = vpop.f32.mrb[0].mxu0
        %v787 = vadd.f32 %v696, %v786
        %v788 = vpop.f32.mrb[0].mxu0
        %v789 = vadd.f32 %v700, %v788
        %790 = vmatprep.mubr.bf16.mxu0 0
        %791 = vmatmul.mubr.bf16.gmra.mrb[0].mxu0 %v728
        %v792 = vpop.f32.mrb[0].mxu0
        %v793 = vadd.f32 %v696, %v792
        %v794 = vpop.f32.mrb[0].mxu0
        %v795 = vadd.f32 %v700, %v794
        %v796 = vpop.f32.mrb[0].mxu0
        %v797 = vadd.f32 %v696, %v796
        %v798 = vpop.f32.mrb[0].mxu0
        %v799 = vadd.f32 %v700, %v798
        %800 = vmatprep.mubr.bf16.mxu0 0
        %801 = vmatmul.mubr.bf16.gmra.mrb[0].mxu0 %v731
        %v802 = vpop.f32.mrb[0].mxu0
        %v803 = vadd.f32 %v696, %v802
        %v804 = vpop.f32.mrb[0].mxu0
        %v805 = vadd.f32 %v700, %v804
        %v806 = vpop.f32.mrb[0].mxu0
        %v807 = vadd.f32 %v696, %v806
        %v808 = vpop.f32.mrb[0].mxu0
        %v809 = vadd.f32 %v700, %v808
        %810 = vmatprep.mubr.bf16.mxu0 0
        %811 = vmatmul.mubr.bf16.gmra.mrb[0].mxu0 %v734
        %v812 = vpop.f32.mrb[0].mxu0
        %v813 = vadd.f32 %v696, %v812
        %v814 = vpop.f32.mrb[0].mxu0
        %v815 = vadd.f32 %v700, %v814
        %v816 = vpop.f32.mrb[0].mxu0
        %v817 = vadd.f32 %v696, %v816
        %v818 = vpop.f32.mrb[0].mxu0
        %v819 = vadd.f32 %v700, %v818
        %820 = vmatprep.mubr.bf16.mxu0 0
        %821 = vmatmul.mubr.bf16.gmra.mrb[0].mxu0 %v737
        %v822 = vpop.f32.mrb[0].mxu0
        %v823 = vadd.f32 %v696, %v822
        %v824 = vpop.f32.mrb[0].mxu0
        %v825 = vadd.f32 %v700, %v824
        %v826 = vpop.f32.mrb[0].mxu0
        %v827 = vadd.f32 %v696, %v826
        %v828 = vpop.f32.mrb[0].mxu0
        %v829 = vadd.f32 %v700, %v828
        %830 = vmatprep.mubr.bf16.mxu0 0
        %831 = vmatmul.mubr.bf16.gmra.mrb[0].mxu0 %v740
        %v832 = vpop.f32.mrb[0].mxu0
        %v833 = vadd.f32 %v696, %v832
        %v834 = vpop.f32.mrb[0].mxu0
        %v835 = vadd.f32 %v700, %v834
        %v836 = vpop.f32.mrb[0].mxu0
        %v837 = vadd.f32 %v696, %v836
        %v838 = vpop.f32.mrb[0].mxu0
        %v839 = vadd.f32 %v700, %v838
        %840 = vmatprep.mubr.bf16.mxu0 0
        %841 = vmatmul.mubr.bf16.gmra.mrb[0].mxu0 %v743
        %v842 = vpop.f32.mrb[0].mxu0
        %v843 = vadd.f32 %v696, %v842
        %v844 = vpop.f32.mrb[0].mxu0
        %v845 = vadd.f32 %v700, %v844
        %v846 = vpop.f32.mrb[0].mxu0
        %v847 = vadd.f32 %v696, %v846
        %v848 = vpop.f32.mrb[0].mxu0
        %v849 = vadd.f32 %v700, %v848
        %850 = vmatprep.mubr.bf16.mxu0 0
        %851 = vmatmul.mubr.bf16.gmra.mrb[0].mxu0 %v746
        %v852 = vpop.f32.mrb[0].mxu0
        %v853 = vadd.f32 %v696, %v852
        %v854 = vpop.f32.mrb[0].mxu0
        %v855 = vadd.f32 %v700, %v854
        %v856 = vpop.f32.mrb[0].mxu0
        %v857 = vadd.f32 %v696, %v856
        %v858 = vpop.f32.mrb[0].mxu0
        %v859 = vadd.f32 %v700, %v858
        %860 = vdwg.mxu0
        %861 = vst [vmem:[#allocation2] sm:$0xff] %v783
        %862 = vst [vmem:[#allocation2 + $0x8] sm:$0xff] %v787
        %863 = vst [vmem:[#allocation2 + $0x10] sm:$0xff] %v793
        %864 = vst [vmem:[#allocation2 + $0x18] sm:$0xff] %v797
        %865 = vst [vmem:[#allocation2 + $0x20] sm:$0xff] %v803
        %866 = vst [vmem:[#allocation2 + $0x28] sm:$0xff] %v807
        %867 = vst [vmem:[#allocation2 + $0x30] sm:$0xff] %v813
        %868 = vst [vmem:[#allocation2 + $0x38] sm:$0xff] %v817
        %869 = vst [vmem:[#allocation2 + $0x40] sm:$0xff] %v823
        %870 = vst [vmem:[#allocation2 + $0x48] sm:$0xff] %v827
        %871 = vst [vmem:[#allocation2 + $0x50] sm:$0xff] %v833
        %872 = vst [vmem:[#allocation2 + $0x58] sm:$0xff] %v837
        %873 = vst [vmem:[#allocation2 + $0x60] sm:$0xff] %v843
        %874 = vst [vmem:[#allocation2 + $0x68] sm:$0xff] %v847
        %875 = vst [vmem:[#allocation2 + $0x70] sm:$0xff] %v853
        %876 = vst [vmem:[#allocation2 + $0x78] sm:$0xff] %v857
        %877 = vst [vmem:[#allocation3] sm:$0xff] %v785
        %878 = vst [vmem:[#allocation3 + $0x8] sm:$0xff] %v789
        %879 = vst [vmem:[#allocation3 + $0x10] sm:$0xff] %v795
        %880 = vst [vmem:[#allocation3 + $0x18] sm:$0xff] %v799
        %881 = vst [vmem:[#allocation3 + $0x20] sm:$0xff] %v805
        %882 = vst [vmem:[#allocation3 + $0x28] sm:$0xff] %v809
        %883 = vst [vmem:[#allocation3 + $0x30] sm:$0xff] %v815
        %884 = vst [vmem:[#allocation3 + $0x38] sm:$0xff] %v819
        %885 = vst [vmem:[#allocation3 + $0x40] sm:$0xff] %v825
        %886 = vst [vmem:[#allocation3 + $0x48] sm:$0xff] %v829
        %887 = vst [vmem:[#allocation3 + $0x50] sm:$0xff] %v835
        %888 = vst [vmem:[#allocation3 + $0x58] sm:$0xff] %v839
        %889 = vst [vmem:[#allocation3 + $0x60] sm:$0xff] %v845
        %890 = vst [vmem:[#allocation3 + $0x68] sm:$0xff] %v849
        %891 = vst [vmem:[#allocation3 + $0x70] sm:$0xff] %v855
        %892 = vst [vmem:[#allocation3 + $0x78] sm:$0xff] %v859
        %v893 = vld [vmem:[%s4] sm:$0xff]
        %v894 = vld [vmem:[%s4 + $0x8] sm:$0xff]
        %v895 = vld [vmem:[%s4 + $0x10] sm:$0xff]
        %v896 = vld [vmem:[%s4 + $0x18] sm:$0xff]
        %v897 = vld [vmem:[%s4 + $0x20] sm:$0xff]
        %v898 = vld [vmem:[%s4 + $0x28] sm:$0xff]
        %v899 = vld [vmem:[%s4 + $0x30] sm:$0xff]
        %v900 = vld [vmem:[%s4 + $0x38] sm:$0xff]
        %v901 = vpack.c.bf16 0.0, 0.0
        %v910 = vunpack.c.l.b16 %v893
        %v911 = vunpack.c.h.b16 %v893
        %v912 = vunpack.c.l.b16 %v894
        %v913 = vunpack.c.h.b16 %v894
        %v914 = vunpack.c.l.b16 %v895
        %v915 = vunpack.c.h.b16 %v895
        %v916 = vunpack.c.l.b16 %v896
        %v917 = vunpack.c.h.b16 %v896
        %v918 = vunpack.c.l.b16 %v897
        %v919 = vunpack.c.h.b16 %v897
        %v920 = vunpack.c.l.b16 %v898
        %v921 = vunpack.c.h.b16 %v898
        %v922 = vunpack.c.l.b16 %v899
        %v923 = vunpack.c.h.b16 %v899
        %v924 = vunpack.c.l.b16 %v900
        %v925 = vunpack.c.h.b16 %v900
        %v926 = vpack.c.b16 %v912, %v910
        %v927 = vpack.c.b16 %v913, %v911
        %v928 = vpack.c.b16 %v916, %v914
        %v929 = vpack.c.b16 %v917, %v915
        %v930 = vpack.c.b16 %v920, %v918
        %v931 = vpack.c.b16 %v921, %v919
        %v932 = vpack.c.b16 %v924, %v922
        %v933 = vpack.c.b16 %v925, %v923
        %vm942 = vcmask 523264
        %v944 = vsel %vm942, %v901, 0
        %946 = vmatprep.subr.bf16.mxu0 %v927
        %947 = vmatpush1.bf16.msra.mxu0 %v926
        %948 = vmatprep.subr.bf16.mxu0 %v929
        %949 = vmatpush1.bf16.msra.mxu0 %v928
        %950 = vmatprep.subr.bf16.mxu0 %v931
        %951 = vmatpush1.bf16.msra.mxu0 %v930
        %952 = vmatprep.subr.bf16.mxu0 %v933
        %953 = vmatpush1.bf16.msra.mxu0 %v932
        %954 = vmatprep.subr.bf16.mxu0 0
        %955 = vmatpush1.bf16.msra.mxu0 0
        %956 = vmatprep.subr.bf16.mxu0 0
        %957 = vmatpush1.bf16.msra.mxu0 0
        %958 = vmatprep.subr.bf16.mxu0 0
        %959 = vmatpush1.bf16.msra.mxu0 0
        %960 = vmatprep.subr.bf16.mxu0 0
        %961 = vmatpush1.bf16.msra.mxu0 0
        %962 = vmatprep.subr.bf16.mxu0 0
        %963 = vmatpush1.bf16.msra.mxu0 0
        %964 = vmatprep.subr.bf16.mxu0 0
        %965 = vmatpush1.bf16.msra.mxu0 0
        %966 = vmatprep.subr.bf16.mxu0 0
        %967 = vmatpush1.bf16.msra.mxu0 0
        %968 = vmatprep.subr.bf16.mxu0 0
        %969 = vmatpush1.bf16.msra.mxu0 0
        %970 = vmatprep.subr.bf16.mxu0 0
        %971 = vmatpush1.bf16.msra.mxu0 0
        %972 = vmatprep.subr.bf16.mxu0 0
        %973 = vmatpush1.bf16.msra.mxu0 0
        %974 = vmatprep.subr.bf16.mxu0 0
        %975 = vmatpush1.bf16.msra.mxu0 0
        %976 = vmatprep.subr.bf16.mxu0 0
        %977 = vmatpush1.bf16.msra.mxu0 0
        %978 = vmatprep.mubr.bf16.mxu0 0
        %979 = vmatmul.mubr.bf16.gmra.mrb[0].mxu0 %v944
        %v980 = vpop.f32.mrb[0].mxu0
        %v981 = vadd.f32 0.0, %v980
        %v982 = vpop.f32.mrb[0].mxu0
        %v983 = vadd.f32 0.0, %v982
        %v984 = vpop.f32.mrb[0].mxu0
        %v985 = vadd.f32 0.0, %v984
        %v986 = vpop.f32.mrb[0].mxu0
        %v987 = vadd.f32 0.0, %v986
        %988 = vdwg.mxu0
        %v989 = vld [vmem:[#allocation2] sm:$0xff]
        %v990 = vld [vmem:[#allocation2 + $0x8] sm:$0xff]
        %v991 = vadd.f32 %v989, %v981
        %v992 = vadd.f32 %v990, %v985
        %s993 = scalar_lea.vmem [#allocation3], 112
        %v994 = vld [vmem:[%s993] sm:$0xff]
        %v995 = vld [vmem:[%s993 + $0x8] sm:$0xff]
        %v996 = vadd.f32 %v994, %v983
        %v997 = vadd.f32 %v995, %v987
        %v998 = vld [vmem:[%s605] sm:$0xff]
        %v999 = vld [vmem:[%s605 + $0x8] sm:$0xff]
        %v1000 = vxor.u32 %v991, 2147483648
        %v1001 = vxor.u32 %v992, 2147483648
        %v1002 = vmul.f32 %v1000, 1.442695
        %v1003 = vpow.pop %v1002
        %v1004 = vmul.f32 %v1001, 1.442695
        %v1005 = vpow.pop %v1004
        %v1006 = vadd.f32 %v1003, 1.0
        %v1007 = vadd.f32 %v1005, 1.0
        %v1008 = vrcp.pop %v1006
        %v1009 = vmul.f32 1.0, %v1008
        %v1010 = vrcp.pop %v1007
        %v1011 = vmul.f32 1.0, %v1010
        %v1012 = vtanh.pop %v991
        %v1013 = vtanh.pop %v992
        %v1014 = vmul.f32 %v1009, 0.0
        %v1015 = vmul.f32 %v1011, 0.0
        %1018 = vrot.lane.b32.xlu0 %v1012, 64
        %v1019 = vpop.permute.xlu0 %1018
        %1020 = vrot.lane.b32.xlu0 %v1013, 64
        %v1021 = vpop.permute.xlu0 %1020
        %v1024 = vmul.f32 %v1009, %v1019
        %v1025 = vmul.f32 %v1011, %v1021
        %1028 = vrot.lane.b32.xlu0 %v1024, 32
        %v1029 = vpop.permute.xlu0 %1028
        %1030 = vrot.lane.b32.xlu0 %v1025, 32
        %v1031 = vpop.permute.xlu0 %1030
        %v1034 = vadd.f32 %v1014, %v1029
        %v1035 = vadd.f32 %v1015, %v1031
        %v1036 = vtanh.pop %v1034
        %v1037 = vtanh.pop %v1035
        %1040 = vrot.lane.b32.xlu0 %v1036, 64
        %v1041 = vpop.permute.xlu0 %1040
        %1042 = vrot.lane.b32.xlu0 %v1037, 64
        %v1043 = vpop.permute.xlu0 %1042
        %v1046 = vmul.f32 %v1009, %v1041
        %v1047 = vmul.f32 %v1011, %v1043
        %1049 = vset.pattern.permute.xlu0 0
        %1050 = vperm.xlu0 %1049, %v998
        %v1051 = vpop.permute.xlu0 %1050
        %1054 = vset.pattern.permute.xlu0 0
        %1055 = vperm.xlu0 %1054, %v999
        %v1056 = vpop.permute.xlu0 %1055
        %v1058 = vmul.f32 %v1051, %v1046
        %v1059 = vmul.f32 %v1056, %v1047
        %v1060 = vadd.f32 %v1058, 0.0
        %v1061 = vadd.f32 %v1059, 0.0
        %v1062 = vmul.f32 %v1051, %v1034
        %v1063 = vmul.f32 %v1056, %v1035
        %v1064 = vadd.f32 %v1062, 0.0
        %v1065 = vadd.f32 %v1063, 0.0
        %s1066 = scalar_lea.vmem %s605, 112 [#allocation7]
        %v1067 = vld [vmem:[%s1066] sm:$0xff]
        %v1068 = vld [vmem:[%s1066 + $0x8] sm:$0xff]
        %v1069 = vxor.u32 %v996, 2147483648
        %v1070 = vxor.u32 %v997, 2147483648
        %v1071 = vmul.f32 %v1069, 1.442695
        %v1072 = vpow.pop %v1071
        %v1073 = vmul.f32 %v1070, 1.442695
        %v1074 = vpow.pop %v1073
        %v1075 = vadd.f32 %v1072, 1.0
        %v1076 = vadd.f32 %v1074, 1.0
        %v1077 = vrcp.pop %v1075
        %v1078 = vmul.f32 1.0, %v1077
        %v1079 = vrcp.pop %v1076
        %v1080 = vmul.f32 1.0, %v1079
        %v1081 = vtanh.pop %v996
        %v1082 = vtanh.pop %v997
        %v1083 = vmul.f32 %v1078, 0.0
        %v1084 = vmul.f32 %v1080, 0.0
        %1087 = vrot.lane.b32.xlu0 %v1081, 64
        %v1088 = vpop.permute.xlu0 %1087
        %1089 = vrot.lane.b32.xlu0 %v1082, 64
        %v1090 = vpop.permute.xlu0 %1089
        %v1093 = vmul.f32 %v1078, %v1088
        %v1094 = vmul.f32 %v1080, %v1090
        %1097 = vrot.lane.b32.xlu0 %v1093, 32
        %v1098 = vpop.permute.xlu0 %1097
        %1099 = vrot.lane.b32.xlu0 %v1094, 32
        %v1100 = vpop.permute.xlu0 %1099
        %v1103 = vadd.f32 %v1083, %v1098
        %v1104 = vadd.f32 %v1084, %v1100
        %v1105 = vtanh.pop %v1103
        %v1106 = vtanh.pop %v1104
        %1109 = vrot.lane.b32.xlu0 %v1105, 64
        %v1110 = vpop.permute.xlu0 %1109
        %1111 = vrot.lane.b32.xlu0 %v1106, 64
        %v1112 = vpop.permute.xlu0 %1111
        %v1115 = vmul.f32 %v1078, %v1110
        %v1116 = vmul.f32 %v1080, %v1112
        %1118 = vset.pattern.permute.xlu0 0
        %1119 = vperm.xlu0 %1118, %v1067
        %v1120 = vpop.permute.xlu0 %1119
        %1123 = vset.pattern.permute.xlu0 0
        %1124 = vperm.xlu0 %1123, %v1068
        %v1125 = vpop.permute.xlu0 %1124
        %v1127 = vmul.f32 %v1120, %v1115
        %v1128 = vmul.f32 %v1125, %v1116
        %v1129 = vadd.f32 %v1127, 0.0
        %v1130 = vadd.f32 %v1128, 0.0
        %v1131 = vmul.f32 %v1120, %v1103
        %v1132 = vmul.f32 %v1125, %v1104
        %v1133 = vadd.f32 %v1131, 0.0
        %v1134 = vadd.f32 %v1132, 0.0
        %v1135 = vpack.c.bf16 %v1061, %v1060
        %1137 = vrot.lane.b32.xlu0 %v1135, 32
        %v1138 = vpop.permute.xlu0 %1137
        %1140 = vst.msk [vmem:[#allocation4] sm:$0xff] %vm723, %v1138
        %v1141 = vpack.c.bf16 %v1130, %v1129
        %1143 = vrot.lane.b32.xlu0 %v1141, 32
        %v1144 = vpop.permute.xlu0 %1143
        %s1146 = scalar_lea.vmem [#allocation5], 56
        %1147 = vst.msk [vmem:[%s1146] sm:$0xff] %vm723, %v1144
        %1150 = vrot.lane.b32.xlu0 %v1060, 32
        %v1151 = vpop.permute.xlu0 %1150
        %1152 = vrot.lane.b32.xlu0 %v1061, 32
        %v1153 = vpop.permute.xlu0 %1152
        %1158 = vrot.lane.b32.xlu0 %v1129, 64
        %v1159 = vpop.permute.xlu0 %1158
        %1160 = vrot.lane.b32.xlu0 %v1130, 64
        %v1161 = vpop.permute.xlu0 %1160
        %v1164 = vsel %vm723, %v1151, %v1159
        %v1165 = vsel %vm723, %v1153, %v1161
        %v1166 = vpack.c.bf16 %v1165, %v1164
        %v1168 = vsel %vm942, %v1166, 0
        %1170 = vmatprep.subr.bf16.mxu0 %v927
        %1171 = vmatpush1.bf16.msra.mxu0 %v926
        %1172 = vmatprep.subr.bf16.mxu0 %v929
        %1173 = vmatpush1.bf16.msra.mxu0 %v928
        %1174 = vmatprep.subr.bf16.mxu0 %v931
        %1175 = vmatpush1.bf16.msra.mxu0 %v930
        %1176 = vmatprep.subr.bf16.mxu0 %v933
        %1177 = vmatpush1.bf16.msra.mxu0 %v932
        %1178 = vmatprep.subr.bf16.mxu0 0
        %1179 = vmatpush1.bf16.msra.mxu0 0
        %1180 = vmatprep.subr.bf16.mxu0 0
        %1181 = vmatpush1.bf16.msra.mxu0 0
        %1182 = vmatprep.subr.bf16.mxu0 0
        %1183 = vmatpush1.bf16.msra.mxu0 0
        %1184 = vmatprep.subr.bf16.mxu0 0
        %1185 = vmatpush1.bf16.msra.mxu0 0
        %1186 = vmatprep.subr.bf16.mxu0 0
        %1187 = vmatpush1.bf16.msra.mxu0 0
        %1188 = vmatprep.subr.bf16.mxu0 0
        %1189 = vmatpush1.bf16.msra.mxu0 0
        %1190 = vmatprep.subr.bf16.mxu0 0
        %1191 = vmatpush1.bf16.msra.mxu0 0
        %1192 = vmatprep.subr.bf16.mxu0 0
        %1193 = vmatpush1.bf16.msra.mxu0 0
        %1194 = vmatprep.subr.bf16.mxu0 0
        %1195 = vmatpush1.bf16.msra.mxu0 0
        %1196 = vmatprep.subr.bf16.mxu0 0
        %1197 = vmatpush1.bf16.msra.mxu0 0
        %1198 = vmatprep.subr.bf16.mxu0 0
        %1199 = vmatpush1.bf16.msra.mxu0 0
        %1200 = vmatprep.subr.bf16.mxu0 0
        %1201 = vmatpush1.bf16.msra.mxu0 0
        %1202 = vmatprep.mubr.bf16.mxu0 0
        %1203 = vmatmul.mubr.bf16.gmra.mrb[0].mxu0 %v1168
        %v1204 = vpop.f32.mrb[0].mxu0
        %v1205 = vadd.f32 0.0, %v1204
        %v1206 = vpop.f32.mrb[0].mxu0
        %v1207 = vadd.f32 0.0, %v1206
        %v1208 = vpop.f32.mrb[0].mxu0
        %v1209 = vadd.f32 0.0, %v1208
        %v1210 = vpop.f32.mrb[0].mxu0
        %v1211 = vadd.f32 0.0, %v1210
        %1212 = vdwg.mxu0
        %s1213 = scalar_lea.vmem [#allocation2], 16
        %v1214 = vld [vmem:[%s1213] sm:$0xff]
        %v1215 = vld [vmem:[%s1213 + $0x8] sm:$0xff]
        %v1216 = vadd.f32 %v1214, %v1205
        %v1217 = vadd.f32 %v1215, %v1209
        %s1218 = scalar_lea.vmem [#allocation3], 96
        %v1219 = vld [vmem:[%s1218] sm:$0xff]
        %v1220 = vld [vmem:[%s1218 + $0x8] sm:$0xff]
        %v1221 = vadd.f32 %v1219, %v1207
        %v1222 = vadd.f32 %v1220, %v1211
        %s1223 = scalar_lea.vmem %s605, 16 [#allocation7]
        %v1224 = vld [vmem:[%s1223] sm:$0xff]
        %v1225 = vld [vmem:[%s1223 + $0x8] sm:$0xff]
        %v1226 = vxor.u32 %v1216, 2147483648
        %v1227 = vxor.u32 %v1217, 2147483648
        %v1228 = vmul.f32 %v1226, 1.442695
        %v1229 = vpow.pop %v1228
        %v1230 = vmul.f32 %v1227, 1.442695
        %v1231 = vpow.pop %v1230
        %v1232 = vadd.f32 %v1229, 1.0
        %v1233 = vadd.f32 %v1231, 1.0
        %v1234 = vrcp.pop %v1232
        %v1235 = vmul.f32 1.0, %v1234
        %v1236 = vrcp.pop %v1233
        %v1237 = vmul.f32 1.0, %v1236
        %v1238 = vtanh.pop %v1216
        %v1239 = vtanh.pop %v1217
        %v1240 = vmul.f32 %v1235, %v1064
        %v1241 = vmul.f32 %v1237, %v1065
        %1244 = vrot.lane.b32.xlu0 %v1238, 64
        %v1245 = vpop.permute.xlu0 %1244
        %1246 = vrot.lane.b32.xlu0 %v1239, 64
        %v1247 = vpop.permute.xlu0 %1246
        %v1250 = vmul.f32 %v1235, %v1245
        %v1251 = vmul.f32 %v1237, %v1247
        %1254 = vrot.lane.b32.xlu0 %v1250, 32
        %v1255 = vpop.permute.xlu0 %1254
        %1256 = vrot.lane.b32.xlu0 %v1251, 32
        %v1257 = vpop.permute.xlu0 %1256
        %v1260 = vadd.f32 %v1240, %v1255
        %v1261 = vadd.f32 %v1241, %v1257
        %v1262 = vtanh.pop %v1260
        %v1263 = vtanh.pop %v1261
        %1266 = vrot.lane.b32.xlu0 %v1262, 64
        %v1267 = vpop.permute.xlu0 %1266
        %1268 = vrot.lane.b32.xlu0 %v1263, 64
        %v1269 = vpop.permute.xlu0 %1268
        %v1272 = vmul.f32 %v1235, %v1267
        %v1273 = vmul.f32 %v1237, %v1269
        %v1274 = vsub.f32 %v1272, %v1060
        %v1275 = vsub.f32 %v1273, %v1061
        %1277 = vset.pattern.permute.xlu0 0
        %1278 = vperm.xlu0 %1277, %v1224
        %v1279 = vpop.permute.xlu0 %1278
        %1282 = vset.pattern.permute.xlu0 0
        %1283 = vperm.xlu0 %1282, %v1225
        %v1284 = vpop.permute.xlu0 %1283
        %v1286 = vmul.f32 %v1279, %v1274
        %v1287 = vmul.f32 %v1284, %v1275
        %v1288 = vadd.f32 %v1060, %v1286
        %v1289 = vadd.f32 %v1061, %v1287
        %v1290 = vsub.f32 %v1260, %v1064
        %v1291 = vsub.f32 %v1261, %v1065
        %v1292 = vmul.f32 %v1279, %v1290
        %v1293 = vmul.f32 %v1284, %v1291
        %v1294 = vadd.f32 %v1064, %v1292
        %v1295 = vadd.f32 %v1065, %v1293
        %s1296 = scalar_lea.vmem %s605, 96 [#allocation7]
        %v1297 = vld [vmem:[%s1296] sm:$0xff]
        %v1298 = vld [vmem:[%s1296 + $0x8] sm:$0xff]
        %v1299 = vxor.u32 %v1221, 2147483648
        %v1300 = vxor.u32 %v1222, 2147483648
        %v1301 = vmul.f32 %v1299, 1.442695
        %v1302 = vpow.pop %v1301
        %v1303 = vmul.f32 %v1300, 1.442695
        %v1304 = vpow.pop %v1303
        %v1305 = vadd.f32 %v1302, 1.0
        %v1306 = vadd.f32 %v1304, 1.0
        %v1307 = vrcp.pop %v1305
        %v1308 = vmul.f32 1.0, %v1307
        %v1309 = vrcp.pop %v1306
        %v1310 = vmul.f32 1.0, %v1309
        %v1311 = vtanh.pop %v1221
        %v1312 = vtanh.pop %v1222
        %v1313 = vmul.f32 %v1308, %v1133
        %v1314 = vmul.f32 %v1310, %v1134
        %1317 = vrot.lane.b32.xlu0 %v1311, 64
        %v1318 = vpop.permute.xlu0 %1317
        %1319 = vrot.lane.b32.xlu0 %v1312, 64
        %v1320 = vpop.permute.xlu0 %1319
        %v1323 = vmul.f32 %v1308, %v1318
        %v1324 = vmul.f32 %v1310, %v1320
        %1327 = vrot.lane.b32.xlu0 %v1323, 32
        %v1328 = vpop.permute.xlu0 %1327
        %1329 = vrot.lane.b32.xlu0 %v1324, 32
        %v1330 = vpop.permute.xlu0 %1329
        %v1333 = vadd.f32 %v1313, %v1328
        %v1334 = vadd.f32 %v1314, %v1330
        %v1335 = vtanh.pop %v1333
        %v1336 = vtanh.pop %v1334
        %1339 = vrot.lane.b32.xlu0 %v1335, 64
        %v1340 = vpop.permute.xlu0 %1339
        %1341 = vrot.lane.b32.xlu0 %v1336, 64
        %v1342 = vpop.permute.xlu0 %1341
        %v1345 = vmul.f32 %v1308, %v1340
        %v1346 = vmul.f32 %v1310, %v1342
        %v1347 = vsub.f32 %v1345, %v1129
        %v1348 = vsub.f32 %v1346, %v1130
        %1350 = vset.pattern.permute.xlu0 0
        %1351 = vperm.xlu0 %1350, %v1297
        %v1352 = vpop.permute.xlu0 %1351
        %1355 = vset.pattern.permute.xlu0 0
        %1356 = vperm.xlu0 %1355, %v1298
        %v1357 = vpop.permute.xlu0 %1356
        %v1359 = vmul.f32 %v1352, %v1347
        %v1360 = vmul.f32 %v1357, %v1348
        %v1361 = vadd.f32 %v1129, %v1359
        %v1362 = vadd.f32 %v1130, %v1360
        %v1363 = vsub.f32 %v1333, %v1133
        %v1364 = vsub.f32 %v1334, %v1134
        %v1365 = vmul.f32 %v1352, %v1363
        %v1366 = vmul.f32 %v1357, %v1364
        %v1367 = vadd.f32 %v1133, %v1365
        %v1368 = vadd.f32 %v1134, %v1366
        %v1369 = vpack.c.bf16 %v1289, %v1288
        %1371 = vrot.lane.b32.xlu0 %v1369, 32
        %v1372 = vpop.permute.xlu0 %1371
        %s1374 = scalar_lea.vmem [#allocation4], 8
        %1375 = vst.msk [vmem:[%s1374] sm:$0xff] %vm723, %v1372
        %v1376 = vpack.c.bf16 %v1362, %v1361
        %1378 = vrot.lane.b32.xlu0 %v1376, 32
        %v1379 = vpop.permute.xlu0 %1378
        %s1381 = scalar_lea.vmem [#allocation5], 48
        %1382 = vst.msk [vmem:[%s1381] sm:$0xff] %vm723, %v1379
        %1385 = vrot.lane.b32.xlu0 %v1288, 32
        %v1386 = vpop.permute.xlu0 %1385
        %1387 = vrot.lane.b32.xlu0 %v1289, 32
        %v1388 = vpop.permute.xlu0 %1387
        %1393 = vrot.lane.b32.xlu0 %v1361, 64
        %v1394 = vpop.permute.xlu0 %1393
        %1395 = vrot.lane.b32.xlu0 %v1362, 64
        %v1396 = vpop.permute.xlu0 %1395
        %v1399 = vsel %vm723, %v1386, %v1394
        %v1400 = vsel %vm723, %v1388, %v1396
        %v1401 = vpack.c.bf16 %v1400, %v1399
        %v1403 = vsel %vm942, %v1401, 0
        %1405 = vmatprep.subr.bf16.mxu0 %v927
        %1406 = vmatpush1.bf16.msra.mxu0 %v926
        %1407 = vmatprep.subr.bf16.mxu0 %v929
        %1408 = vmatpush1.bf16.msra.mxu0 %v928
        %1409 = vmatprep.subr.bf16.mxu0 %v931
        %1410 = vmatpush1.bf16.msra.mxu0 %v930
        %1411 = vmatprep.subr.bf16.mxu0 %v933
        %1412 = vmatpush1.bf16.msra.mxu0 %v932
        %1413 = vmatprep.subr.bf16.mxu0 0
        %1414 = vmatpush1.bf16.msra.mxu0 0
        %1415 = vmatprep.subr.bf16.mxu0 0
        %1416 = vmatpush1.bf16.msra.mxu0 0
        %1417 = vmatprep.subr.bf16.mxu0 0
        %1418 = vmatpush1.bf16.msra.mxu0 0
        %1419 = vmatprep.subr.bf16.mxu0 0
        %1420 = vmatpush1.bf16.msra.mxu0 0
        %1421 = vmatprep.subr.bf16.mxu0 0
        %1422 = vmatpush1.bf16.msra.mxu0 0
        %1423 = vmatprep.subr.bf16.mxu0 0
        %1424 = vmatpush1.bf16.msra.mxu0 0
        %1425 = vmatprep.subr.bf16.mxu0 0
        %1426 = vmatpush1.bf16.msra.mxu0 0
        %1427 = vmatprep.subr.bf16.mxu0 0
        %1428 = vmatpush1.bf16.msra.mxu0 0
        %1429 = vmatprep.subr.bf16.mxu0 0
        %1430 = vmatpush1.bf16.msra.mxu0 0
        %1431 = vmatprep.subr.bf16.mxu0 0
        %1432 = vmatpush1.bf16.msra.mxu0 0
        %1433 = vmatprep.subr.bf16.mxu0 0
        %1434 = vmatpush1.bf16.msra.mxu0 0
        %1435 = vmatprep.subr.bf16.mxu0 0
        %1436 = vmatpush1.bf16.msra.mxu0 0
        %1437 = vmatprep.mubr.bf16.mxu0 0
        %1438 = vmatmul.mubr.bf16.gmra.mrb[0].mxu0 %v1403
        %v1439 = vpop.f32.mrb[0].mxu0
        %v1440 = vadd.f32 0.0, %v1439
        %v1441 = vpop.f32.mrb[0].mxu0
        %v1442 = vadd.f32 0.0, %v1441
        %v1443 = vpop.f32.mrb[0].mxu0
        %v1444 = vadd.f32 0.0, %v1443
        %v1445 = vpop.f32.mrb[0].mxu0
        %v1446 = vadd.f32 0.0, %v1445
        %1447 = vdwg.mxu0
        %s1448 = scalar_lea.vmem [#allocation2], 32
        %v1449 = vld [vmem:[%s1448] sm:$0xff]
        %v1450 = vld [vmem:[%s1448 + $0x8] sm:$0xff]
        %v1451 = vadd.f32 %v1449, %v1440
        %v1452 = vadd.f32 %v1450, %v1444
        %s1453 = scalar_lea.vmem [#allocation3], 80
        %v1454 = vld [vmem:[%s1453] sm:$0xff]
        %v1455 = vld [vmem:[%s1453 + $0x8] sm:$0xff]
        %v1456 = vadd.f32 %v1454, %v1442
        %v1457 = vadd.f32 %v1455, %v1446
        %s1458 = scalar_lea.vmem %s605, 32 [#allocation7]
        %v1459 = vld [vmem:[%s1458] sm:$0xff]
        %v1460 = vld [vmem:[%s1458 + $0x8] sm:$0xff]
        %v1461 = vxor.u32 %v1451, 2147483648
        %v1462 = vxor.u32 %v1452, 2147483648
        %v1463 = vmul.f32 %v1461, 1.442695
        %v1464 = vpow.pop %v1463
        %v1465 = vmul.f32 %v1462, 1.442695
        %v1466 = vpow.pop %v1465
        %v1467 = vadd.f32 %v1464, 1.0
        %v1468 = vadd.f32 %v1466, 1.0
        %v1469 = vrcp.pop %v1467
        %v1470 = vmul.f32 1.0, %v1469
        %v1471 = vrcp.pop %v1468
        %v1472 = vmul.f32 1.0, %v1471
        %v1473 = vtanh.pop %v1451
        %v1474 = vtanh.pop %v1452
        %v1475 = vmul.f32 %v1470, %v1294
        %v1476 = vmul.f32 %v1472, %v1295
        %1479 = vrot.lane.b32.xlu0 %v1473, 64
        %v1480 = vpop.permute.xlu0 %1479
        %1481 = vrot.lane.b32.xlu0 %v1474, 64
        %v1482 = vpop.permute.xlu0 %1481
        %v1485 = vmul.f32 %v1470, %v1480
        %v1486 = vmul.f32 %v1472, %v1482
        %1489 = vrot.lane.b32.xlu0 %v1485, 32
        %v1490 = vpop.permute.xlu0 %1489
        %1491 = vrot.lane.b32.xlu0 %v1486, 32
        %v1492 = vpop.permute.xlu0 %1491
        %v1495 = vadd.f32 %v1475, %v1490
        %v1496 = vadd.f32 %v1476, %v1492
        %v1497 = vtanh.pop %v1495
        %v1498 = vtanh.pop %v1496
        %1501 = vrot.lane.b32.xlu0 %v1497, 64
        %v1502 = vpop.permute.xlu0 %1501
        %1503 = vrot.lane.b32.xlu0 %v1498, 64
        %v1504 = vpop.permute.xlu0 %1503
        %v1507 = vmul.f32 %v1470, %v1502
        %v1508 = vmul.f32 %v1472, %v1504
        %v1509 = vsub.f32 %v1507, %v1288
        %v1510 = vsub.f32 %v1508, %v1289
        %1512 = vset.pattern.permute.xlu0 0
        %1513 = vperm.xlu0 %1512, %v1459
        %v1514 = vpop.permute.xlu0 %1513
        %1517 = vset.pattern.permute.xlu0 0
        %1518 = vperm.xlu0 %1517, %v1460
        %v1519 = vpop.permute.xlu0 %1518
        %v1521 = vmul.f32 %v1514, %v1509
        %v1522 = vmul.f32 %v1519, %v1510
        %v1523 = vadd.f32 %v1288, %v1521
        %v1524 = vadd.f32 %v1289, %v1522
        %v1525 = vsub.f32 %v1495, %v1294
        %v1526 = vsub.f32 %v1496, %v1295
        %v1527 = vmul.f32 %v1514, %v1525
        %v1528 = vmul.f32 %v1519, %v1526
        %v1529 = vadd.f32 %v1294, %v1527
        %v1530 = vadd.f32 %v1295, %v1528
        %s1531 = scalar_lea.vmem %s605, 80 [#allocation7]
        %v1532 = vld [vmem:[%s1531] sm:$0xff]
        %v1533 = vld [vmem:[%s1531 + $0x8] sm:$0xff]
        %v1534 = vxor.u32 %v1456, 2147483648
        %v1535 = vxor.u32 %v1457, 2147483648
        %v1536 = vmul.f32 %v1534, 1.442695
        %v1537 = vpow.pop %v1536
        %v1538 = vmul.f32 %v1535, 1.442695
        %v1539 = vpow.pop %v1538
        %v1540 = vadd.f32 %v1537, 1.0
        %v1541 = vadd.f32 %v1539, 1.0
        %v1542 = vrcp.pop %v1540
        %v1543 = vmul.f32 1.0, %v1542
        %v1544 = vrcp.pop %v1541
        %v1545 = vmul.f32 1.0, %v1544
        %v1546 = vtanh.pop %v1456
        %v1547 = vtanh.pop %v1457
        %v1548 = vmul.f32 %v1543, %v1367
        %v1549 = vmul.f32 %v1545, %v1368
        %1552 = vrot.lane.b32.xlu0 %v1546, 64
        %v1553 = vpop.permute.xlu0 %1552
        %1554 = vrot.lane.b32.xlu0 %v1547, 64
        %v1555 = vpop.permute.xlu0 %1554
        %v1558 = vmul.f32 %v1543, %v1553
        %v1559 = vmul.f32 %v1545, %v1555
        %1562 = vrot.lane.b32.xlu0 %v1558, 32
        %v1563 = vpop.permute.xlu0 %1562
        %1564 = vrot.lane.b32.xlu0 %v1559, 32
        %v1565 = vpop.permute.xlu0 %1564
        %v1568 = vadd.f32 %v1548, %v1563
        %v1569 = vadd.f32 %v1549, %v1565
        %v1570 = vtanh.pop %v1568
        %v1571 = vtanh.pop %v1569
        %1574 = vrot.lane.b32.xlu0 %v1570, 64
        %v1575 = vpop.permute.xlu0 %1574
        %1576 = vrot.lane.b32.xlu0 %v1571, 64
        %v1577 = vpop.permute.xlu0 %1576
        %v1580 = vmul.f32 %v1543, %v1575
        %v1581 = vmul.f32 %v1545, %v1577
        %v1582 = vsub.f32 %v1580, %v1361
        %v1583 = vsub.f32 %v1581, %v1362
        %1585 = vset.pattern.permute.xlu0 0
        %1586 = vperm.xlu0 %1585, %v1532
        %v1587 = vpop.permute.xlu0 %1586
        %1590 = vset.pattern.permute.xlu0 0
        %1591 = vperm.xlu0 %1590, %v1533
        %v1592 = vpop.permute.xlu0 %1591
        %v1594 = vmul.f32 %v1587, %v1582
        %v1595 = vmul.f32 %v1592, %v1583
        %v1596 = vadd.f32 %v1361, %v1594
        %v1597 = vadd.f32 %v1362, %v1595
        %v1598 = vsub.f32 %v1568, %v1367
        %v1599 = vsub.f32 %v1569, %v1368
        %v1600 = vmul.f32 %v1587, %v1598
        %v1601 = vmul.f32 %v1592, %v1599
        %v1602 = vadd.f32 %v1367, %v1600
        %v1603 = vadd.f32 %v1368, %v1601
        %v1604 = vpack.c.bf16 %v1524, %v1523
        %1606 = vrot.lane.b32.xlu0 %v1604, 32
        %v1607 = vpop.permute.xlu0 %1606
        %s1609 = scalar_lea.vmem [#allocation4], 16
        %1610 = vst.msk [vmem:[%s1609] sm:$0xff] %vm723, %v1607
        %v1611 = vpack.c.bf16 %v1597, %v1596
        %1613 = vrot.lane.b32.xlu0 %v1611, 32
        %v1614 = vpop.permute.xlu0 %1613
        %s1616 = scalar_lea.vmem [#allocation5], 40
        %1617 = vst.msk [vmem:[%s1616] sm:$0xff] %vm723, %v1614
        %1620 = vrot.lane.b32.xlu0 %v1523, 32
        %v1621 = vpop.permute.xlu0 %1620
        %1622 = vrot.lane.b32.xlu0 %v1524, 32
        %v1623 = vpop.permute.xlu0 %1622
        %1628 = vrot.lane.b32.xlu0 %v1596, 64
        %v1629 = vpop.permute.xlu0 %1628
        %1630 = vrot.lane.b32.xlu0 %v1597, 64
        %v1631 = vpop.permute.xlu0 %1630
        %v1634 = vsel %vm723, %v1621, %v1629
        %v1635 = vsel %vm723, %v1623, %v1631
        %v1636 = vpack.c.bf16 %v1635, %v1634
        %v1638 = vsel %vm942, %v1636, 0
        %1640 = vmatprep.subr.bf16.mxu0 %v927
        %1641 = vmatpush1.bf16.msra.mxu0 %v926
        %1642 = vmatprep.subr.bf16.mxu0 %v929
        %1643 = vmatpush1.bf16.msra.mxu0 %v928
        %1644 = vmatprep.subr.bf16.mxu0 %v931
        %1645 = vmatpush1.bf16.msra.mxu0 %v930
        %1646 = vmatprep.subr.bf16.mxu0 %v933
        %1647 = vmatpush1.bf16.msra.mxu0 %v932
        %1648 = vmatprep.subr.bf16.mxu0 0
        %1649 = vmatpush1.bf16.msra.mxu0 0
        %1650 = vmatprep.subr.bf16.mxu0 0
        %1651 = vmatpush1.bf16.msra.mxu0 0
        %1652 = vmatprep.subr.bf16.mxu0 0
        %1653 = vmatpush1.bf16.msra.mxu0 0
        %1654 = vmatprep.subr.bf16.mxu0 0
        %1655 = vmatpush1.bf16.msra.mxu0 0
        %1656 = vmatprep.subr.bf16.mxu0 0
        %1657 = vmatpush1.bf16.msra.mxu0 0
        %1658 = vmatprep.subr.bf16.mxu0 0
        %1659 = vmatpush1.bf16.msra.mxu0 0
        %1660 = vmatprep.subr.bf16.mxu0 0
        %1661 = vmatpush1.bf16.msra.mxu0 0
        %1662 = vmatprep.subr.bf16.mxu0 0
        %1663 = vmatpush1.bf16.msra.mxu0 0
        %1664 = vmatprep.subr.bf16.mxu0 0
        %1665 = vmatpush1.bf16.msra.mxu0 0
        %1666 = vmatprep.subr.bf16.mxu0 0
        %1667 = vmatpush1.bf16.msra.mxu0 0
        %1668 = vmatprep.subr.bf16.mxu0 0
        %1669 = vmatpush1.bf16.msra.mxu0 0
        %1670 = vmatprep.subr.bf16.mxu0 0
        %1671 = vmatpush1.bf16.msra.mxu0 0
        %1672 = vmatprep.mubr.bf16.mxu0 0
        %1673 = vmatmul.mubr.bf16.gmra.mrb[0].mxu0 %v1638
        %v1674 = vpop.f32.mrb[0].mxu0
        %v1675 = vadd.f32 0.0, %v1674
        %v1676 = vpop.f32.mrb[0].mxu0
        %v1677 = vadd.f32 0.0, %v1676
        %v1678 = vpop.f32.mrb[0].mxu0
        %v1679 = vadd.f32 0.0, %v1678
        %v1680 = vpop.f32.mrb[0].mxu0
        %v1681 = vadd.f32 0.0, %v1680
        %1682 = vdwg.mxu0
        %s1683 = scalar_lea.vmem [#allocation2], 48
        %v1684 = vld [vmem:[%s1683] sm:$0xff]
        %v1685 = vld [vmem:[%s1683 + $0x8] sm:$0xff]
        %v1686 = vadd.f32 %v1684, %v1675
        %v1687 = vadd.f32 %v1685, %v1679
        %s1688 = scalar_lea.vmem [#allocation3], 64
        %v1689 = vld [vmem:[%s1688] sm:$0xff]
        %v1690 = vld [vmem:[%s1688 + $0x8] sm:$0xff]
        %v1691 = vadd.f32 %v1689, %v1677
        %v1692 = vadd.f32 %v1690, %v1681
        %s1693 = scalar_lea.vmem %s605, 48 [#allocation7]
        %v1694 = vld [vmem:[%s1693] sm:$0xff]
        %v1695 = vld [vmem:[%s1693 + $0x8] sm:$0xff]
        %v1696 = vxor.u32 %v1686, 2147483648
        %v1697 = vxor.u32 %v1687, 2147483648
        %v1698 = vmul.f32 %v1696, 1.442695
        %v1699 = vpow.pop %v1698
        %v1700 = vmul.f32 %v1697, 1.442695
        %v1701 = vpow.pop %v1700
        %v1702 = vadd.f32 %v1699, 1.0
        %v1703 = vadd.f32 %v1701, 1.0
        %v1704 = vrcp.pop %v1702
        %v1705 = vmul.f32 1.0, %v1704
        %v1706 = vrcp.pop %v1703
        %v1707 = vmul.f32 1.0, %v1706
        %v1708 = vtanh.pop %v1686
        %v1709 = vtanh.pop %v1687
        %v1710 = vmul.f32 %v1705, %v1529
        %v1711 = vmul.f32 %v1707, %v1530
        %1714 = vrot.lane.b32.xlu0 %v1708, 64
        %v1715 = vpop.permute.xlu0 %1714
        %1716 = vrot.lane.b32.xlu0 %v1709, 64
        %v1717 = vpop.permute.xlu0 %1716
        %v1720 = vmul.f32 %v1705, %v1715
        %v1721 = vmul.f32 %v1707, %v1717
        %1724 = vrot.lane.b32.xlu0 %v1720, 32
        %v1725 = vpop.permute.xlu0 %1724
        %1726 = vrot.lane.b32.xlu0 %v1721, 32
        %v1727 = vpop.permute.xlu0 %1726
        %v1730 = vadd.f32 %v1710, %v1725
        %v1731 = vadd.f32 %v1711, %v1727
        %v1732 = vtanh.pop %v1730
        %v1733 = vtanh.pop %v1731
        %1736 = vrot.lane.b32.xlu0 %v1732, 64
        %v1737 = vpop.permute.xlu0 %1736
        %1738 = vrot.lane.b32.xlu0 %v1733, 64
        %v1739 = vpop.permute.xlu0 %1738
        %v1742 = vmul.f32 %v1705, %v1737
        %v1743 = vmul.f32 %v1707, %v1739
        %v1744 = vsub.f32 %v1742, %v1523
        %v1745 = vsub.f32 %v1743, %v1524
        %1747 = vset.pattern.permute.xlu0 0
        %1748 = vperm.xlu0 %1747, %v1694
        %v1749 = vpop.permute.xlu0 %1748
        %1752 = vset.pattern.permute.xlu0 0
        %1753 = vperm.xlu0 %1752, %v1695
        %v1754 = vpop.permute.xlu0 %1753
        %v1756 = vmul.f32 %v1749, %v1744
        %v1757 = vmul.f32 %v1754, %v1745
        %v1758 = vadd.f32 %v1523, %v1756
        %v1759 = vadd.f32 %v1524, %v1757
        %v1760 = vsub.f32 %v1730, %v1529
        %v1761 = vsub.f32 %v1731, %v1530
        %v1762 = vmul.f32 %v1749, %v1760
        %v1763 = vmul.f32 %v1754, %v1761
        %v1764 = vadd.f32 %v1529, %v1762
        %v1765 = vadd.f32 %v1530, %v1763
        %s1766 = scalar_lea.vmem %s605, 64 [#allocation7]
        %v1767 = vld [vmem:[%s1766] sm:$0xff]
        %v1768 = vld [vmem:[%s1766 + $0x8] sm:$0xff]
        %v1769 = vxor.u32 %v1691, 2147483648
        %v1770 = vxor.u32 %v1692, 2147483648
        %v1771 = vmul.f32 %v1769, 1.442695
        %v1772 = vpow.pop %v1771
        %v1773 = vmul.f32 %v1770, 1.442695
        %v1774 = vpow.pop %v1773
        %v1775 = vadd.f32 %v1772, 1.0
        %v1776 = vadd.f32 %v1774, 1.0
        %v1777 = vrcp.pop %v1775
        %v1778 = vmul.f32 1.0, %v1777
        %v1779 = vrcp.pop %v1776
        %v1780 = vmul.f32 1.0, %v1779
        %v1781 = vtanh.pop %v1691
        %v1782 = vtanh.pop %v1692
        %v1783 = vmul.f32 %v1778, %v1602
        %v1784 = vmul.f32 %v1780, %v1603
        %1787 = vrot.lane.b32.xlu0 %v1781, 64
        %v1788 = vpop.permute.xlu0 %1787
        %1789 = vrot.lane.b32.xlu0 %v1782, 64
        %v1790 = vpop.permute.xlu0 %1789
        %v1793 = vmul.f32 %v1778, %v1788
        %v1794 = vmul.f32 %v1780, %v1790
        %1797 = vrot.lane.b32.xlu0 %v1793, 32
        %v1798 = vpop.permute.xlu0 %1797
        %1799 = vrot.lane.b32.xlu0 %v1794, 32
        %v1800 = vpop.permute.xlu0 %1799
        %v1803 = vadd.f32 %v1783, %v1798
        %v1804 = vadd.f32 %v1784, %v1800
        %v1805 = vtanh.pop %v1803
        %v1806 = vtanh.pop %v1804
        %1809 = vrot.lane.b32.xlu0 %v1805, 64
        %v1810 = vpop.permute.xlu0 %1809
        %1811 = vrot.lane.b32.xlu0 %v1806, 64
        %v1812 = vpop.permute.xlu0 %1811
        %v1815 = vmul.f32 %v1778, %v1810
        %v1816 = vmul.f32 %v1780, %v1812
        %v1817 = vsub.f32 %v1815, %v1596
        %v1818 = vsub.f32 %v1816, %v1597
        %1820 = vset.pattern.permute.xlu0 0
        %1821 = vperm.xlu0 %1820, %v1767
        %v1822 = vpop.permute.xlu0 %1821
        %1825 = vset.pattern.permute.xlu0 0
        %1826 = vperm.xlu0 %1825, %v1768
        %v1827 = vpop.permute.xlu0 %1826
        %v1829 = vmul.f32 %v1822, %v1817
        %v1830 = vmul.f32 %v1827, %v1818
        %v1831 = vadd.f32 %v1596, %v1829
        %v1832 = vadd.f32 %v1597, %v1830
        %v1833 = vsub.f32 %v1803, %v1602
        %v1834 = vsub.f32 %v1804, %v1603
        %v1835 = vmul.f32 %v1822, %v1833
        %v1836 = vmul.f32 %v1827, %v1834
        %v1837 = vadd.f32 %v1602, %v1835
        %v1838 = vadd.f32 %v1603, %v1836
        %v1839 = vpack.c.bf16 %v1759, %v1758
        %1841 = vrot.lane.b32.xlu0 %v1839, 32
        %v1842 = vpop.permute.xlu0 %1841
        %s1844 = scalar_lea.vmem [#allocation4], 24
        %1845 = vst.msk [vmem:[%s1844] sm:$0xff] %vm723, %v1842
        %v1846 = vpack.c.bf16 %v1832, %v1831
        %1848 = vrot.lane.b32.xlu0 %v1846, 32
        %v1849 = vpop.permute.xlu0 %1848
        %s1851 = scalar_lea.vmem [#allocation5], 32
        %1852 = vst.msk [vmem:[%s1851] sm:$0xff] %vm723, %v1849
        %1855 = vrot.lane.b32.xlu0 %v1758, 32
        %v1856 = vpop.permute.xlu0 %1855
        %1857 = vrot.lane.b32.xlu0 %v1759, 32
        %v1858 = vpop.permute.xlu0 %1857
        %1863 = vrot.lane.b32.xlu0 %v1831, 64
        %v1864 = vpop.permute.xlu0 %1863
        %1865 = vrot.lane.b32.xlu0 %v1832, 64
        %v1866 = vpop.permute.xlu0 %1865
        %v1869 = vsel %vm723, %v1856, %v1864
        %v1870 = vsel %vm723, %v1858, %v1866
        %v1871 = vpack.c.bf16 %v1870, %v1869
        %v1873 = vsel %vm942, %v1871, 0
        %1875 = vmatprep.subr.bf16.mxu0 %v927
        %1876 = vmatpush1.bf16.msra.mxu0 %v926
        %1877 = vmatprep.subr.bf16.mxu0 %v929
        %1878 = vmatpush1.bf16.msra.mxu0 %v928
        %1879 = vmatprep.subr.bf16.mxu0 %v931
        %1880 = vmatpush1.bf16.msra.mxu0 %v930
        %1881 = vmatprep.subr.bf16.mxu0 %v933
        %1882 = vmatpush1.bf16.msra.mxu0 %v932
        %1883 = vmatprep.subr.bf16.mxu0 0
        %1884 = vmatpush1.bf16.msra.mxu0 0
        %1885 = vmatprep.subr.bf16.mxu0 0
        %1886 = vmatpush1.bf16.msra.mxu0 0
        %1887 = vmatprep.subr.bf16.mxu0 0
        %1888 = vmatpush1.bf16.msra.mxu0 0
        %1889 = vmatprep.subr.bf16.mxu0 0
        %1890 = vmatpush1.bf16.msra.mxu0 0
        %1891 = vmatprep.subr.bf16.mxu0 0
        %1892 = vmatpush1.bf16.msra.mxu0 0
        %1893 = vmatprep.subr.bf16.mxu0 0
        %1894 = vmatpush1.bf16.msra.mxu0 0
        %1895 = vmatprep.subr.bf16.mxu0 0
        %1896 = vmatpush1.bf16.msra.mxu0 0
        %1897 = vmatprep.subr.bf16.mxu0 0
        %1898 = vmatpush1.bf16.msra.mxu0 0
        %1899 = vmatprep.subr.bf16.mxu0 0
        %1900 = vmatpush1.bf16.msra.mxu0 0
        %1901 = vmatprep.subr.bf16.mxu0 0
        %1902 = vmatpush1.bf16.msra.mxu0 0
        %1903 = vmatprep.subr.bf16.mxu0 0
        %1904 = vmatpush1.bf16.msra.mxu0 0
        %1905 = vmatprep.subr.bf16.mxu0 0
        %1906 = vmatpush1.bf16.msra.mxu0 0
        %1907 = vmatprep.mubr.bf16.mxu0 0
        %1908 = vmatmul.mubr.bf16.gmra.mrb[0].mxu0 %v1873
        %v1909 = vpop.f32.mrb[0].mxu0
        %v1910 = vadd.f32 0.0, %v1909
        %v1911 = vpop.f32.mrb[0].mxu0
        %v1912 = vadd.f32 0.0, %v1911
        %v1913 = vpop.f32.mrb[0].mxu0
        %v1914 = vadd.f32 0.0, %v1913
        %v1915 = vpop.f32.mrb[0].mxu0
        %v1916 = vadd.f32 0.0, %v1915
        %1917 = vdwg.mxu0
        %s1918 = scalar_lea.vmem [#allocation2], 64
        %v1919 = vld [vmem:[%s1918] sm:$0xff]
        %v1920 = vld [vmem:[%s1918 + $0x8] sm:$0xff]
        %v1921 = vadd.f32 %v1919, %v1910
        %v1922 = vadd.f32 %v1920, %v1914
        %s1923 = scalar_lea.vmem [#allocation3], 48
        %v1924 = vld [vmem:[%s1923] sm:$0xff]
        %v1925 = vld [vmem:[%s1923 + $0x8] sm:$0xff]
        %v1926 = vadd.f32 %v1924, %v1912
        %v1927 = vadd.f32 %v1925, %v1916
        %v1928 = vld [vmem:[%s1766] sm:$0xff]
        %v1929 = vld [vmem:[%s1766 + $0x8] sm:$0xff]
        %v1930 = vxor.u32 %v1921, 2147483648
        %v1931 = vxor.u32 %v1922, 2147483648
        %v1932 = vmul.f32 %v1930, 1.442695
        %v1933 = vpow.pop %v1932
        %v1934 = vmul.f32 %v1931, 1.442695
        %v1935 = vpow.pop %v1934
        %v1936 = vadd.f32 %v1933, 1.0
        %v1937 = vadd.f32 %v1935, 1.0
        %v1938 = vrcp.pop %v1936
        %v1939 = vmul.f32 1.0, %v1938
        %v1940 = vrcp.pop %v1937
        %v1941 = vmul.f32 1.0, %v1940
        %v1942 = vtanh.pop %v1921
        %v1943 = vtanh.pop %v1922
        %v1944 = vmul.f32 %v1939, %v1764
        %v1945 = vmul.f32 %v1941, %v1765
        %1948 = vrot.lane.b32.xlu0 %v1942, 64
        %v1949 = vpop.permute.xlu0 %1948
        %1950 = vrot.lane.b32.xlu0 %v1943, 64
        %v1951 = vpop.permute.xlu0 %1950
        %v1954 = vmul.f32 %v1939, %v1949
        %v1955 = vmul.f32 %v1941, %v1951
        %1958 = vrot.lane.b32.xlu0 %v1954, 32
        %v1959 = vpop.permute.xlu0 %1958
        %1960 = vrot.lane.b32.xlu0 %v1955, 32
        %v1961 = vpop.permute.xlu0 %1960
        %v1964 = vadd.f32 %v1944, %v1959
        %v1965 = vadd.f32 %v1945, %v1961
        %v1966 = vtanh.pop %v1964
        %v1967 = vtanh.pop %v1965
        %1970 = vrot.lane.b32.xlu0 %v1966, 64
        %v1971 = vpop.permute.xlu0 %1970
        %1972 = vrot.lane.b32.xlu0 %v1967, 64
        %v1973 = vpop.permute.xlu0 %1972
        %v1976 = vmul.f32 %v1939, %v1971
        %v1977 = vmul.f32 %v1941, %v1973
        %v1978 = vsub.f32 %v1976, %v1758
        %v1979 = vsub.f32 %v1977, %v1759
        %1981 = vset.pattern.permute.xlu0 0
        %1982 = vperm.xlu0 %1981, %v1928
        %v1983 = vpop.permute.xlu0 %1982
        %1986 = vset.pattern.permute.xlu0 0
        %1987 = vperm.xlu0 %1986, %v1929
        %v1988 = vpop.permute.xlu0 %1987
        %v1990 = vmul.f32 %v1983, %v1978
        %v1991 = vmul.f32 %v1988, %v1979
        %v1992 = vadd.f32 %v1758, %v1990
        %v1993 = vadd.f32 %v1759, %v1991
        %v1994 = vsub.f32 %v1964, %v1764
        %v1995 = vsub.f32 %v1965, %v1765
        %v1996 = vmul.f32 %v1983, %v1994
        %v1997 = vmul.f32 %v1988, %v1995
        %v1998 = vadd.f32 %v1764, %v1996
        %v1999 = vadd.f32 %v1765, %v1997
        %v2000 = vld [vmem:[%s1693] sm:$0xff]
        %v2001 = vld [vmem:[%s1693 + $0x8] sm:$0xff]
        %v2002 = vxor.u32 %v1926, 2147483648
        %v2003 = vxor.u32 %v1927, 2147483648
        %v2004 = vmul.f32 %v2002, 1.442695
        %v2005 = vpow.pop %v2004
        %v2006 = vmul.f32 %v2003, 1.442695
        %v2007 = vpow.pop %v2006
        %v2008 = vadd.f32 %v2005, 1.0
        %v2009 = vadd.f32 %v2007, 1.0
        %v2010 = vrcp.pop %v2008
        %v2011 = vmul.f32 1.0, %v2010
        %v2012 = vrcp.pop %v2009
        %v2013 = vmul.f32 1.0, %v2012
        %v2014 = vtanh.pop %v1926
        %v2015 = vtanh.pop %v1927
        %v2016 = vmul.f32 %v2011, %v1837
        %v2017 = vmul.f32 %v2013, %v1838
        %2020 = vrot.lane.b32.xlu0 %v2014, 64
        %v2021 = vpop.permute.xlu0 %2020
        %2022 = vrot.lane.b32.xlu0 %v2015, 64
        %v2023 = vpop.permute.xlu0 %2022
        %v2026 = vmul.f32 %v2011, %v2021
        %v2027 = vmul.f32 %v2013, %v2023
        %2030 = vrot.lane.b32.xlu0 %v2026, 32
        %v2031 = vpop.permute.xlu0 %2030
        %2032 = vrot.lane.b32.xlu0 %v2027, 32
        %v2033 = vpop.permute.xlu0 %2032
        %v2036 = vadd.f32 %v2016, %v2031
        %v2037 = vadd.f32 %v2017, %v2033
        %v2038 = vtanh.pop %v2036
        %v2039 = vtanh.pop %v2037
        %2042 = vrot.lane.b32.xlu0 %v2038, 64
        %v2043 = vpop.permute.xlu0 %2042
        %2044 = vrot.lane.b32.xlu0 %v2039, 64
        %v2045 = vpop.permute.xlu0 %2044
        %v2048 = vmul.f32 %v2011, %v2043
        %v2049 = vmul.f32 %v2013, %v2045
        %v2050 = vsub.f32 %v2048, %v1831
        %v2051 = vsub.f32 %v2049, %v1832
        %2053 = vset.pattern.permute.xlu0 0
        %2054 = vperm.xlu0 %2053, %v2000
        %v2055 = vpop.permute.xlu0 %2054
        %2058 = vset.pattern.permute.xlu0 0
        %2059 = vperm.xlu0 %2058, %v2001
        %v2060 = vpop.permute.xlu0 %2059
        %v2062 = vmul.f32 %v2055, %v2050
        %v2063 = vmul.f32 %v2060, %v2051
        %v2064 = vadd.f32 %v1831, %v2062
        %v2065 = vadd.f32 %v1832, %v2063
        %v2066 = vsub.f32 %v2036, %v1837
        %v2067 = vsub.f32 %v2037, %v1838
        %v2068 = vmul.f32 %v2055, %v2066
        %v2069 = vmul.f32 %v2060, %v2067
        %v2070 = vadd.f32 %v1837, %v2068
        %v2071 = vadd.f32 %v1838, %v2069
        %v2072 = vpack.c.bf16 %v1993, %v1992
        %2074 = vrot.lane.b32.xlu0 %v2072, 32
        %v2075 = vpop.permute.xlu0 %2074
        %s2077 = scalar_lea.vmem [#allocation4], 32
        %2078 = vst.msk [vmem:[%s2077] sm:$0xff] %vm723, %v2075
        %v2079 = vpack.c.bf16 %v2065, %v2064
        %2081 = vrot.lane.b32.xlu0 %v2079, 32
        %v2082 = vpop.permute.xlu0 %2081
        %s2084 = scalar_lea.vmem [#allocation5], 24
        %2085 = vst.msk [vmem:[%s2084] sm:$0xff] %vm723, %v2082
        %2088 = vrot.lane.b32.xlu0 %v1992, 32
        %v2089 = vpop.permute.xlu0 %2088
        %2090 = vrot.lane.b32.xlu0 %v1993, 32
        %v2091 = vpop.permute.xlu0 %2090
        %2096 = vrot.lane.b32.xlu0 %v2064, 64
        %v2097 = vpop.permute.xlu0 %2096
        %2098 = vrot.lane.b32.xlu0 %v2065, 64
        %v2099 = vpop.permute.xlu0 %2098
        %v2102 = vsel %vm723, %v2089, %v2097
        %v2103 = vsel %vm723, %v2091, %v2099
        %v2104 = vpack.c.bf16 %v2103, %v2102
        %v2106 = vsel %vm942, %v2104, 0
        %2108 = vmatprep.subr.bf16.mxu0 %v927
        %2109 = vmatpush1.bf16.msra.mxu0 %v926
        %2110 = vmatprep.subr.bf16.mxu0 %v929
        %2111 = vmatpush1.bf16.msra.mxu0 %v928
        %2112 = vmatprep.subr.bf16.mxu0 %v931
        %2113 = vmatpush1.bf16.msra.mxu0 %v930
        %2114 = vmatprep.subr.bf16.mxu0 %v933
        %2115 = vmatpush1.bf16.msra.mxu0 %v932
        %2116 = vmatprep.subr.bf16.mxu0 0
        %2117 = vmatpush1.bf16.msra.mxu0 0
        %2118 = vmatprep.subr.bf16.mxu0 0
        %2119 = vmatpush1.bf16.msra.mxu0 0
        %2120 = vmatprep.subr.bf16.mxu0 0
        %2121 = vmatpush1.bf16.msra.mxu0 0
        %2122 = vmatprep.subr.bf16.mxu0 0
        %2123 = vmatpush1.bf16.msra.mxu0 0
        %2124 = vmatprep.subr.bf16.mxu0 0
        %2125 = vmatpush1.bf16.msra.mxu0 0
        %2126 = vmatprep.subr.bf16.mxu0 0
        %2127 = vmatpush1.bf16.msra.mxu0 0
        %2128 = vmatprep.subr.bf16.mxu0 0
        %2129 = vmatpush1.bf16.msra.mxu0 0
        %2130 = vmatprep.subr.bf16.mxu0 0
        %2131 = vmatpush1.bf16.msra.mxu0 0
        %2132 = vmatprep.subr.bf16.mxu0 0
        %2133 = vmatpush1.bf16.msra.mxu0 0
        %2134 = vmatprep.subr.bf16.mxu0 0
        %2135 = vmatpush1.bf16.msra.mxu0 0
        %2136 = vmatprep.subr.bf16.mxu0 0
        %2137 = vmatpush1.bf16.msra.mxu0 0
        %2138 = vmatprep.subr.bf16.mxu0 0
        %2139 = vmatpush1.bf16.msra.mxu0 0
        %2140 = vmatprep.mubr.bf16.mxu0 0
        %2141 = vmatmul.mubr.bf16.gmra.mrb[0].mxu0 %v2106
        %v2142 = vpop.f32.mrb[0].mxu0
        %v2143 = vadd.f32 0.0, %v2142
        %v2144 = vpop.f32.mrb[0].mxu0
        %v2145 = vadd.f32 0.0, %v2144
        %v2146 = vpop.f32.mrb[0].mxu0
        %v2147 = vadd.f32 0.0, %v2146
        %v2148 = vpop.f32.mrb[0].mxu0
        %v2149 = vadd.f32 0.0, %v2148
        %2150 = vdwg.mxu0
        %s2151 = scalar_lea.vmem [#allocation2], 80
        %v2152 = vld [vmem:[%s2151] sm:$0xff]
        %v2153 = vld [vmem:[%s2151 + $0x8] sm:$0xff]
        %v2154 = vadd.f32 %v2152, %v2143
        %v2155 = vadd.f32 %v2153, %v2147
        %s2156 = scalar_lea.vmem [#allocation3], 32
        %v2157 = vld [vmem:[%s2156] sm:$0xff]
        %v2158 = vld [vmem:[%s2156 + $0x8] sm:$0xff]
        %v2159 = vadd.f32 %v2157, %v2145
        %v2160 = vadd.f32 %v2158, %v2149
        %v2161 = vld [vmem:[%s1531] sm:$0xff]
        %v2162 = vld [vmem:[%s1531 + $0x8] sm:$0xff]
        %v2163 = vxor.u32 %v2154, 2147483648
        %v2164 = vxor.u32 %v2155, 2147483648
        %v2165 = vmul.f32 %v2163, 1.442695
        %v2166 = vpow.pop %v2165
        %v2167 = vmul.f32 %v2164, 1.442695
        %v2168 = vpow.pop %v2167
        %v2169 = vadd.f32 %v2166, 1.0
        %v2170 = vadd.f32 %v2168, 1.0
        %v2171 = vrcp.pop %v2169
        %v2172 = vmul.f32 1.0, %v2171
        %v2173 = vrcp.pop %v2170
        %v2174 = vmul.f32 1.0, %v2173
        %v2175 = vtanh.pop %v2154
        %v2176 = vtanh.pop %v2155
        %v2177 = vmul.f32 %v2172, %v1998
        %v2178 = vmul.f32 %v2174, %v1999
        %2181 = vrot.lane.b32.xlu0 %v2175, 64
        %v2182 = vpop.permute.xlu0 %2181
        %2183 = vrot.lane.b32.xlu0 %v2176, 64
        %v2184 = vpop.permute.xlu0 %2183
        %v2187 = vmul.f32 %v2172, %v2182
        %v2188 = vmul.f32 %v2174, %v2184
        %2191 = vrot.lane.b32.xlu0 %v2187, 32
        %v2192 = vpop.permute.xlu0 %2191
        %2193 = vrot.lane.b32.xlu0 %v2188, 32
        %v2194 = vpop.permute.xlu0 %2193
        %v2197 = vadd.f32 %v2177, %v2192
        %v2198 = vadd.f32 %v2178, %v2194
        %v2199 = vtanh.pop %v2197
        %v2200 = vtanh.pop %v2198
        %2203 = vrot.lane.b32.xlu0 %v2199, 64
        %v2204 = vpop.permute.xlu0 %2203
        %2205 = vrot.lane.b32.xlu0 %v2200, 64
        %v2206 = vpop.permute.xlu0 %2205
        %v2209 = vmul.f32 %v2172, %v2204
        %v2210 = vmul.f32 %v2174, %v2206
        %v2211 = vsub.f32 %v2209, %v1992
        %v2212 = vsub.f32 %v2210, %v1993
        %2214 = vset.pattern.permute.xlu0 0
        %2215 = vperm.xlu0 %2214, %v2161
        %v2216 = vpop.permute.xlu0 %2215
        %2219 = vset.pattern.permute.xlu0 0
        %2220 = vperm.xlu0 %2219, %v2162
        %v2221 = vpop.permute.xlu0 %2220
        %v2223 = vmul.f32 %v2216, %v2211
        %v2224 = vmul.f32 %v2221, %v2212
        %v2225 = vadd.f32 %v1992, %v2223
        %v2226 = vadd.f32 %v1993, %v2224
        %v2227 = vsub.f32 %v2197, %v1998
        %v2228 = vsub.f32 %v2198, %v1999
        %v2229 = vmul.f32 %v2216, %v2227
        %v2230 = vmul.f32 %v2221, %v2228
        %v2231 = vadd.f32 %v1998, %v2229
        %v2232 = vadd.f32 %v1999, %v2230
        %v2233 = vld [vmem:[%s1458] sm:$0xff]
        %v2234 = vld [vmem:[%s1458 + $0x8] sm:$0xff]
        %v2235 = vxor.u32 %v2159, 2147483648
        %v2236 = vxor.u32 %v2160, 2147483648
        %v2237 = vmul.f32 %v2235, 1.442695
        %v2238 = vpow.pop %v2237
        %v2239 = vmul.f32 %v2236, 1.442695
        %v2240 = vpow.pop %v2239
        %v2241 = vadd.f32 %v2238, 1.0
        %v2242 = vadd.f32 %v2240, 1.0
        %v2243 = vrcp.pop %v2241
        %v2244 = vmul.f32 1.0, %v2243
        %v2245 = vrcp.pop %v2242
        %v2246 = vmul.f32 1.0, %v2245
        %v2247 = vtanh.pop %v2159
        %v2248 = vtanh.pop %v2160
        %v2249 = vmul.f32 %v2244, %v2070
        %v2250 = vmul.f32 %v2246, %v2071
        %2253 = vrot.lane.b32.xlu0 %v2247, 64
        %v2254 = vpop.permute.xlu0 %2253
        %2255 = vrot.lane.b32.xlu0 %v2248, 64
        %v2256 = vpop.permute.xlu0 %2255
        %v2259 = vmul.f32 %v2244, %v2254
        %v2260 = vmul.f32 %v2246, %v2256
        %2263 = vrot.lane.b32.xlu0 %v2259, 32
        %v2264 = vpop.permute.xlu0 %2263
        %2265 = vrot.lane.b32.xlu0 %v2260, 32
        %v2266 = vpop.permute.xlu0 %2265
        %v2269 = vadd.f32 %v2249, %v2264
        %v2270 = vadd.f32 %v2250, %v2266
        %v2271 = vtanh.pop %v2269
        %v2272 = vtanh.pop %v2270
        %2275 = vrot.lane.b32.xlu0 %v2271, 64
        %v2276 = vpop.permute.xlu0 %2275
        %2277 = vrot.lane.b32.xlu0 %v2272, 64
        %v2278 = vpop.permute.xlu0 %2277
        %v2281 = vmul.f32 %v2244, %v2276
        %v2282 = vmul.f32 %v2246, %v2278
        %v2283 = vsub.f32 %v2281, %v2064
        %v2284 = vsub.f32 %v2282, %v2065
        %2286 = vset.pattern.permute.xlu0 0
        %2287 = vperm.xlu0 %2286, %v2233
        %v2288 = vpop.permute.xlu0 %2287
        %2291 = vset.pattern.permute.xlu0 0
        %2292 = vperm.xlu0 %2291, %v2234
        %v2293 = vpop.permute.xlu0 %2292
        %v2295 = vmul.f32 %v2288, %v2283
        %v2296 = vmul.f32 %v2293, %v2284
        %v2297 = vadd.f32 %v2064, %v2295
        %v2298 = vadd.f32 %v2065, %v2296
        %v2299 = vsub.f32 %v2269, %v2070
        %v2300 = vsub.f32 %v2270, %v2071
        %v2301 = vmul.f32 %v2288, %v2299
        %v2302 = vmul.f32 %v2293, %v2300
        %v2303 = vadd.f32 %v2070, %v2301
        %v2304 = vadd.f32 %v2071, %v2302
        %v2305 = vpack.c.bf16 %v2226, %v2225
        %2307 = vrot.lane.b32.xlu0 %v2305, 32
        %v2308 = vpop.permute.xlu0 %2307
        %s2310 = scalar_lea.vmem [#allocation4], 40
        %2311 = vst.msk [vmem:[%s2310] sm:$0xff] %vm723, %v2308
        %v2312 = vpack.c.bf16 %v2298, %v2297
        %2314 = vrot.lane.b32.xlu0 %v2312, 32
        %v2315 = vpop.permute.xlu0 %2314
        %s2317 = scalar_lea.vmem [#allocation5], 16
        %2318 = vst.msk [vmem:[%s2317] sm:$0xff] %vm723, %v2315
        %2321 = vrot.lane.b32.xlu0 %v2225, 32
        %v2322 = vpop.permute.xlu0 %2321
        %2323 = vrot.lane.b32.xlu0 %v2226, 32
        %v2324 = vpop.permute.xlu0 %2323
        %2329 = vrot.lane.b32.xlu0 %v2297, 64
        %v2330 = vpop.permute.xlu0 %2329
        %2331 = vrot.lane.b32.xlu0 %v2298, 64
        %v2332 = vpop.permute.xlu0 %2331
        %v2335 = vsel %vm723, %v2322, %v2330
        %v2336 = vsel %vm723, %v2324, %v2332
        %v2337 = vpack.c.bf16 %v2336, %v2335
        %v2339 = vsel %vm942, %v2337, 0
        %2341 = vmatprep.subr.bf16.mxu0 %v927
        %2342 = vmatpush1.bf16.msra.mxu0 %v926
        %2343 = vmatprep.subr.bf16.mxu0 %v929
        %2344 = vmatpush1.bf16.msra.mxu0 %v928
        %2345 = vmatprep.subr.bf16.mxu0 %v931
        %2346 = vmatpush1.bf16.msra.mxu0 %v930
        %2347 = vmatprep.subr.bf16.mxu0 %v933
        %2348 = vmatpush1.bf16.msra.mxu0 %v932
        %2349 = vmatprep.subr.bf16.mxu0 0
        %2350 = vmatpush1.bf16.msra.mxu0 0
        %2351 = vmatprep.subr.bf16.mxu0 0
        %2352 = vmatpush1.bf16.msra.mxu0 0
        %2353 = vmatprep.subr.bf16.mxu0 0
        %2354 = vmatpush1.bf16.msra.mxu0 0
        %2355 = vmatprep.subr.bf16.mxu0 0
        %2356 = vmatpush1.bf16.msra.mxu0 0
        %2357 = vmatprep.subr.bf16.mxu0 0
        %2358 = vmatpush1.bf16.msra.mxu0 0
        %2359 = vmatprep.subr.bf16.mxu0 0
        %2360 = vmatpush1.bf16.msra.mxu0 0
        %2361 = vmatprep.subr.bf16.mxu0 0
        %2362 = vmatpush1.bf16.msra.mxu0 0
        %2363 = vmatprep.subr.bf16.mxu0 0
        %2364 = vmatpush1.bf16.msra.mxu0 0
        %2365 = vmatprep.subr.bf16.mxu0 0
        %2366 = vmatpush1.bf16.msra.mxu0 0
        %2367 = vmatprep.subr.bf16.mxu0 0
        %2368 = vmatpush1.bf16.msra.mxu0 0
        %2369 = vmatprep.subr.bf16.mxu0 0
        %2370 = vmatpush1.bf16.msra.mxu0 0
        %2371 = vmatprep.subr.bf16.mxu0 0
        %2372 = vmatpush1.bf16.msra.mxu0 0
        %2373 = vmatprep.mubr.bf16.mxu0 0
        %2374 = vmatmul.mubr.bf16.gmra.mrb[0].mxu0 %v2339
        %v2375 = vpop.f32.mrb[0].mxu0
        %v2376 = vadd.f32 0.0, %v2375
        %v2377 = vpop.f32.mrb[0].mxu0
        %v2378 = vadd.f32 0.0, %v2377
        %v2379 = vpop.f32.mrb[0].mxu0
        %v2380 = vadd.f32 0.0, %v2379
        %v2381 = vpop.f32.mrb[0].mxu0
        %v2382 = vadd.f32 0.0, %v2381
        %2383 = vdwg.mxu0
        %s2384 = scalar_lea.vmem [#allocation2], 96
        %v2385 = vld [vmem:[%s2384] sm:$0xff]
        %v2386 = vld [vmem:[%s2384 + $0x8] sm:$0xff]
        %v2387 = vadd.f32 %v2385, %v2376
        %v2388 = vadd.f32 %v2386, %v2380
        %s2389 = scalar_lea.vmem [#allocation3], 16
        %v2390 = vld [vmem:[%s2389] sm:$0xff]
        %v2391 = vld [vmem:[%s2389 + $0x8] sm:$0xff]
        %v2392 = vadd.f32 %v2390, %v2378
        %v2393 = vadd.f32 %v2391, %v2382
        %v2394 = vld [vmem:[%s1296] sm:$0xff]
        %v2395 = vld [vmem:[%s1296 + $0x8] sm:$0xff]
        %v2396 = vxor.u32 %v2387, 2147483648
        %v2397 = vxor.u32 %v2388, 2147483648
        %v2398 = vmul.f32 %v2396, 1.442695
        %v2399 = vpow.pop %v2398
        %v2400 = vmul.f32 %v2397, 1.442695
        %v2401 = vpow.pop %v2400
        %v2402 = vadd.f32 %v2399, 1.0
        %v2403 = vadd.f32 %v2401, 1.0
        %v2404 = vrcp.pop %v2402
        %v2405 = vmul.f32 1.0, %v2404
        %v2406 = vrcp.pop %v2403
        %v2407 = vmul.f32 1.0, %v2406
        %v2408 = vtanh.pop %v2387
        %v2409 = vtanh.pop %v2388
        %v2410 = vmul.f32 %v2405, %v2231
        %v2411 = vmul.f32 %v2407, %v2232
        %2414 = vrot.lane.b32.xlu0 %v2408, 64
        %v2415 = vpop.permute.xlu0 %2414
        %2416 = vrot.lane.b32.xlu0 %v2409, 64
        %v2417 = vpop.permute.xlu0 %2416
        %v2420 = vmul.f32 %v2405, %v2415
        %v2421 = vmul.f32 %v2407, %v2417
        %2424 = vrot.lane.b32.xlu0 %v2420, 32
        %v2425 = vpop.permute.xlu0 %2424
        %2426 = vrot.lane.b32.xlu0 %v2421, 32
        %v2427 = vpop.permute.xlu0 %2426
        %v2430 = vadd.f32 %v2410, %v2425
        %v2431 = vadd.f32 %v2411, %v2427
        %v2432 = vtanh.pop %v2430
        %v2433 = vtanh.pop %v2431
        %2436 = vrot.lane.b32.xlu0 %v2432, 64
        %v2437 = vpop.permute.xlu0 %2436
        %2438 = vrot.lane.b32.xlu0 %v2433, 64
        %v2439 = vpop.permute.xlu0 %2438
        %v2442 = vmul.f32 %v2405, %v2437
        %v2443 = vmul.f32 %v2407, %v2439
        %v2444 = vsub.f32 %v2442, %v2225
        %v2445 = vsub.f32 %v2443, %v2226
        %2447 = vset.pattern.permute.xlu0 0
        %2448 = vperm.xlu0 %2447, %v2394
        %v2449 = vpop.permute.xlu0 %2448
        %2452 = vset.pattern.permute.xlu0 0
        %2453 = vperm.xlu0 %2452, %v2395
        %v2454 = vpop.permute.xlu0 %2453
        %v2456 = vmul.f32 %v2449, %v2444
        %v2457 = vmul.f32 %v2454, %v2445
        %v2458 = vadd.f32 %v2225, %v2456
        %v2459 = vadd.f32 %v2226, %v2457
        %v2460 = vsub.f32 %v2430, %v2231
        %v2461 = vsub.f32 %v2431, %v2232
        %v2462 = vmul.f32 %v2449, %v2460
        %v2463 = vmul.f32 %v2454, %v2461
        %v2464 = vadd.f32 %v2231, %v2462
        %v2465 = vadd.f32 %v2232, %v2463
        %v2466 = vld [vmem:[%s1223] sm:$0xff]
        %v2467 = vld [vmem:[%s1223 + $0x8] sm:$0xff]
        %v2468 = vxor.u32 %v2392, 2147483648
        %v2469 = vxor.u32 %v2393, 2147483648
        %v2470 = vmul.f32 %v2468, 1.442695
        %v2471 = vpow.pop %v2470
        %v2472 = vmul.f32 %v2469, 1.442695
        %v2473 = vpow.pop %v2472
        %v2474 = vadd.f32 %v2471, 1.0
        %v2475 = vadd.f32 %v2473, 1.0
        %v2476 = vrcp.pop %v2474
        %v2477 = vmul.f32 1.0, %v2476
        %v2478 = vrcp.pop %v2475
        %v2479 = vmul.f32 1.0, %v2478
        %v2480 = vtanh.pop %v2392
        %v2481 = vtanh.pop %v2393
        %v2482 = vmul.f32 %v2477, %v2303
        %v2483 = vmul.f32 %v2479, %v2304
        %2486 = vrot.lane.b32.xlu0 %v2480, 64
        %v2487 = vpop.permute.xlu0 %2486
        %2488 = vrot.lane.b32.xlu0 %v2481, 64
        %v2489 = vpop.permute.xlu0 %2488
        %v2492 = vmul.f32 %v2477, %v2487
        %v2493 = vmul.f32 %v2479, %v2489
        %2496 = vrot.lane.b32.xlu0 %v2492, 32
        %v2497 = vpop.permute.xlu0 %2496
        %2498 = vrot.lane.b32.xlu0 %v2493, 32
        %v2499 = vpop.permute.xlu0 %2498
        %v2502 = vadd.f32 %v2482, %v2497
        %v2503 = vadd.f32 %v2483, %v2499
        %v2504 = vtanh.pop %v2502
        %v2505 = vtanh.pop %v2503
        %2508 = vrot.lane.b32.xlu0 %v2504, 64
        %v2509 = vpop.permute.xlu0 %2508
        %2510 = vrot.lane.b32.xlu0 %v2505, 64
        %v2511 = vpop.permute.xlu0 %2510
        %v2514 = vmul.f32 %v2477, %v2509
        %v2515 = vmul.f32 %v2479, %v2511
        %v2516 = vsub.f32 %v2514, %v2297
        %v2517 = vsub.f32 %v2515, %v2298
        %2519 = vset.pattern.permute.xlu0 0
        %2520 = vperm.xlu0 %2519, %v2466
        %v2521 = vpop.permute.xlu0 %2520
        %2524 = vset.pattern.permute.xlu0 0
        %2525 = vperm.xlu0 %2524, %v2467
        %v2526 = vpop.permute.xlu0 %2525
        %v2528 = vmul.f32 %v2521, %v2516
        %v2529 = vmul.f32 %v2526, %v2517
        %v2530 = vadd.f32 %v2297, %v2528
        %v2531 = vadd.f32 %v2298, %v2529
        %v2532 = vsub.f32 %v2502, %v2303
        %v2533 = vsub.f32 %v2503, %v2304
        %v2534 = vmul.f32 %v2521, %v2532
        %v2535 = vmul.f32 %v2526, %v2533
        %v2536 = vadd.f32 %v2303, %v2534
        %v2537 = vadd.f32 %v2304, %v2535
        %v2538 = vpack.c.bf16 %v2459, %v2458
        %2540 = vrot.lane.b32.xlu0 %v2538, 32
        %v2541 = vpop.permute.xlu0 %2540
        %s2543 = scalar_lea.vmem [#allocation4], 48
        %2544 = vst.msk [vmem:[%s2543] sm:$0xff] %vm723, %v2541
        %v2545 = vpack.c.bf16 %v2531, %v2530
        %2547 = vrot.lane.b32.xlu0 %v2545, 32
        %v2548 = vpop.permute.xlu0 %2547
        %s2550 = scalar_lea.vmem [#allocation5], 8
        %2551 = vst.msk [vmem:[%s2550] sm:$0xff] %vm723, %v2548
        %2554 = vrot.lane.b32.xlu0 %v2458, 32
        %v2555 = vpop.permute.xlu0 %2554
        %2556 = vrot.lane.b32.xlu0 %v2459, 32
        %v2557 = vpop.permute.xlu0 %2556
        %2562 = vrot.lane.b32.xlu0 %v2530, 64
        %v2563 = vpop.permute.xlu0 %2562
        %2564 = vrot.lane.b32.xlu0 %v2531, 64
        %v2565 = vpop.permute.xlu0 %2564
        %v2568 = vsel %vm723, %v2555, %v2563
        %v2569 = vsel %vm723, %v2557, %v2565
        %v2570 = vpack.c.bf16 %v2569, %v2568
        %v2572 = vsel %vm942, %v2570, 0
        %2574 = vmatprep.subr.bf16.mxu0 %v927
        %2575 = vmatpush1.bf16.msra.mxu0 %v926
        %2576 = vmatprep.subr.bf16.mxu0 %v929
        %2577 = vmatpush1.bf16.msra.mxu0 %v928
        %2578 = vmatprep.subr.bf16.mxu0 %v931
        %2579 = vmatpush1.bf16.msra.mxu0 %v930
        %2580 = vmatprep.subr.bf16.mxu0 %v933
        %2581 = vmatpush1.bf16.msra.mxu0 %v932
        %2582 = vmatprep.subr.bf16.mxu0 0
        %2583 = vmatpush1.bf16.msra.mxu0 0
        %2584 = vmatprep.subr.bf16.mxu0 0
        %2585 = vmatpush1.bf16.msra.mxu0 0
        %2586 = vmatprep.subr.bf16.mxu0 0
        %2587 = vmatpush1.bf16.msra.mxu0 0
        %2588 = vmatprep.subr.bf16.mxu0 0
        %2589 = vmatpush1.bf16.msra.mxu0 0
        %2590 = vmatprep.subr.bf16.mxu0 0
        %2591 = vmatpush1.bf16.msra.mxu0 0
        %2592 = vmatprep.subr.bf16.mxu0 0
        %2593 = vmatpush1.bf16.msra.mxu0 0
        %2594 = vmatprep.subr.bf16.mxu0 0
        %2595 = vmatpush1.bf16.msra.mxu0 0
        %2596 = vmatprep.subr.bf16.mxu0 0
        %2597 = vmatpush1.bf16.msra.mxu0 0
        %2598 = vmatprep.subr.bf16.mxu0 0
        %2599 = vmatpush1.bf16.msra.mxu0 0
        %2600 = vmatprep.subr.bf16.mxu0 0
        %2601 = vmatpush1.bf16.msra.mxu0 0
        %2602 = vmatprep.subr.bf16.mxu0 0
        %2603 = vmatpush1.bf16.msra.mxu0 0
        %2604 = vmatprep.subr.bf16.mxu0 0
        %2605 = vmatpush1.bf16.msra.mxu0 0
        %2606 = vmatprep.mubr.bf16.mxu0 0
        %2607 = vmatmul.mubr.bf16.gmra.mrb[0].mxu0 %v2572
        %v2608 = vpop.f32.mrb[0].mxu0
        %v2609 = vadd.f32 0.0, %v2608
        %v2610 = vpop.f32.mrb[0].mxu0
        %v2611 = vadd.f32 0.0, %v2610
        %v2612 = vpop.f32.mrb[0].mxu0
        %v2613 = vadd.f32 0.0, %v2612
        %v2614 = vpop.f32.mrb[0].mxu0
        %v2615 = vadd.f32 0.0, %v2614
        %2616 = vdwg.mxu0
        %s2617 = scalar_lea.vmem [#allocation2], 112
        %v2618 = vld [vmem:[%s2617] sm:$0xff]
        %v2619 = vld [vmem:[%s2617 + $0x8] sm:$0xff]
        %v2620 = vadd.f32 %v2618, %v2609
        %v2621 = vadd.f32 %v2619, %v2613
        %v2622 = vld [vmem:[#allocation3] sm:$0xff]
        %v2623 = vld [vmem:[#allocation3 + $0x8] sm:$0xff]
        %v2624 = vadd.f32 %v2622, %v2611
        %v2625 = vadd.f32 %v2623, %v2615
        %v2626 = vld [vmem:[%s1066] sm:$0xff]
        %v2627 = vld [vmem:[%s1066 + $0x8] sm:$0xff]
        %v2628 = vxor.u32 %v2620, 2147483648
        %v2629 = vxor.u32 %v2621, 2147483648
        %v2630 = vmul.f32 %v2628, 1.442695
        %v2631 = vpow.pop %v2630
        %v2632 = vmul.f32 %v2629, 1.442695
        %v2633 = vpow.pop %v2632
        %v2634 = vadd.f32 %v2631, 1.0
        %v2635 = vadd.f32 %v2633, 1.0
        %v2636 = vrcp.pop %v2634
        %v2637 = vmul.f32 1.0, %v2636
        %v2638 = vrcp.pop %v2635
        %v2639 = vmul.f32 1.0, %v2638
        %v2640 = vtanh.pop %v2620
        %v2641 = vtanh.pop %v2621
        %v2642 = vmul.f32 %v2637, %v2464
        %v2643 = vmul.f32 %v2639, %v2465
        %2646 = vrot.lane.b32.xlu0 %v2640, 64
        %v2647 = vpop.permute.xlu0 %2646
        %2648 = vrot.lane.b32.xlu0 %v2641, 64
        %v2649 = vpop.permute.xlu0 %2648
        %v2652 = vmul.f32 %v2637, %v2647
        %v2653 = vmul.f32 %v2639, %v2649
        %2656 = vrot.lane.b32.xlu0 %v2652, 32
        %v2657 = vpop.permute.xlu0 %2656
        %2658 = vrot.lane.b32.xlu0 %v2653, 32
        %v2659 = vpop.permute.xlu0 %2658
        %v2662 = vadd.f32 %v2642, %v2657
        %v2663 = vadd.f32 %v2643, %v2659
        %v2664 = vtanh.pop %v2662
        %v2665 = vtanh.pop %v2663
        %2668 = vrot.lane.b32.xlu0 %v2664, 64
        %v2669 = vpop.permute.xlu0 %2668
        %2670 = vrot.lane.b32.xlu0 %v2665, 64
        %v2671 = vpop.permute.xlu0 %2670
        %v2674 = vmul.f32 %v2637, %v2669
        %v2675 = vmul.f32 %v2639, %v2671
        %v2676 = vsub.f32 %v2674, %v2458
        %v2677 = vsub.f32 %v2675, %v2459
        %2679 = vset.pattern.permute.xlu0 0
        %2680 = vperm.xlu0 %2679, %v2626
        %v2681 = vpop.permute.xlu0 %2680
        %2684 = vset.pattern.permute.xlu0 0
        %2685 = vperm.xlu0 %2684, %v2627
        %v2686 = vpop.permute.xlu0 %2685
        %v2688 = vmul.f32 %v2681, %v2676
        %v2689 = vmul.f32 %v2686, %v2677
        %v2690 = vadd.f32 %v2458, %v2688
        %v2691 = vadd.f32 %v2459, %v2689
        %v2692 = vld [vmem:[%s605] sm:$0xff]
        %v2693 = vld [vmem:[%s605 + $0x8] sm:$0xff]
        %v2694 = vxor.u32 %v2624, 2147483648
        %v2695 = vxor.u32 %v2625, 2147483648
        %v2696 = vmul.f32 %v2694, 1.442695
        %v2697 = vpow.pop %v2696
        %v2698 = vmul.f32 %v2695, 1.442695
        %v2699 = vpow.pop %v2698
        %v2700 = vadd.f32 %v2697, 1.0
        %v2701 = vadd.f32 %v2699, 1.0
        %v2702 = vrcp.pop %v2700
        %v2703 = vmul.f32 1.0, %v2702
        %v2704 = vrcp.pop %v2701
        %v2705 = vmul.f32 1.0, %v2704
        %v2706 = vtanh.pop %v2624
        %v2707 = vtanh.pop %v2625
        %v2708 = vmul.f32 %v2703, %v2536
        %v2709 = vmul.f32 %v2705, %v2537
        %2712 = vrot.lane.b32.xlu0 %v2706, 64
        %v2713 = vpop.permute.xlu0 %2712
        %2714 = vrot.lane.b32.xlu0 %v2707, 64
        %v2715 = vpop.permute.xlu0 %2714
        %v2718 = vmul.f32 %v2703, %v2713
        %v2719 = vmul.f32 %v2705, %v2715
        %2722 = vrot.lane.b32.xlu0 %v2718, 32
        %v2723 = vpop.permute.xlu0 %2722
        %2724 = vrot.lane.b32.xlu0 %v2719, 32
        %v2725 = vpop.permute.xlu0 %2724
        %v2728 = vadd.f32 %v2708, %v2723
        %v2729 = vadd.f32 %v2709, %v2725
        %v2730 = vtanh.pop %v2728
        %v2731 = vtanh.pop %v2729
        %2734 = vrot.lane.b32.xlu0 %v2730, 64
        %v2735 = vpop.permute.xlu0 %2734
        %2736 = vrot.lane.b32.xlu0 %v2731, 64
        %v2737 = vpop.permute.xlu0 %2736
        %v2740 = vmul.f32 %v2703, %v2735
        %v2741 = vmul.f32 %v2705, %v2737
        %v2742 = vsub.f32 %v2740, %v2530
        %v2743 = vsub.f32 %v2741, %v2531
        %2745 = vset.pattern.permute.xlu0 0
        %2746 = vperm.xlu0 %2745, %v2692
        %v2747 = vpop.permute.xlu0 %2746
        %2750 = vset.pattern.permute.xlu0 0
        %2751 = vperm.xlu0 %2750, %v2693
        %v2752 = vpop.permute.xlu0 %2751
        %v2754 = vmul.f32 %v2747, %v2742
        %v2755 = vmul.f32 %v2752, %v2743
        %v2756 = vadd.f32 %v2530, %v2754
        %v2757 = vadd.f32 %v2531, %v2755
        %v2758 = vpack.c.bf16 %v2691, %v2690
        %2760 = vrot.lane.b32.xlu0 %v2758, 32
        %v2761 = vpop.permute.xlu0 %2760
        %s2763 = scalar_lea.vmem [#allocation4], 56
        %2764 = vst.msk [vmem:[%s2763] sm:$0xff] %vm723, %v2761
        %v2765 = vpack.c.bf16 %v2757, %v2756
        %2767 = vrot.lane.b32.xlu0 %v2765, 32
        %v2768 = vpop.permute.xlu0 %2767
        %2770 = vst.msk [vmem:[#allocation5] sm:$0xff] %vm723, %v2768
        %v2771 = vld [vmem:[#allocation4] sm:$0xff]
        %v2772 = vld [vmem:[#allocation4 + $0x8] sm:$0xff]
        %v2773 = vld [vmem:[#allocation4 + $0x10] sm:$0xff]
        %v2774 = vld [vmem:[#allocation4 + $0x18] sm:$0xff]
        %v2775 = vld [vmem:[#allocation4 + $0x20] sm:$0xff]
        %v2776 = vld [vmem:[#allocation4 + $0x28] sm:$0xff]
        %v2777 = vld [vmem:[#allocation4 + $0x30] sm:$0xff]
        %v2778 = vld [vmem:[#allocation4 + $0x38] sm:$0xff]
        %v2779 = vunpack.c.l.bf16 %v2771
        %v2780 = vunpack.c.h.bf16 %v2771
        %v2781 = vunpack.c.l.bf16 %v2772
        %v2782 = vunpack.c.h.bf16 %v2772
        %v2783 = vunpack.c.l.bf16 %v2773
        %v2784 = vunpack.c.h.bf16 %v2773
        %v2785 = vunpack.c.l.bf16 %v2774
        %v2786 = vunpack.c.h.bf16 %v2774
        %v2787 = vunpack.c.l.bf16 %v2775
        %v2788 = vunpack.c.h.bf16 %v2775
        %v2789 = vunpack.c.l.bf16 %v2776
        %v2790 = vunpack.c.h.bf16 %v2776
        %v2791 = vunpack.c.l.bf16 %v2777
        %v2792 = vunpack.c.h.bf16 %v2777
        %v2793 = vunpack.c.l.bf16 %v2778
        %v2794 = vunpack.c.h.bf16 %v2778
        %v2795 = vld [vmem:[#allocation5] sm:$0xff]
        %v2796 = vld [vmem:[#allocation5 + $0x8] sm:$0xff]
        %v2797 = vld [vmem:[#allocation5 + $0x10] sm:$0xff]
        %v2798 = vld [vmem:[#allocation5 + $0x18] sm:$0xff]
        %v2799 = vld [vmem:[#allocation5 + $0x20] sm:$0xff]
        %v2800 = vld [vmem:[#allocation5 + $0x28] sm:$0xff]
        %v2801 = vld [vmem:[#allocation5 + $0x30] sm:$0xff]
        %v2802 = vld [vmem:[#allocation5 + $0x38] sm:$0xff]
        %v2803 = vunpack.c.l.bf16 %v2795
        %v2804 = vunpack.c.h.bf16 %v2795
        %v2805 = vunpack.c.l.bf16 %v2796
        %v2806 = vunpack.c.h.bf16 %v2796
        %v2807 = vunpack.c.l.bf16 %v2797
        %v2808 = vunpack.c.h.bf16 %v2797
        %v2809 = vunpack.c.l.bf16 %v2798
        %v2810 = vunpack.c.h.bf16 %v2798
        %v2811 = vunpack.c.l.bf16 %v2799
        %v2812 = vunpack.c.h.bf16 %v2799
        %v2813 = vunpack.c.l.bf16 %v2800
        %v2814 = vunpack.c.h.bf16 %v2800
        %v2815 = vunpack.c.l.bf16 %v2801
        %v2816 = vunpack.c.h.bf16 %v2801
        %v2817 = vunpack.c.l.bf16 %v2802
        %v2818 = vunpack.c.h.bf16 %v2802
        %v2819 = vld [vmem:[%s612] sm:$0xff]
        %v2820 = vld [vmem:[%s612 + $0x8] sm:$0xff]
        %v2821 = vld [vmem:[%s612 + $0x10] sm:$0xff]
        %v2822 = vld [vmem:[%s612 + $0x18] sm:$0xff]
        %v2823 = vld [vmem:[%s612 + $0x20] sm:$0xff]
        %v2824 = vld [vmem:[%s612 + $0x28] sm:$0xff]
        %v2825 = vld [vmem:[%s612 + $0x30] sm:$0xff]
        %v2826 = vld [vmem:[%s612 + $0x38] sm:$0xff]
        %v2827 = vld [vmem:[%s612 + $0x40] sm:$0xff]
        %v2828 = vld [vmem:[%s612 + $0x48] sm:$0xff]
        %v2829 = vld [vmem:[%s612 + $0x50] sm:$0xff]
        %v2830 = vld [vmem:[%s612 + $0x58] sm:$0xff]
        %v2831 = vld [vmem:[%s612 + $0x60] sm:$0xff]
        %v2832 = vld [vmem:[%s612 + $0x68] sm:$0xff]
        %v2833 = vld [vmem:[%s612 + $0x70] sm:$0xff]
        %v2834 = vld [vmem:[%s612 + $0x78] sm:$0xff]
        %v2835 = vld [vmem:[%s605] sm:$0xff]
        %v2836 = vld [vmem:[%s605 + $0x8] sm:$0xff]
        %v2837 = vld [vmem:[%s605 + $0x10] sm:$0xff]
        %v2838 = vld [vmem:[%s605 + $0x18] sm:$0xff]
        %v2839 = vld [vmem:[%s605 + $0x20] sm:$0xff]
        %v2840 = vld [vmem:[%s605 + $0x28] sm:$0xff]
        %v2841 = vld [vmem:[%s605 + $0x30] sm:$0xff]
        %v2842 = vld [vmem:[%s605 + $0x38] sm:$0xff]
        %v2843 = vld [vmem:[%s605 + $0x40] sm:$0xff]
        %v2844 = vld [vmem:[%s605 + $0x48] sm:$0xff]
        %v2845 = vld [vmem:[%s605 + $0x50] sm:$0xff]
        %v2846 = vld [vmem:[%s605 + $0x58] sm:$0xff]
        %v2847 = vld [vmem:[%s605 + $0x60] sm:$0xff]
        %v2848 = vld [vmem:[%s605 + $0x68] sm:$0xff]
        %v2849 = vld [vmem:[%s605 + $0x70] sm:$0xff]
        %v2850 = vld [vmem:[%s605 + $0x78] sm:$0xff]
        %vm2851 = vcmask 7168
        %v2852 = vsel %vm2851, %v2819, 0.0
        %v2853 = vsel %vm2851, %v2821, 0.0
        %v2854 = vadd.f32 %v2852, %v2853
        %v2855 = vsel %vm2851, %v2823, 0.0
        %v2856 = vadd.f32 %v2854, %v2855
        %v2857 = vsel %vm2851, %v2825, 0.0
        %v2858 = vadd.f32 %v2856, %v2857
        %v2859 = vsel %vm2851, %v2827, 0.0
        %v2860 = vadd.f32 %v2858, %v2859
        %v2861 = vsel %vm2851, %v2829, 0.0
        %v2862 = vadd.f32 %v2860, %v2861
        %v2863 = vsel %vm2851, %v2831, 0.0
        %v2864 = vadd.f32 %v2862, %v2863
        %v2865 = vsel %vm2851, %v2833, 0.0
        %v2866 = vadd.f32 %v2864, %v2865
        %v2867 = vsel %vm2851, %v2820, 0.0
        %v2868 = vsel %vm2851, %v2822, 0.0
        %v2869 = vadd.f32 %v2867, %v2868
        %v2870 = vsel %vm2851, %v2824, 0.0
        %v2871 = vadd.f32 %v2869, %v2870
        %v2872 = vsel %vm2851, %v2826, 0.0
        %v2873 = vadd.f32 %v2871, %v2872
        %v2874 = vsel %vm2851, %v2828, 0.0
        %v2875 = vadd.f32 %v2873, %v2874
        %v2876 = vsel %vm2851, %v2830, 0.0
        %v2877 = vadd.f32 %v2875, %v2876
        %v2878 = vsel %vm2851, %v2832, 0.0
        %v2879 = vadd.f32 %v2877, %v2878
        %v2880 = vsel %vm2851, %v2834, 0.0
        %v2881 = vadd.f32 %v2879, %v2880
        %v2882 = vmax.f32 %v2866, 1.0
        %v2883 = vmax.f32 %v2881, 1.0
        %v2884 = vrcp.pop %v2882
        %v2885 = vmul.f32 1.0, %v2884
        %v2886 = vrcp.pop %v2883
        %v2887 = vmul.f32 1.0, %v2886
        %2889 = vset.pattern.permute.xlu0 0
        %2890 = vperm.xlu0 %2889, %v2819
        %v2891 = vpop.permute.xlu0 %2890
        %2894 = vset.pattern.permute.xlu0 0
        %2895 = vperm.xlu0 %2894, %v2820
        %v2896 = vpop.permute.xlu0 %2895
        %2899 = vset.pattern.permute.xlu0 0
        %2900 = vperm.xlu0 %2899, %v2821
        %v2901 = vpop.permute.xlu0 %2900
        %2904 = vset.pattern.permute.xlu0 0
        %2905 = vperm.xlu0 %2904, %v2822
        %v2906 = vpop.permute.xlu0 %2905
        %2909 = vset.pattern.permute.xlu0 0
        %2910 = vperm.xlu0 %2909, %v2823
        %v2911 = vpop.permute.xlu0 %2910
        %2914 = vset.pattern.permute.xlu0 0
        %2915 = vperm.xlu0 %2914, %v2824
        %v2916 = vpop.permute.xlu0 %2915
        %2919 = vset.pattern.permute.xlu0 0
        %2920 = vperm.xlu0 %2919, %v2825
        %v2921 = vpop.permute.xlu0 %2920
        %2924 = vset.pattern.permute.xlu0 0
        %2925 = vperm.xlu0 %2924, %v2826
        %v2926 = vpop.permute.xlu0 %2925
        %2929 = vset.pattern.permute.xlu0 0
        %2930 = vperm.xlu0 %2929, %v2827
        %v2931 = vpop.permute.xlu0 %2930
        %2934 = vset.pattern.permute.xlu0 0
        %2935 = vperm.xlu0 %2934, %v2828
        %v2936 = vpop.permute.xlu0 %2935
        %2939 = vset.pattern.permute.xlu0 0
        %2940 = vperm.xlu0 %2939, %v2829
        %v2941 = vpop.permute.xlu0 %2940
        %2944 = vset.pattern.permute.xlu0 0
        %2945 = vperm.xlu0 %2944, %v2830
        %v2946 = vpop.permute.xlu0 %2945
        %2949 = vset.pattern.permute.xlu0 0
        %2950 = vperm.xlu0 %2949, %v2831
        %v2951 = vpop.permute.xlu0 %2950
        %2954 = vset.pattern.permute.xlu0 0
        %2955 = vperm.xlu0 %2954, %v2832
        %v2956 = vpop.permute.xlu0 %2955
        %2959 = vset.pattern.permute.xlu0 0
        %2960 = vperm.xlu0 %2959, %v2833
        %v2961 = vpop.permute.xlu0 %2960
        %2964 = vset.pattern.permute.xlu0 0
        %2965 = vperm.xlu0 %2964, %v2834
        %v2966 = vpop.permute.xlu0 %2965
        %v2968 = vmul.f32 %v2779, %v2891
        %v2969 = vmul.f32 %v2780, %v2896
        %v2970 = vmul.f32 %v2781, %v2901
        %v2971 = vmul.f32 %v2782, %v2906
        %v2972 = vmul.f32 %v2783, %v2911
        %v2973 = vmul.f32 %v2784, %v2916
        %v2974 = vmul.f32 %v2785, %v2921
        %v2975 = vmul.f32 %v2786, %v2926
        %v2976 = vmul.f32 %v2787, %v2931
        %v2977 = vmul.f32 %v2788, %v2936
        %v2978 = vmul.f32 %v2789, %v2941
        %v2979 = vmul.f32 %v2790, %v2946
        %v2980 = vmul.f32 %v2791, %v2951
        %v2981 = vmul.f32 %v2792, %v2956
        %v2982 = vmul.f32 %v2793, %v2961
        %v2983 = vmul.f32 %v2794, %v2966
        %v2984 = vsel %vm723, %v2968, 0.0
        %v2985 = vsel %vm723, %v2970, 0.0
        %v2986 = vadd.f32 %v2984, %v2985
        %v2987 = vsel %vm723, %v2972, 0.0
        %v2988 = vadd.f32 %v2986, %v2987
        %v2989 = vsel %vm723, %v2974, 0.0
        %v2990 = vadd.f32 %v2988, %v2989
        %v2991 = vsel %vm723, %v2976, 0.0
        %v2992 = vadd.f32 %v2990, %v2991
        %v2993 = vsel %vm723, %v2978, 0.0
        %v2994 = vadd.f32 %v2992, %v2993
        %v2995 = vsel %vm723, %v2980, 0.0
        %v2996 = vadd.f32 %v2994, %v2995
        %v2997 = vsel %vm723, %v2982, 0.0
        %v2998 = vadd.f32 %v2996, %v2997
        %v2999 = vsel %vm723, %v2969, 0.0
        %v3000 = vsel %vm723, %v2971, 0.0
        %v3001 = vadd.f32 %v2999, %v3000
        %v3002 = vsel %vm723, %v2973, 0.0
        %v3003 = vadd.f32 %v3001, %v3002
        %v3004 = vsel %vm723, %v2975, 0.0
        %v3005 = vadd.f32 %v3003, %v3004
        %v3006 = vsel %vm723, %v2977, 0.0
        %v3007 = vadd.f32 %v3005, %v3006
        %v3008 = vsel %vm723, %v2979, 0.0
        %v3009 = vadd.f32 %v3007, %v3008
        %v3010 = vsel %vm723, %v2981, 0.0
        %v3011 = vadd.f32 %v3009, %v3010
        %v3012 = vsel %vm723, %v2983, 0.0
        %v3013 = vadd.f32 %v3011, %v3012
        %3015 = vset.pattern.permute.xlu0 0
        %3016 = vperm.xlu0 %3015, %v2885
        %v3017 = vpop.permute.xlu0 %3016
        %3020 = vset.pattern.permute.xlu0 0
        %3021 = vperm.xlu0 %3020, %v2887
        %v3022 = vpop.permute.xlu0 %3021
        %v3024 = vmul.f32 %v2998, %v3017
        %v3025 = vmul.f32 %v3013, %v3022
        %v3026 = vmul.f32 %v2803, %v2891
        %v3027 = vmul.f32 %v2804, %v2896
        %v3028 = vmul.f32 %v2805, %v2901
        %v3029 = vmul.f32 %v2806, %v2906
        %v3030 = vmul.f32 %v2807, %v2911
        %v3031 = vmul.f32 %v2808, %v2916
        %v3032 = vmul.f32 %v2809, %v2921
        %v3033 = vmul.f32 %v2810, %v2926
        %v3034 = vmul.f32 %v2811, %v2931
        %v3035 = vmul.f32 %v2812, %v2936
        %v3036 = vmul.f32 %v2813, %v2941
        %v3037 = vmul.f32 %v2814, %v2946
        %v3038 = vmul.f32 %v2815, %v2951
        %v3039 = vmul.f32 %v2816, %v2956
        %v3040 = vmul.f32 %v2817, %v2961
        %v3041 = vmul.f32 %v2818, %v2966
        %v3042 = vsel %vm723, %v3026, 0.0
        %v3043 = vsel %vm723, %v3028, 0.0
        %v3044 = vadd.f32 %v3042, %v3043
        %v3045 = vsel %vm723, %v3030, 0.0
        %v3046 = vadd.f32 %v3044, %v3045
        %v3047 = vsel %vm723, %v3032, 0.0
        %v3048 = vadd.f32 %v3046, %v3047
        %v3049 = vsel %vm723, %v3034, 0.0
        %v3050 = vadd.f32 %v3048, %v3049
        %v3051 = vsel %vm723, %v3036, 0.0
        %v3052 = vadd.f32 %v3050, %v3051
        %v3053 = vsel %vm723, %v3038, 0.0
        %v3054 = vadd.f32 %v3052, %v3053
        %v3055 = vsel %vm723, %v3040, 0.0
        %v3056 = vadd.f32 %v3054, %v3055
        %v3057 = vsel %vm723, %v3027, 0.0
        %v3058 = vsel %vm723, %v3029, 0.0
        %v3059 = vadd.f32 %v3057, %v3058
        %v3060 = vsel %vm723, %v3031, 0.0
        %v3061 = vadd.f32 %v3059, %v3060
        %v3062 = vsel %vm723, %v3033, 0.0
        %v3063 = vadd.f32 %v3061, %v3062
        %v3064 = vsel %vm723, %v3035, 0.0
        %v3065 = vadd.f32 %v3063, %v3064
        %v3066 = vsel %vm723, %v3037, 0.0
        %v3067 = vadd.f32 %v3065, %v3066
        %v3068 = vsel %vm723, %v3039, 0.0
        %v3069 = vadd.f32 %v3067, %v3068
        %v3070 = vsel %vm723, %v3041, 0.0
        %v3071 = vadd.f32 %v3069, %v3070
        %v3072 = vmul.f32 %v3056, %v3017
        %v3073 = vmul.f32 %v3071, %v3022
        %3076 = vrot.lane.b32.xlu0 %v3072, 32
        %v3077 = vpop.permute.xlu0 %3076
        %3078 = vrot.lane.b32.xlu0 %v3073, 32
        %v3079 = vpop.permute.xlu0 %3078
        %v3082 = vsel %vm723, %v3024, %v3077
        %v3083 = vsel %vm723, %v3025, %v3079
        %v3084 = vpack.c.bf16 %v3083, %v3082
        %v3085 = vld [vmem:[%s6] sm:$0xff]
        %v3086 = vld [vmem:[%s6 + $0x8] sm:$0xff]
        %v3087 = vld [vmem:[%s6 + $0x10] sm:$0xff]
        %v3088 = vld [vmem:[%s6 + $0x18] sm:$0xff]
        %v3089 = vld [vmem:[%s6 + $0x20] sm:$0xff]
        %v3090 = vld [vmem:[%s6 + $0x28] sm:$0xff]
        %v3091 = vld [vmem:[%s6 + $0x30] sm:$0xff]
        %v3092 = vld [vmem:[%s6 + $0x38] sm:$0xff]
        %v3101 = vunpack.c.l.b16 %v3085
        %v3102 = vunpack.c.h.b16 %v3085
        %v3103 = vunpack.c.l.b16 %v3086
        %v3104 = vunpack.c.h.b16 %v3086
        %v3105 = vunpack.c.l.b16 %v3087
        %v3106 = vunpack.c.h.b16 %v3087
        %v3107 = vunpack.c.l.b16 %v3088
        %v3108 = vunpack.c.h.b16 %v3088
        %v3109 = vunpack.c.l.b16 %v3089
        %v3110 = vunpack.c.h.b16 %v3089
        %v3111 = vunpack.c.l.b16 %v3090
        %v3112 = vunpack.c.h.b16 %v3090
        %v3113 = vunpack.c.l.b16 %v3091
        %v3114 = vunpack.c.h.b16 %v3091
        %v3115 = vunpack.c.l.b16 %v3092
        %v3116 = vunpack.c.h.b16 %v3092
        %v3117 = vpack.c.b16 %v3103, %v3101
        %v3118 = vpack.c.b16 %v3104, %v3102
        %v3119 = vpack.c.b16 %v3107, %v3105
        %v3120 = vpack.c.b16 %v3108, %v3106
        %v3121 = vpack.c.b16 %v3111, %v3109
        %v3122 = vpack.c.b16 %v3112, %v3110
        %v3123 = vpack.c.b16 %v3115, %v3113
        %v3124 = vpack.c.b16 %v3116, %v3114
        %v3134 = vsel %vm942, %v3084, 0
        %3136 = vmatprep.subr.bf16.mxu0 %v3118
        %3137 = vmatpush1.bf16.msra.mxu0 %v3117
        %3138 = vmatprep.subr.bf16.mxu0 %v3120
        %3139 = vmatpush1.bf16.msra.mxu0 %v3119
        %3140 = vmatprep.subr.bf16.mxu0 %v3122
        %3141 = vmatpush1.bf16.msra.mxu0 %v3121
        %3142 = vmatprep.subr.bf16.mxu0 %v3124
        %3143 = vmatpush1.bf16.msra.mxu0 %v3123
        %3144 = vmatprep.subr.bf16.mxu0 0
        %3145 = vmatpush1.bf16.msra.mxu0 0
        %3146 = vmatprep.subr.bf16.mxu0 0
        %3147 = vmatpush1.bf16.msra.mxu0 0
        %3148 = vmatprep.subr.bf16.mxu0 0
        %3149 = vmatpush1.bf16.msra.mxu0 0
        %3150 = vmatprep.subr.bf16.mxu0 0
        %3151 = vmatpush1.bf16.msra.mxu0 0
        %3152 = vmatprep.subr.bf16.mxu0 0
        %3153 = vmatpush1.bf16.msra.mxu0 0
        %3154 = vmatprep.subr.bf16.mxu0 0
        %3155 = vmatpush1.bf16.msra.mxu0 0
        %3156 = vmatprep.subr.bf16.mxu0 0
        %3157 = vmatpush1.bf16.msra.mxu0 0
        %3158 = vmatprep.subr.bf16.mxu0 0
        %3159 = vmatpush1.bf16.msra.mxu0 0
        %3160 = vmatprep.subr.bf16.mxu0 0
        %3161 = vmatpush1.bf16.msra.mxu0 0
        %3162 = vmatprep.subr.bf16.mxu0 0
        %3163 = vmatpush1.bf16.msra.mxu0 0
        %3164 = vmatprep.subr.bf16.mxu0 0
        %3165 = vmatpush1.bf16.msra.mxu0 0
        %3166 = vmatprep.subr.bf16.mxu0 0
        %3167 = vmatpush1.bf16.msra.mxu0 0
        %3168 = vmatprep.mubr.bf16.mxu0 0
        %3169 = vmatmul.mubr.bf16.gmra.mrb[0].mxu0 %v3134
        %v3170 = vpop.f32.mrb[0].mxu0
        %v3171 = vadd.f32 0.0, %v3170
        %v3172 = vpop.f32.mrb[0].mxu0
        %v3173 = vadd.f32 0.0, %v3172
        %v3174 = vpop.f32.mrb[0].mxu0
        %v3175 = vadd.f32 0.0, %v3174
        %v3176 = vpop.f32.mrb[0].mxu0
        %v3177 = vadd.f32 0.0, %v3176
        %3178 = vdwg.mxu0
        %v3179 = vsub.f32 1.0, %v2835
        %v3180 = vsub.f32 1.0, %v2836
        %v3181 = vsub.f32 1.0, %v2837
        %v3182 = vsub.f32 1.0, %v2838
        %v3183 = vsub.f32 1.0, %v2839
        %v3184 = vsub.f32 1.0, %v2840
        %v3185 = vsub.f32 1.0, %v2841
        %v3186 = vsub.f32 1.0, %v2842
        %v3187 = vsub.f32 1.0, %v2843
        %v3188 = vsub.f32 1.0, %v2844
        %v3189 = vsub.f32 1.0, %v2845
        %v3190 = vsub.f32 1.0, %v2846
        %v3191 = vsub.f32 1.0, %v2847
        %v3192 = vsub.f32 1.0, %v2848
        %v3193 = vsub.f32 1.0, %v2849
        %v3194 = vsub.f32 1.0, %v2850
        %v3195 = vmul.f32 %v3179, -1e+09
        %v3196 = vmul.f32 %v3180, -1e+09
        %v3197 = vmul.f32 %v3181, -1e+09
        %v3198 = vmul.f32 %v3182, -1e+09
        %v3199 = vmul.f32 %v3183, -1e+09
        %v3200 = vmul.f32 %v3184, -1e+09
        %v3201 = vmul.f32 %v3185, -1e+09
        %v3202 = vmul.f32 %v3186, -1e+09
        %v3203 = vmul.f32 %v3187, -1e+09
        %v3204 = vmul.f32 %v3188, -1e+09
        %v3205 = vmul.f32 %v3189, -1e+09
        %v3206 = vmul.f32 %v3190, -1e+09
        %v3207 = vmul.f32 %v3191, -1e+09
        %v3208 = vmul.f32 %v3192, -1e+09
        %v3209 = vmul.f32 %v3193, -1e+09
        %v3210 = vmul.f32 %v3194, -1e+09
        %v3211 = vmul.f32 %v2779, %v3171
        %v3212 = vmul.f32 %v2780, %v3175
        %v3213 = vmul.f32 %v2781, %v3171
        %v3214 = vmul.f32 %v2782, %v3175
        %v3215 = vmul.f32 %v2783, %v3171
        %v3216 = vmul.f32 %v2784, %v3175
        %v3217 = vmul.f32 %v2785, %v3171
        %v3218 = vmul.f32 %v2786, %v3175
        %v3219 = vmul.f32 %v2787, %v3171
        %v3220 = vmul.f32 %v2788, %v3175
        %v3221 = vmul.f32 %v2789, %v3171
        %v3222 = vmul.f32 %v2790, %v3175
        %v3223 = vmul.f32 %v2791, %v3171
        %v3224 = vmul.f32 %v2792, %v3175
        %v3225 = vmul.f32 %v2793, %v3171
        %v3226 = vmul.f32 %v2794, %v3175
        %v3227 = vsel %vm723, %v3211, 0.0
        %3228 = vadd.xlane.f32.xlu0 %v3227
        %v3229 = vpop.xlane.xlu0 %3228
        %v3230 = vsel %vm723, %v3212, 0.0
        %3231 = vadd.xlane.f32.xlu0 %v3230
        %v3232 = vpop.xlane.xlu0 %3231
        %v3233 = vsel %vm723, %v3213, 0.0
        %3234 = vadd.xlane.f32.xlu0 %v3233
        %v3235 = vpop.xlane.xlu0 %3234
        %v3236 = vsel %vm723, %v3214, 0.0
        %3237 = vadd.xlane.f32.xlu0 %v3236
        %v3238 = vpop.xlane.xlu0 %3237
        %v3239 = vsel %vm723, %v3215, 0.0
        %3240 = vadd.xlane.f32.xlu0 %v3239
        %v3241 = vpop.xlane.xlu0 %3240
        %v3242 = vsel %vm723, %v3216, 0.0
        %3243 = vadd.xlane.f32.xlu0 %v3242
        %v3244 = vpop.xlane.xlu0 %3243
        %v3245 = vsel %vm723, %v3217, 0.0
        %3246 = vadd.xlane.f32.xlu0 %v3245
        %v3247 = vpop.xlane.xlu0 %3246
        %v3248 = vsel %vm723, %v3218, 0.0
        %3249 = vadd.xlane.f32.xlu0 %v3248
        %v3250 = vpop.xlane.xlu0 %3249
        %v3251 = vsel %vm723, %v3219, 0.0
        %3252 = vadd.xlane.f32.xlu0 %v3251
        %v3253 = vpop.xlane.xlu0 %3252
        %v3254 = vsel %vm723, %v3220, 0.0
        %3255 = vadd.xlane.f32.xlu0 %v3254
        %v3256 = vpop.xlane.xlu0 %3255
        %v3257 = vsel %vm723, %v3221, 0.0
        %3258 = vadd.xlane.f32.xlu0 %v3257
        %v3259 = vpop.xlane.xlu0 %3258
        %v3260 = vsel %vm723, %v3222, 0.0
        %3261 = vadd.xlane.f32.xlu0 %v3260
        %v3262 = vpop.xlane.xlu0 %3261
        %v3263 = vsel %vm723, %v3223, 0.0
        %3264 = vadd.xlane.f32.xlu0 %v3263
        %v3265 = vpop.xlane.xlu0 %3264
        %v3266 = vsel %vm723, %v3224, 0.0
        %3267 = vadd.xlane.f32.xlu0 %v3266
        %v3268 = vpop.xlane.xlu0 %3267
        %v3269 = vsel %vm723, %v3225, 0.0
        %3270 = vadd.xlane.f32.xlu0 %v3269
        %v3271 = vpop.xlane.xlu0 %3270
        %v3272 = vsel %vm723, %v3226, 0.0
        %3273 = vadd.xlane.f32.xlu0 %v3272
        %v3274 = vpop.xlane.xlu0 %3273
        %3277 = vrot.lane.b32.xlu0 %v3171, 32
        %v3278 = vpop.permute.xlu0 %3277
        %3279 = vrot.lane.b32.xlu0 %v3175, 32
        %v3280 = vpop.permute.xlu0 %3279
        %v3283 = vmul.f32 %v2803, %v3278
        %v3284 = vmul.f32 %v2804, %v3280
        %v3285 = vmul.f32 %v2805, %v3278
        %v3286 = vmul.f32 %v2806, %v3280
        %v3287 = vmul.f32 %v2807, %v3278
        %v3288 = vmul.f32 %v2808, %v3280
        %v3289 = vmul.f32 %v2809, %v3278
        %v3290 = vmul.f32 %v2810, %v3280
        %v3291 = vmul.f32 %v2811, %v3278
        %v3292 = vmul.f32 %v2812, %v3280
        %v3293 = vmul.f32 %v2813, %v3278
        %v3294 = vmul.f32 %v2814, %v3280
        %v3295 = vmul.f32 %v2815, %v3278
        %v3296 = vmul.f32 %v2816, %v3280
        %v3297 = vmul.f32 %v2817, %v3278
        %v3298 = vmul.f32 %v2818, %v3280
        %v3299 = vsel %vm723, %v3283, 0.0
        %3300 = vadd.xlane.f32.xlu0 %v3299
        %v3301 = vpop.xlane.xlu0 %3300
        %v3302 = vsel %vm723, %v3284, 0.0
        %3303 = vadd.xlane.f32.xlu0 %v3302
        %v3304 = vpop.xlane.xlu0 %3303
        %v3305 = vsel %vm723, %v3285, 0.0
        %3306 = vadd.xlane.f32.xlu0 %v3305
        %v3307 = vpop.xlane.xlu0 %3306
        %v3308 = vsel %vm723, %v3286, 0.0
        %3309 = vadd.xlane.f32.xlu0 %v3308
        %v3310 = vpop.xlane.xlu0 %3309
        %v3311 = vsel %vm723, %v3287, 0.0
        %3312 = vadd.xlane.f32.xlu0 %v3311
        %v3313 = vpop.xlane.xlu0 %3312
        %v3314 = vsel %vm723, %v3288, 0.0
        %3315 = vadd.xlane.f32.xlu0 %v3314
        %v3316 = vpop.xlane.xlu0 %3315
        %v3317 = vsel %vm723, %v3289, 0.0
        %3318 = vadd.xlane.f32.xlu0 %v3317
        %v3319 = vpop.xlane.xlu0 %3318
        %v3320 = vsel %vm723, %v3290, 0.0
        %3321 = vadd.xlane.f32.xlu0 %v3320
        %v3322 = vpop.xlane.xlu0 %3321
        %v3323 = vsel %vm723, %v3291, 0.0
        %3324 = vadd.xlane.f32.xlu0 %v3323
        %v3325 = vpop.xlane.xlu0 %3324
        %v3326 = vsel %vm723, %v3292, 0.0
        %3327 = vadd.xlane.f32.xlu0 %v3326
        %v3328 = vpop.xlane.xlu0 %3327
        %v3329 = vsel %vm723, %v3293, 0.0
        %3330 = vadd.xlane.f32.xlu0 %v3329
        %v3331 = vpop.xlane.xlu0 %3330
        %v3332 = vsel %vm723, %v3294, 0.0
        %3333 = vadd.xlane.f32.xlu0 %v3332
        %v3334 = vpop.xlane.xlu0 %3333
        %v3335 = vsel %vm723, %v3295, 0.0
        %3336 = vadd.xlane.f32.xlu0 %v3335
        %v3337 = vpop.xlane.xlu0 %3336
        %v3338 = vsel %vm723, %v3296, 0.0
        %3339 = vadd.xlane.f32.xlu0 %v3338
        %v3340 = vpop.xlane.xlu0 %3339
        %v3341 = vsel %vm723, %v3297, 0.0
        %3342 = vadd.xlane.f32.xlu0 %v3341
        %v3343 = vpop.xlane.xlu0 %3342
        %v3344 = vsel %vm723, %v3298, 0.0
        %3345 = vadd.xlane.f32.xlu0 %v3344
        %v3346 = vpop.xlane.xlu0 %3345
        %v3347 = vadd.f32 %v3229, %v3301
        %v3348 = vadd.f32 %v3232, %v3304
        %v3349 = vadd.f32 %v3235, %v3307
        %v3350 = vadd.f32 %v3238, %v3310
        %v3351 = vadd.f32 %v3241, %v3313
        %v3352 = vadd.f32 %v3244, %v3316
        %v3353 = vadd.f32 %v3247, %v3319
        %v3354 = vadd.f32 %v3250, %v3322
        %v3355 = vadd.f32 %v3253, %v3325
        %v3356 = vadd.f32 %v3256, %v3328
        %v3357 = vadd.f32 %v3259, %v3331
        %v3358 = vadd.f32 %v3262, %v3334
        %v3359 = vadd.f32 %v3265, %v3337
        %v3360 = vadd.f32 %v3268, %v3340
        %v3361 = vadd.f32 %v3271, %v3343
        %v3362 = vadd.f32 %v3274, %v3346
        %v3363 = vadd.f32 %v3347, %v3195
        %v3364 = vadd.f32 %v3348, %v3196
        %v3365 = vadd.f32 %v3349, %v3197
        %v3366 = vadd.f32 %v3350, %v3198
        %v3367 = vadd.f32 %v3351, %v3199
        %v3368 = vadd.f32 %v3352, %v3200
        %v3369 = vadd.f32 %v3353, %v3201
        %v3370 = vadd.f32 %v3354, %v3202
        %v3371 = vadd.f32 %v3355, %v3203
        %v3372 = vadd.f32 %v3356, %v3204
        %v3373 = vadd.f32 %v3357, %v3205
        %v3374 = vadd.f32 %v3358, %v3206
        %v3375 = vadd.f32 %v3359, %v3207
        %v3376 = vadd.f32 %v3360, %v3208
        %v3377 = vadd.f32 %v3361, %v3209
        %v3378 = vadd.f32 %v3362, %v3210
        %v3379 = vsel %vm2851, %v3363, -inf
        %v3380 = vsel %vm2851, %v3365, -inf
        %v3381 = vsel %vm2851, %v3367, -inf
        %v3382 = vmax.f32 %v3379, %v3381
        %v3383 = vsel %vm2851, %v3369, -inf
        %v3384 = vmax.f32 %v3380, %v3383
        %v3385 = vsel %vm2851, %v3371, -inf
        %v3386 = vmax.f32 %v3382, %v3385
        %v3387 = vsel %vm2851, %v3373, -inf
        %v3388 = vmax.f32 %v3384, %v3387
        %v3389 = vsel %vm2851, %v3375, -inf
        %v3390 = vmax.f32 %v3386, %v3389
        %v3391 = vsel %vm2851, %v3377, -inf
        %v3392 = vmax.f32 %v3388, %v3391
        %v3393 = vmax.f32 %v3390, %v3392
        %v3394 = vsel %vm2851, %v3364, -inf
        %v3395 = vsel %vm2851, %v3366, -inf
        %v3396 = vsel %vm2851, %v3368, -inf
        %v3397 = vmax.f32 %v3394, %v3396
        %v3398 = vsel %vm2851, %v3370, -inf
        %v3399 = vmax.f32 %v3395, %v3398
        %v3400 = vsel %vm2851, %v3372, -inf
        %v3401 = vmax.f32 %v3397, %v3400
        %v3402 = vsel %vm2851, %v3374, -inf
        %v3403 = vmax.f32 %v3399, %v3402
        %v3404 = vsel %vm2851, %v3376, -inf
        %v3405 = vmax.f32 %v3401, %v3404
        %v3406 = vsel %vm2851, %v3378, -inf
        %v3407 = vmax.f32 %v3403, %v3406
        %v3408 = vmax.f32 %v3405, %v3407
        %v3409 = vsub.f32 %v3363, %v3393
        %v3410 = vsub.f32 %v3364, %v3408
        %v3411 = vsub.f32 %v3365, %v3393
        %v3412 = vsub.f32 %v3366, %v3408
        %v3413 = vsub.f32 %v3367, %v3393
        %v3414 = vsub.f32 %v3368, %v3408
        %v3415 = vsub.f32 %v3369, %v3393
        %v3416 = vsub.f32 %v3370, %v3408
        %v3417 = vsub.f32 %v3371, %v3393
        %v3418 = vsub.f32 %v3372, %v3408
        %v3419 = vsub.f32 %v3373, %v3393
        %v3420 = vsub.f32 %v3374, %v3408
        %v3421 = vsub.f32 %v3375, %v3393
        %v3422 = vsub.f32 %v3376, %v3408
        %v3423 = vsub.f32 %v3377, %v3393
        %v3424 = vsub.f32 %v3378, %v3408
        %v3425 = vmul.f32 %v3409, 1.442695
        %v3426 = vpow.pop %v3425
        %v3427 = vmul.f32 %v3410, 1.442695
        %v3428 = vpow.pop %v3427
        %v3429 = vmul.f32 %v3411, 1.442695
        %v3430 = vpow.pop %v3429
        %v3431 = vmul.f32 %v3412, 1.442695
        %v3432 = vpow.pop %v3431
        %v3433 = vmul.f32 %v3413, 1.442695
        %v3434 = vpow.pop %v3433
        %v3435 = vmul.f32 %v3414, 1.442695
        %v3436 = vpow.pop %v3435
        %v3437 = vmul.f32 %v3415, 1.442695
        %v3438 = vpow.pop %v3437
        %v3439 = vmul.f32 %v3416, 1.442695
        %v3440 = vpow.pop %v3439
        %v3441 = vmul.f32 %v3417, 1.442695
        %v3442 = vpow.pop %v3441
        %v3443 = vmul.f32 %v3418, 1.442695
        %v3444 = vpow.pop %v3443
        %v3445 = vmul.f32 %v3419, 1.442695
        %v3446 = vpow.pop %v3445
        %v3447 = vmul.f32 %v3420, 1.442695
        %v3448 = vpow.pop %v3447
        %v3449 = vmul.f32 %v3421, 1.442695
        %v3450 = vpow.pop %v3449
        %v3451 = vmul.f32 %v3422, 1.442695
        %v3452 = vpow.pop %v3451
        %v3453 = vmul.f32 %v3423, 1.442695
        %v3454 = vpow.pop %v3453
        %v3455 = vmul.f32 %v3424, 1.442695
        %v3456 = vpow.pop %v3455
        %v3457 = vsel %vm2851, %v3426, 0.0
        %v3458 = vsel %vm2851, %v3430, 0.0
        %v3459 = vadd.f32 %v3457, %v3458
        %v3460 = vsel %vm2851, %v3434, 0.0
        %v3461 = vadd.f32 %v3459, %v3460
        %v3462 = vsel %vm2851, %v3438, 0.0
        %v3463 = vadd.f32 %v3461, %v3462
        %v3464 = vsel %vm2851, %v3442, 0.0
        %v3465 = vadd.f32 %v3463, %v3464
        %v3466 = vsel %vm2851, %v3446, 0.0
        %v3467 = vadd.f32 %v3465, %v3466
        %v3468 = vsel %vm2851, %v3450, 0.0
        %v3469 = vadd.f32 %v3467, %v3468
        %v3470 = vsel %vm2851, %v3454, 0.0
        %v3471 = vadd.f32 %v3469, %v3470
        %v3472 = vsel %vm2851, %v3428, 0.0
        %v3473 = vsel %vm2851, %v3432, 0.0
        %v3474 = vadd.f32 %v3472, %v3473
        %v3475 = vsel %vm2851, %v3436, 0.0
        %v3476 = vadd.f32 %v3474, %v3475
        %v3477 = vsel %vm2851, %v3440, 0.0
        %v3478 = vadd.f32 %v3476, %v3477
        %v3479 = vsel %vm2851, %v3444, 0.0
        %v3480 = vadd.f32 %v3478, %v3479
        %v3481 = vsel %vm2851, %v3448, 0.0
        %v3482 = vadd.f32 %v3480, %v3481
        %v3483 = vsel %vm2851, %v3452, 0.0
        %v3484 = vadd.f32 %v3482, %v3483
        %v3485 = vsel %vm2851, %v3456, 0.0
        %v3486 = vadd.f32 %v3484, %v3485
        %v3487 = vrcp.pop %v3471
        %v3488 = vrcp.pop %v3486
        %v3489 = vmul.f32 %v3426, %v3487
        %v3490 = vmul.f32 %v3428, %v3488
        %v3491 = vmul.f32 %v3430, %v3487
        %v3492 = vmul.f32 %v3432, %v3488
        %v3493 = vmul.f32 %v3434, %v3487
        %v3494 = vmul.f32 %v3436, %v3488
        %v3495 = vmul.f32 %v3438, %v3487
        %v3496 = vmul.f32 %v3440, %v3488
        %v3497 = vmul.f32 %v3442, %v3487
        %v3498 = vmul.f32 %v3444, %v3488
        %v3499 = vmul.f32 %v3446, %v3487
        %v3500 = vmul.f32 %v3448, %v3488
        %v3501 = vmul.f32 %v3450, %v3487
        %v3502 = vmul.f32 %v3452, %v3488
        %v3503 = vmul.f32 %v3454, %v3487
        %v3504 = vmul.f32 %v3456, %v3488
        %3506 = vset.pattern.permute.xlu0 0
        %3507 = vperm.xlu0 %3506, %v3489
        %v3508 = vpop.permute.xlu0 %3507
        %3511 = vset.pattern.permute.xlu0 0
        %3512 = vperm.xlu0 %3511, %v3490
        %v3513 = vpop.permute.xlu0 %3512
        %3516 = vset.pattern.permute.xlu0 0
        %3517 = vperm.xlu0 %3516, %v3491
        %v3518 = vpop.permute.xlu0 %3517
        %3521 = vset.pattern.permute.xlu0 0
        %3522 = vperm.xlu0 %3521, %v3492
        %v3523 = vpop.permute.xlu0 %3522
        %3526 = vset.pattern.permute.xlu0 0
        %3527 = vperm.xlu0 %3526, %v3493
        %v3528 = vpop.permute.xlu0 %3527
        %3531 = vset.pattern.permute.xlu0 0
        %3532 = vperm.xlu0 %3531, %v3494
        %v3533 = vpop.permute.xlu0 %3532
        %3536 = vset.pattern.permute.xlu0 0
        %3537 = vperm.xlu0 %3536, %v3495
        %v3538 = vpop.permute.xlu0 %3537
        %3541 = vset.pattern.permute.xlu0 0
        %3542 = vperm.xlu0 %3541, %v3496
        %v3543 = vpop.permute.xlu0 %3542
        %3546 = vset.pattern.permute.xlu0 0
        %3547 = vperm.xlu0 %3546, %v3497
        %v3548 = vpop.permute.xlu0 %3547
        %3551 = vset.pattern.permute.xlu0 0
        %3552 = vperm.xlu0 %3551, %v3498
        %v3553 = vpop.permute.xlu0 %3552
        %3556 = vset.pattern.permute.xlu0 0
        %3557 = vperm.xlu0 %3556, %v3499
        %v3558 = vpop.permute.xlu0 %3557
        %3561 = vset.pattern.permute.xlu0 0
        %3562 = vperm.xlu0 %3561, %v3500
        %v3563 = vpop.permute.xlu0 %3562
        %3566 = vset.pattern.permute.xlu0 0
        %3567 = vperm.xlu0 %3566, %v3501
        %v3568 = vpop.permute.xlu0 %3567
        %3571 = vset.pattern.permute.xlu0 0
        %3572 = vperm.xlu0 %3571, %v3502
        %v3573 = vpop.permute.xlu0 %3572
        %3576 = vset.pattern.permute.xlu0 0
        %3577 = vperm.xlu0 %3576, %v3503
        %v3578 = vpop.permute.xlu0 %3577
        %3581 = vset.pattern.permute.xlu0 0
        %3582 = vperm.xlu0 %3581, %v3504
        %v3583 = vpop.permute.xlu0 %3582
        %v3585 = vmul.f32 %v3508, %v2779
        %v3586 = vmul.f32 %v3513, %v2780
        %v3587 = vmul.f32 %v3518, %v2781
        %v3588 = vmul.f32 %v3523, %v2782
        %v3589 = vmul.f32 %v3528, %v2783
        %v3590 = vmul.f32 %v3533, %v2784
        %v3591 = vmul.f32 %v3538, %v2785
        %v3592 = vmul.f32 %v3543, %v2786
        %v3593 = vmul.f32 %v3548, %v2787
        %v3594 = vmul.f32 %v3553, %v2788
        %v3595 = vmul.f32 %v3558, %v2789
        %v3596 = vmul.f32 %v3563, %v2790
        %v3597 = vmul.f32 %v3568, %v2791
        %v3598 = vmul.f32 %v3573, %v2792
        %v3599 = vmul.f32 %v3578, %v2793
        %v3600 = vmul.f32 %v3583, %v2794
        %v3601 = vsel %vm723, %v3585, 0.0
        %v3602 = vsel %vm723, %v3587, 0.0
        %v3603 = vadd.f32 %v3601, %v3602
        %v3604 = vsel %vm723, %v3589, 0.0
        %v3605 = vadd.f32 %v3603, %v3604
        %v3606 = vsel %vm723, %v3591, 0.0
        %v3607 = vadd.f32 %v3605, %v3606
        %v3608 = vsel %vm723, %v3593, 0.0
        %v3609 = vadd.f32 %v3607, %v3608
        %v3610 = vsel %vm723, %v3595, 0.0
        %v3611 = vadd.f32 %v3609, %v3610
        %v3612 = vsel %vm723, %v3597, 0.0
        %v3613 = vadd.f32 %v3611, %v3612
        %v3614 = vsel %vm723, %v3599, 0.0
        %v3615 = vadd.f32 %v3613, %v3614
        %v3616 = vsel %vm723, %v3586, 0.0
        %v3617 = vsel %vm723, %v3588, 0.0
        %v3618 = vadd.f32 %v3616, %v3617
        %v3619 = vsel %vm723, %v3590, 0.0
        %v3620 = vadd.f32 %v3618, %v3619
        %v3621 = vsel %vm723, %v3592, 0.0
        %v3622 = vadd.f32 %v3620, %v3621
        %v3623 = vsel %vm723, %v3594, 0.0
        %v3624 = vadd.f32 %v3622, %v3623
        %v3625 = vsel %vm723, %v3596, 0.0
        %v3626 = vadd.f32 %v3624, %v3625
        %v3627 = vsel %vm723, %v3598, 0.0
        %v3628 = vadd.f32 %v3626, %v3627
        %v3629 = vsel %vm723, %v3600, 0.0
        %v3630 = vadd.f32 %v3628, %v3629
        %v3631 = vmul.f32 %v3508, %v2803
        %v3632 = vmul.f32 %v3513, %v2804
        %v3633 = vmul.f32 %v3518, %v2805
        %v3634 = vmul.f32 %v3523, %v2806
        %v3635 = vmul.f32 %v3528, %v2807
        %v3636 = vmul.f32 %v3533, %v2808
        %v3637 = vmul.f32 %v3538, %v2809
        %v3638 = vmul.f32 %v3543, %v2810
        %v3639 = vmul.f32 %v3548, %v2811
        %v3640 = vmul.f32 %v3553, %v2812
        %v3641 = vmul.f32 %v3558, %v2813
        %v3642 = vmul.f32 %v3563, %v2814
        %v3643 = vmul.f32 %v3568, %v2815
        %v3644 = vmul.f32 %v3573, %v2816
        %v3645 = vmul.f32 %v3578, %v2817
        %v3646 = vmul.f32 %v3583, %v2818
        %v3647 = vsel %vm723, %v3631, 0.0
        %v3648 = vsel %vm723, %v3633, 0.0
        %v3649 = vadd.f32 %v3647, %v3648
        %v3650 = vsel %vm723, %v3635, 0.0
        %v3651 = vadd.f32 %v3649, %v3650
        %v3652 = vsel %vm723, %v3637, 0.0
        %v3653 = vadd.f32 %v3651, %v3652
        %v3654 = vsel %vm723, %v3639, 0.0
        %v3655 = vadd.f32 %v3653, %v3654
        %v3656 = vsel %vm723, %v3641, 0.0
        %v3657 = vadd.f32 %v3655, %v3656
        %v3658 = vsel %vm723, %v3643, 0.0
        %v3659 = vadd.f32 %v3657, %v3658
        %v3660 = vsel %vm723, %v3645, 0.0
        %v3661 = vadd.f32 %v3659, %v3660
        %v3662 = vsel %vm723, %v3632, 0.0
        %v3663 = vsel %vm723, %v3634, 0.0
        %v3664 = vadd.f32 %v3662, %v3663
        %v3665 = vsel %vm723, %v3636, 0.0
        %v3666 = vadd.f32 %v3664, %v3665
        %v3667 = vsel %vm723, %v3638, 0.0
        %v3668 = vadd.f32 %v3666, %v3667
        %v3669 = vsel %vm723, %v3640, 0.0
        %v3670 = vadd.f32 %v3668, %v3669
        %v3671 = vsel %vm723, %v3642, 0.0
        %v3672 = vadd.f32 %v3670, %v3671
        %v3673 = vsel %vm723, %v3644, 0.0
        %v3674 = vadd.f32 %v3672, %v3673
        %v3675 = vsel %vm723, %v3646, 0.0
        %v3676 = vadd.f32 %v3674, %v3675
        %3677 = vrot.lane.b32.xlu0 %v3171, 96
        %v3678 = vpop.permute.xlu0 %3677
        %3679 = vrot.lane.b32.xlu0 %v3175, 96
        %v3680 = vpop.permute.xlu0 %3679
        %v3683 = vmul.f32 %v2779, %v3678
        %v3684 = vmul.f32 %v2780, %v3680
        %v3685 = vmul.f32 %v2781, %v3678
        %v3686 = vmul.f32 %v2782, %v3680
        %v3687 = vmul.f32 %v2783, %v3678
        %v3688 = vmul.f32 %v2784, %v3680
        %v3689 = vmul.f32 %v2785, %v3678
        %v3690 = vmul.f32 %v2786, %v3680
        %v3691 = vmul.f32 %v2787, %v3678
        %v3692 = vmul.f32 %v2788, %v3680
        %v3693 = vmul.f32 %v2789, %v3678
        %v3694 = vmul.f32 %v2790, %v3680
        %v3695 = vmul.f32 %v2791, %v3678
        %v3696 = vmul.f32 %v2792, %v3680
        %v3697 = vmul.f32 %v2793, %v3678
        %v3698 = vmul.f32 %v2794, %v3680
        %v3699 = vsel %vm723, %v3683, 0.0
        %3700 = vadd.xlane.f32.xlu0 %v3699
        %v3701 = vpop.xlane.xlu0 %3700
        %v3702 = vsel %vm723, %v3684, 0.0
        %3703 = vadd.xlane.f32.xlu0 %v3702
        %v3704 = vpop.xlane.xlu0 %3703
        %v3705 = vsel %vm723, %v3685, 0.0
        %3706 = vadd.xlane.f32.xlu0 %v3705
        %v3707 = vpop.xlane.xlu0 %3706
        %v3708 = vsel %vm723, %v3686, 0.0
        %3709 = vadd.xlane.f32.xlu0 %v3708
        %v3710 = vpop.xlane.xlu0 %3709
        %v3711 = vsel %vm723, %v3687, 0.0
        %3712 = vadd.xlane.f32.xlu0 %v3711
        %v3713 = vpop.xlane.xlu0 %3712
        %v3714 = vsel %vm723, %v3688, 0.0
        %3715 = vadd.xlane.f32.xlu0 %v3714
        %v3716 = vpop.xlane.xlu0 %3715
        %v3717 = vsel %vm723, %v3689, 0.0
        %3718 = vadd.xlane.f32.xlu0 %v3717
        %v3719 = vpop.xlane.xlu0 %3718
        %v3720 = vsel %vm723, %v3690, 0.0
        %3721 = vadd.xlane.f32.xlu0 %v3720
        %v3722 = vpop.xlane.xlu0 %3721
        %v3723 = vsel %vm723, %v3691, 0.0
        %3724 = vadd.xlane.f32.xlu0 %v3723
        %v3725 = vpop.xlane.xlu0 %3724
        %v3726 = vsel %vm723, %v3692, 0.0
        %3727 = vadd.xlane.f32.xlu0 %v3726
        %v3728 = vpop.xlane.xlu0 %3727
        %v3729 = vsel %vm723, %v3693, 0.0
        %3730 = vadd.xlane.f32.xlu0 %v3729
        %v3731 = vpop.xlane.xlu0 %3730
        %v3732 = vsel %vm723, %v3694, 0.0
        %3733 = vadd.xlane.f32.xlu0 %v3732
        %v3734 = vpop.xlane.xlu0 %3733
        %v3735 = vsel %vm723, %v3695, 0.0
        %3736 = vadd.xlane.f32.xlu0 %v3735
        %v3737 = vpop.xlane.xlu0 %3736
        %v3738 = vsel %vm723, %v3696, 0.0
        %3739 = vadd.xlane.f32.xlu0 %v3738
        %v3740 = vpop.xlane.xlu0 %3739
        %v3741 = vsel %vm723, %v3697, 0.0
        %3742 = vadd.xlane.f32.xlu0 %v3741
        %v3743 = vpop.xlane.xlu0 %3742
        %v3744 = vsel %vm723, %v3698, 0.0
        %3745 = vadd.xlane.f32.xlu0 %v3744
        %v3746 = vpop.xlane.xlu0 %3745
        %v3747 = vmul.f32 %v2803, %v3173
        %v3748 = vmul.f32 %v2804, %v3177
        %v3749 = vmul.f32 %v2805, %v3173
        %v3750 = vmul.f32 %v2806, %v3177
        %v3751 = vmul.f32 %v2807, %v3173
        %v3752 = vmul.f32 %v2808, %v3177
        %v3753 = vmul.f32 %v2809, %v3173
        %v3754 = vmul.f32 %v2810, %v3177
        %v3755 = vmul.f32 %v2811, %v3173
        %v3756 = vmul.f32 %v2812, %v3177
        %v3757 = vmul.f32 %v2813, %v3173
        %v3758 = vmul.f32 %v2814, %v3177
        %v3759 = vmul.f32 %v2815, %v3173
        %v3760 = vmul.f32 %v2816, %v3177
        %v3761 = vmul.f32 %v2817, %v3173
        %v3762 = vmul.f32 %v2818, %v3177
        %v3763 = vsel %vm723, %v3747, 0.0
        %3764 = vadd.xlane.f32.xlu0 %v3763
        %v3765 = vpop.xlane.xlu0 %3764
        %v3766 = vsel %vm723, %v3748, 0.0
        %3767 = vadd.xlane.f32.xlu0 %v3766
        %v3768 = vpop.xlane.xlu0 %3767
        %v3769 = vsel %vm723, %v3749, 0.0
        %3770 = vadd.xlane.f32.xlu0 %v3769
        %v3771 = vpop.xlane.xlu0 %3770
        %v3772 = vsel %vm723, %v3750, 0.0
        %3773 = vadd.xlane.f32.xlu0 %v3772
        %v3774 = vpop.xlane.xlu0 %3773
        %v3775 = vsel %vm723, %v3751, 0.0
        %3776 = vadd.xlane.f32.xlu0 %v3775
        %v3777 = vpop.xlane.xlu0 %3776
        %v3778 = vsel %vm723, %v3752, 0.0
        %3779 = vadd.xlane.f32.xlu0 %v3778
        %v3780 = vpop.xlane.xlu0 %3779
        %v3781 = vsel %vm723, %v3753, 0.0
        %3782 = vadd.xlane.f32.xlu0 %v3781
        %v3783 = vpop.xlane.xlu0 %3782
        %v3784 = vsel %vm723, %v3754, 0.0
        %3785 = vadd.xlane.f32.xlu0 %v3784
        %v3786 = vpop.xlane.xlu0 %3785
        %v3787 = vsel %vm723, %v3755, 0.0
        %3788 = vadd.xlane.f32.xlu0 %v3787
        %v3789 = vpop.xlane.xlu0 %3788
        %v3790 = vsel %vm723, %v3756, 0.0
        %3791 = vadd.xlane.f32.xlu0 %v3790
        %v3792 = vpop.xlane.xlu0 %3791
        %v3793 = vsel %vm723, %v3757, 0.0
        %3794 = vadd.xlane.f32.xlu0 %v3793
        %v3795 = vpop.xlane.xlu0 %3794
        %v3796 = vsel %vm723, %v3758, 0.0
        %3797 = vadd.xlane.f32.xlu0 %v3796
        %v3798 = vpop.xlane.xlu0 %3797
        %v3799 = vsel %vm723, %v3759, 0.0
        %3800 = vadd.xlane.f32.xlu0 %v3799
        %v3801 = vpop.xlane.xlu0 %3800
        %v3802 = vsel %vm723, %v3760, 0.0
        %3803 = vadd.xlane.f32.xlu0 %v3802
        %v3804 = vpop.xlane.xlu0 %3803
        %v3805 = vsel %vm723, %v3761, 0.0
        %3806 = vadd.xlane.f32.xlu0 %v3805
        %v3807 = vpop.xlane.xlu0 %3806
        %v3808 = vsel %vm723, %v3762, 0.0
        %3809 = vadd.xlane.f32.xlu0 %v3808
        %v3810 = vpop.xlane.xlu0 %3809
        %v3811 = vadd.f32 %v3701, %v3765
        %v3812 = vadd.f32 %v3704, %v3768
        %v3813 = vadd.f32 %v3707, %v3771
        %v3814 = vadd.f32 %v3710, %v3774
        %v3815 = vadd.f32 %v3713, %v3777
        %v3816 = vadd.f32 %v3716, %v3780
        %v3817 = vadd.f32 %v3719, %v3783
        %v3818 = vadd.f32 %v3722, %v3786
        %v3819 = vadd.f32 %v3725, %v3789
        %v3820 = vadd.f32 %v3728, %v3792
        %v3821 = vadd.f32 %v3731, %v3795
        %v3822 = vadd.f32 %v3734, %v3798
        %v3823 = vadd.f32 %v3737, %v3801
        %v3824 = vadd.f32 %v3740, %v3804
        %v3825 = vadd.f32 %v3743, %v3807
        %v3826 = vadd.f32 %v3746, %v3810
        %v3827 = vadd.f32 %v3811, %v3195
        %v3828 = vadd.f32 %v3812, %v3196
        %v3829 = vadd.f32 %v3813, %v3197
        %v3830 = vadd.f32 %v3814, %v3198
        %v3831 = vadd.f32 %v3815, %v3199
        %v3832 = vadd.f32 %v3816, %v3200
        %v3833 = vadd.f32 %v3817, %v3201
        %v3834 = vadd.f32 %v3818, %v3202
        %v3835 = vadd.f32 %v3819, %v3203
        %v3836 = vadd.f32 %v3820, %v3204
        %v3837 = vadd.f32 %v3821, %v3205
        %v3838 = vadd.f32 %v3822, %v3206
        %v3839 = vadd.f32 %v3823, %v3207
        %v3840 = vadd.f32 %v3824, %v3208
        %v3841 = vadd.f32 %v3825, %v3209
        %v3842 = vadd.f32 %v3826, %v3210
        %v3843 = vsel %vm2851, %v3827, -inf
        %v3844 = vsel %vm2851, %v3829, -inf
        %v3845 = vsel %vm2851, %v3831, -inf
        %v3846 = vmax.f32 %v3843, %v3845
        %v3847 = vsel %vm2851, %v3833, -inf
        %v3848 = vmax.f32 %v3844, %v3847
        %v3849 = vsel %vm2851, %v3835, -inf
        %v3850 = vmax.f32 %v3846, %v3849
        %v3851 = vsel %vm2851, %v3837, -inf
        %v3852 = vmax.f32 %v3848, %v3851
        %v3853 = vsel %vm2851, %v3839, -inf
        %v3854 = vmax.f32 %v3850, %v3853
        %v3855 = vsel %vm2851, %v3841, -inf
        %v3856 = vmax.f32 %v3852, %v3855
        %v3857 = vmax.f32 %v3854, %v3856
        %v3858 = vsel %vm2851, %v3828, -inf
        %v3859 = vsel %vm2851, %v3830, -inf
        %v3860 = vsel %vm2851, %v3832, -inf
        %v3861 = vmax.f32 %v3858, %v3860
        %v3862 = vsel %vm2851, %v3834, -inf
        %v3863 = vmax.f32 %v3859, %v3862
        %v3864 = vsel %vm2851, %v3836, -inf
        %v3865 = vmax.f32 %v3861, %v3864
        %v3866 = vsel %vm2851, %v3838, -inf
        %v3867 = vmax.f32 %v3863, %v3866
        %v3868 = vsel %vm2851, %v3840, -inf
        %v3869 = vmax.f32 %v3865, %v3868
        %v3870 = vsel %vm2851, %v3842, -inf
        %v3871 = vmax.f32 %v3867, %v3870
        %v3872 = vmax.f32 %v3869, %v3871
        %v3873 = vsub.f32 %v3827, %v3857
        %v3874 = vsub.f32 %v3828, %v3872
        %v3875 = vsub.f32 %v3829, %v3857
        %v3876 = vsub.f32 %v3830, %v3872
        %v3877 = vsub.f32 %v3831, %v3857
        %v3878 = vsub.f32 %v3832, %v3872
        %v3879 = vsub.f32 %v3833, %v3857
        %v3880 = vsub.f32 %v3834, %v3872
        %v3881 = vsub.f32 %v3835, %v3857
        %v3882 = vsub.f32 %v3836, %v3872
        %v3883 = vsub.f32 %v3837, %v3857
        %v3884 = vsub.f32 %v3838, %v3872
        %v3885 = vsub.f32 %v3839, %v3857
        %v3886 = vsub.f32 %v3840, %v3872
        %v3887 = vsub.f32 %v3841, %v3857
        %v3888 = vsub.f32 %v3842, %v3872
        %v3889 = vmul.f32 %v3873, 1.442695
        %v3890 = vpow.pop %v3889
        %v3891 = vmul.f32 %v3874, 1.442695
        %v3892 = vpow.pop %v3891
        %v3893 = vmul.f32 %v3875, 1.442695
        %v3894 = vpow.pop %v3893
        %v3895 = vmul.f32 %v3876, 1.442695
        %v3896 = vpow.pop %v3895
        %v3897 = vmul.f32 %v3877, 1.442695
        %v3898 = vpow.pop %v3897
        %v3899 = vmul.f32 %v3878, 1.442695
        %v3900 = vpow.pop %v3899
        %v3901 = vmul.f32 %v3879, 1.442695
        %v3902 = vpow.pop %v3901
        %v3903 = vmul.f32 %v3880, 1.442695
        %v3904 = vpow.pop %v3903
        %v3905 = vmul.f32 %v3881, 1.442695
        %v3906 = vpow.pop %v3905
        %v3907 = vmul.f32 %v3882, 1.442695
        %v3908 = vpow.pop %v3907
        %v3909 = vmul.f32 %v3883, 1.442695
        %v3910 = vpow.pop %v3909
        %v3911 = vmul.f32 %v3884, 1.442695
        %v3912 = vpow.pop %v3911
        %v3913 = vmul.f32 %v3885, 1.442695
        %v3914 = vpow.pop %v3913
        %v3915 = vmul.f32 %v3886, 1.442695
        %v3916 = vpow.pop %v3915
        %v3917 = vmul.f32 %v3887, 1.442695
        %v3918 = vpow.pop %v3917
        %v3919 = vmul.f32 %v3888, 1.442695
        %v3920 = vpow.pop %v3919
        %v3921 = vsel %vm2851, %v3890, 0.0
        %v3922 = vsel %vm2851, %v3894, 0.0
        %v3923 = vadd.f32 %v3921, %v3922
        %v3924 = vsel %vm2851, %v3898, 0.0
        %v3925 = vadd.f32 %v3923, %v3924
        %v3926 = vsel %vm2851, %v3902, 0.0
        %v3927 = vadd.f32 %v3925, %v3926
        %v3928 = vsel %vm2851, %v3906, 0.0
        %v3929 = vadd.f32 %v3927, %v3928
        %v3930 = vsel %vm2851, %v3910, 0.0
        %v3931 = vadd.f32 %v3929, %v3930
        %v3932 = vsel %vm2851, %v3914, 0.0
        %v3933 = vadd.f32 %v3931, %v3932
        %v3934 = vsel %vm2851, %v3918, 0.0
        %v3935 = vadd.f32 %v3933, %v3934
        %v3936 = vsel %vm2851, %v3892, 0.0
        %v3937 = vsel %vm2851, %v3896, 0.0
        %v3938 = vadd.f32 %v3936, %v3937
        %v3939 = vsel %vm2851, %v3900, 0.0
        %v3940 = vadd.f32 %v3938, %v3939
        %v3941 = vsel %vm2851, %v3904, 0.0
        %v3942 = vadd.f32 %v3940, %v3941
        %v3943 = vsel %vm2851, %v3908, 0.0
        %v3944 = vadd.f32 %v3942, %v3943
        %v3945 = vsel %vm2851, %v3912, 0.0
        %v3946 = vadd.f32 %v3944, %v3945
        %v3947 = vsel %vm2851, %v3916, 0.0
        %v3948 = vadd.f32 %v3946, %v3947
        %v3949 = vsel %vm2851, %v3920, 0.0
        %v3950 = vadd.f32 %v3948, %v3949
        %v3951 = vrcp.pop %v3935
        %v3952 = vrcp.pop %v3950
        %v3953 = vmul.f32 %v3890, %v3951
        %v3954 = vmul.f32 %v3892, %v3952
        %v3955 = vmul.f32 %v3894, %v3951
        %v3956 = vmul.f32 %v3896, %v3952
        %v3957 = vmul.f32 %v3898, %v3951
        %v3958 = vmul.f32 %v3900, %v3952
        %v3959 = vmul.f32 %v3902, %v3951
        %v3960 = vmul.f32 %v3904, %v3952
        %v3961 = vmul.f32 %v3906, %v3951
        %v3962 = vmul.f32 %v3908, %v3952
        %v3963 = vmul.f32 %v3910, %v3951
        %v3964 = vmul.f32 %v3912, %v3952
        %v3965 = vmul.f32 %v3914, %v3951
        %v3966 = vmul.f32 %v3916, %v3952
        %v3967 = vmul.f32 %v3918, %v3951
        %v3968 = vmul.f32 %v3920, %v3952
        %3970 = vset.pattern.permute.xlu0 0
        %3971 = vperm.xlu0 %3970, %v3953
        %v3972 = vpop.permute.xlu0 %3971
        %3975 = vset.pattern.permute.xlu0 0
        %3976 = vperm.xlu0 %3975, %v3954
        %v3977 = vpop.permute.xlu0 %3976
        %3980 = vset.pattern.permute.xlu0 0
        %3981 = vperm.xlu0 %3980, %v3955
        %v3982 = vpop.permute.xlu0 %3981
        %3985 = vset.pattern.permute.xlu0 0
        %3986 = vperm.xlu0 %3985, %v3956
        %v3987 = vpop.permute.xlu0 %3986
        %3990 = vset.pattern.permute.xlu0 0
        %3991 = vperm.xlu0 %3990, %v3957
        %v3992 = vpop.permute.xlu0 %3991
        %3995 = vset.pattern.permute.xlu0 0
        %3996 = vperm.xlu0 %3995, %v3958
        %v3997 = vpop.permute.xlu0 %3996
        %4000 = vset.pattern.permute.xlu0 0
        %4001 = vperm.xlu0 %4000, %v3959
        %v4002 = vpop.permute.xlu0 %4001
        %4005 = vset.pattern.permute.xlu0 0
        %4006 = vperm.xlu0 %4005, %v3960
        %v4007 = vpop.permute.xlu0 %4006
        %4010 = vset.pattern.permute.xlu0 0
        %4011 = vperm.xlu0 %4010, %v3961
        %v4012 = vpop.permute.xlu0 %4011
        %4015 = vset.pattern.permute.xlu0 0
        %4016 = vperm.xlu0 %4015, %v3962
        %v4017 = vpop.permute.xlu0 %4016
        %4020 = vset.pattern.permute.xlu0 0
        %4021 = vperm.xlu0 %4020, %v3963
        %v4022 = vpop.permute.xlu0 %4021
        %4025 = vset.pattern.permute.xlu0 0
        %4026 = vperm.xlu0 %4025, %v3964
        %v4027 = vpop.permute.xlu0 %4026
        %4030 = vset.pattern.permute.xlu0 0
        %4031 = vperm.xlu0 %4030, %v3965
        %v4032 = vpop.permute.xlu0 %4031
        %4035 = vset.pattern.permute.xlu0 0
        %4036 = vperm.xlu0 %4035, %v3966
        %v4037 = vpop.permute.xlu0 %4036
        %4040 = vset.pattern.permute.xlu0 0
        %4041 = vperm.xlu0 %4040, %v3967
        %v4042 = vpop.permute.xlu0 %4041
        %4045 = vset.pattern.permute.xlu0 0
        %4046 = vperm.xlu0 %4045, %v3968
        %v4047 = vpop.permute.xlu0 %4046
        %v4049 = vmul.f32 %v3972, %v2779
        %v4050 = vmul.f32 %v3977, %v2780
        %v4051 = vmul.f32 %v3982, %v2781
        %v4052 = vmul.f32 %v3987, %v2782
        %v4053 = vmul.f32 %v3992, %v2783
        %v4054 = vmul.f32 %v3997, %v2784
        %v4055 = vmul.f32 %v4002, %v2785
        %v4056 = vmul.f32 %v4007, %v2786
        %v4057 = vmul.f32 %v4012, %v2787
        %v4058 = vmul.f32 %v4017, %v2788
        %v4059 = vmul.f32 %v4022, %v2789
        %v4060 = vmul.f32 %v4027, %v2790
        %v4061 = vmul.f32 %v4032, %v2791
        %v4062 = vmul.f32 %v4037, %v2792
        %v4063 = vmul.f32 %v4042, %v2793
        %v4064 = vmul.f32 %v4047, %v2794
        %v4065 = vsel %vm723, %v4049, 0.0
        %v4066 = vsel %vm723, %v4051, 0.0
        %v4067 = vadd.f32 %v4065, %v4066
        %v4068 = vsel %vm723, %v4053, 0.0
        %v4069 = vadd.f32 %v4067, %v4068
        %v4070 = vsel %vm723, %v4055, 0.0
        %v4071 = vadd.f32 %v4069, %v4070
        %v4072 = vsel %vm723, %v4057, 0.0
        %v4073 = vadd.f32 %v4071, %v4072
        %v4074 = vsel %vm723, %v4059, 0.0
        %v4075 = vadd.f32 %v4073, %v4074
        %v4076 = vsel %vm723, %v4061, 0.0
        %v4077 = vadd.f32 %v4075, %v4076
        %v4078 = vsel %vm723, %v4063, 0.0
        %v4079 = vadd.f32 %v4077, %v4078
        %v4080 = vsel %vm723, %v4050, 0.0
        %v4081 = vsel %vm723, %v4052, 0.0
        %v4082 = vadd.f32 %v4080, %v4081
        %v4083 = vsel %vm723, %v4054, 0.0
        %v4084 = vadd.f32 %v4082, %v4083
        %v4085 = vsel %vm723, %v4056, 0.0
        %v4086 = vadd.f32 %v4084, %v4085
        %v4087 = vsel %vm723, %v4058, 0.0
        %v4088 = vadd.f32 %v4086, %v4087
        %v4089 = vsel %vm723, %v4060, 0.0
        %v4090 = vadd.f32 %v4088, %v4089
        %v4091 = vsel %vm723, %v4062, 0.0
        %v4092 = vadd.f32 %v4090, %v4091
        %v4093 = vsel %vm723, %v4064, 0.0
        %v4094 = vadd.f32 %v4092, %v4093
        %v4095 = vmul.f32 %v3972, %v2803
        %v4096 = vmul.f32 %v3977, %v2804
        %v4097 = vmul.f32 %v3982, %v2805
        %v4098 = vmul.f32 %v3987, %v2806
        %v4099 = vmul.f32 %v3992, %v2807
        %v4100 = vmul.f32 %v3997, %v2808
        %v4101 = vmul.f32 %v4002, %v2809
        %v4102 = vmul.f32 %v4007, %v2810
        %v4103 = vmul.f32 %v4012, %v2811
        %v4104 = vmul.f32 %v4017, %v2812
        %v4105 = vmul.f32 %v4022, %v2813
        %v4106 = vmul.f32 %v4027, %v2814
        %v4107 = vmul.f32 %v4032, %v2815
        %v4108 = vmul.f32 %v4037, %v2816
        %v4109 = vmul.f32 %v4042, %v2817
        %v4110 = vmul.f32 %v4047, %v2818
        %v4111 = vsel %vm723, %v4095, 0.0
        %v4112 = vsel %vm723, %v4097, 0.0
        %v4113 = vadd.f32 %v4111, %v4112
        %v4114 = vsel %vm723, %v4099, 0.0
        %v4115 = vadd.f32 %v4113, %v4114
        %v4116 = vsel %vm723, %v4101, 0.0
        %v4117 = vadd.f32 %v4115, %v4116
        %v4118 = vsel %vm723, %v4103, 0.0
        %v4119 = vadd.f32 %v4117, %v4118
        %v4120 = vsel %vm723, %v4105, 0.0
        %v4121 = vadd.f32 %v4119, %v4120
        %v4122 = vsel %vm723, %v4107, 0.0
        %v4123 = vadd.f32 %v4121, %v4122
        %v4124 = vsel %vm723, %v4109, 0.0
        %v4125 = vadd.f32 %v4123, %v4124
        %v4126 = vsel %vm723, %v4096, 0.0
        %v4127 = vsel %vm723, %v4098, 0.0
        %v4128 = vadd.f32 %v4126, %v4127
        %v4129 = vsel %vm723, %v4100, 0.0
        %v4130 = vadd.f32 %v4128, %v4129
        %v4131 = vsel %vm723, %v4102, 0.0
        %v4132 = vadd.f32 %v4130, %v4131
        %v4133 = vsel %vm723, %v4104, 0.0
        %v4134 = vadd.f32 %v4132, %v4133
        %v4135 = vsel %vm723, %v4106, 0.0
        %v4136 = vadd.f32 %v4134, %v4135
        %v4137 = vsel %vm723, %v4108, 0.0
        %v4138 = vadd.f32 %v4136, %v4137
        %v4139 = vsel %vm723, %v4110, 0.0
        %v4140 = vadd.f32 %v4138, %v4139
        %4141 = vrot.lane.b32.xlu0 %v3171, 64
        %v4142 = vpop.permute.xlu0 %4141
        %4143 = vrot.lane.b32.xlu0 %v3175, 64
        %v4144 = vpop.permute.xlu0 %4143
        %v4147 = vmul.f32 %v2779, %v4142
        %v4148 = vmul.f32 %v2780, %v4144
        %v4149 = vmul.f32 %v2781, %v4142
        %v4150 = vmul.f32 %v2782, %v4144
        %v4151 = vmul.f32 %v2783, %v4142
        %v4152 = vmul.f32 %v2784, %v4144
        %v4153 = vmul.f32 %v2785, %v4142
        %v4154 = vmul.f32 %v2786, %v4144
        %v4155 = vmul.f32 %v2787, %v4142
        %v4156 = vmul.f32 %v2788, %v4144
        %v4157 = vmul.f32 %v2789, %v4142
        %v4158 = vmul.f32 %v2790, %v4144
        %v4159 = vmul.f32 %v2791, %v4142
        %v4160 = vmul.f32 %v2792, %v4144
        %v4161 = vmul.f32 %v2793, %v4142
        %v4162 = vmul.f32 %v2794, %v4144
        %v4163 = vsel %vm723, %v4147, 0.0
        %4164 = vadd.xlane.f32.xlu0 %v4163
        %v4165 = vpop.xlane.xlu0 %4164
        %v4166 = vsel %vm723, %v4148, 0.0
        %4167 = vadd.xlane.f32.xlu0 %v4166
        %v4168 = vpop.xlane.xlu0 %4167
        %v4169 = vsel %vm723, %v4149, 0.0
        %4170 = vadd.xlane.f32.xlu0 %v4169
        %v4171 = vpop.xlane.xlu0 %4170
        %v4172 = vsel %vm723, %v4150, 0.0
        %4173 = vadd.xlane.f32.xlu0 %v4172
        %v4174 = vpop.xlane.xlu0 %4173
        %v4175 = vsel %vm723, %v4151, 0.0
        %4176 = vadd.xlane.f32.xlu0 %v4175
        %v4177 = vpop.xlane.xlu0 %4176
        %v4178 = vsel %vm723, %v4152, 0.0
        %4179 = vadd.xlane.f32.xlu0 %v4178
        %v4180 = vpop.xlane.xlu0 %4179
        %v4181 = vsel %vm723, %v4153, 0.0
        %4182 = vadd.xlane.f32.xlu0 %v4181
        %v4183 = vpop.xlane.xlu0 %4182
        %v4184 = vsel %vm723, %v4154, 0.0
        %4185 = vadd.xlane.f32.xlu0 %v4184
        %v4186 = vpop.xlane.xlu0 %4185
        %v4187 = vsel %vm723, %v4155, 0.0
        %4188 = vadd.xlane.f32.xlu0 %v4187
        %v4189 = vpop.xlane.xlu0 %4188
        %v4190 = vsel %vm723, %v4156, 0.0
        %4191 = vadd.xlane.f32.xlu0 %v4190
        %v4192 = vpop.xlane.xlu0 %4191
        %v4193 = vsel %vm723, %v4157, 0.0
        %4194 = vadd.xlane.f32.xlu0 %v4193
        %v4195 = vpop.xlane.xlu0 %4194
        %v4196 = vsel %vm723, %v4158, 0.0
        %4197 = vadd.xlane.f32.xlu0 %v4196
        %v4198 = vpop.xlane.xlu0 %4197
        %v4199 = vsel %vm723, %v4159, 0.0
        %4200 = vadd.xlane.f32.xlu0 %v4199
        %v4201 = vpop.xlane.xlu0 %4200
        %v4202 = vsel %vm723, %v4160, 0.0
        %4203 = vadd.xlane.f32.xlu0 %v4202
        %v4204 = vpop.xlane.xlu0 %4203
        %v4205 = vsel %vm723, %v4161, 0.0
        %4206 = vadd.xlane.f32.xlu0 %v4205
        %v4207 = vpop.xlane.xlu0 %4206
        %v4208 = vsel %vm723, %v4162, 0.0
        %4209 = vadd.xlane.f32.xlu0 %v4208
        %v4210 = vpop.xlane.xlu0 %4209
        %4213 = vrot.lane.b32.xlu0 %v3173, 96
        %v4214 = vpop.permute.xlu0 %4213
        %4215 = vrot.lane.b32.xlu0 %v3177, 96
        %v4216 = vpop.permute.xlu0 %4215
        %v4219 = vmul.f32 %v2803, %v4214
        %v4220 = vmul.f32 %v2804, %v4216
        %v4221 = vmul.f32 %v2805, %v4214
        %v4222 = vmul.f32 %v2806, %v4216
        %v4223 = vmul.f32 %v2807, %v4214
        %v4224 = vmul.f32 %v2808, %v4216
        %v4225 = vmul.f32 %v2809, %v4214
        %v4226 = vmul.f32 %v2810, %v4216
        %v4227 = vmul.f32 %v2811, %v4214
        %v4228 = vmul.f32 %v2812, %v4216
        %v4229 = vmul.f32 %v2813, %v4214
        %v4230 = vmul.f32 %v2814, %v4216
        %v4231 = vmul.f32 %v2815, %v4214
        %v4232 = vmul.f32 %v2816, %v4216
        %v4233 = vmul.f32 %v2817, %v4214
        %v4234 = vmul.f32 %v2818, %v4216
        %v4235 = vsel %vm723, %v4219, 0.0
        %4236 = vadd.xlane.f32.xlu0 %v4235
        %v4237 = vpop.xlane.xlu0 %4236
        %v4238 = vsel %vm723, %v4220, 0.0
        %4239 = vadd.xlane.f32.xlu0 %v4238
        %v4240 = vpop.xlane.xlu0 %4239
        %v4241 = vsel %vm723, %v4221, 0.0
        %4242 = vadd.xlane.f32.xlu0 %v4241
        %v4243 = vpop.xlane.xlu0 %4242
        %v4244 = vsel %vm723, %v4222, 0.0
        %4245 = vadd.xlane.f32.xlu0 %v4244
        %v4246 = vpop.xlane.xlu0 %4245
        %v4247 = vsel %vm723, %v4223, 0.0
        %4248 = vadd.xlane.f32.xlu0 %v4247
        %v4249 = vpop.xlane.xlu0 %4248
        %v4250 = vsel %vm723, %v4224, 0.0
        %4251 = vadd.xlane.f32.xlu0 %v4250
        %v4252 = vpop.xlane.xlu0 %4251
        %v4253 = vsel %vm723, %v4225, 0.0
        %4254 = vadd.xlane.f32.xlu0 %v4253
        %v4255 = vpop.xlane.xlu0 %4254
        %v4256 = vsel %vm723, %v4226, 0.0
        %4257 = vadd.xlane.f32.xlu0 %v4256
        %v4258 = vpop.xlane.xlu0 %4257
        %v4259 = vsel %vm723, %v4227, 0.0
        %4260 = vadd.xlane.f32.xlu0 %v4259
        %v4261 = vpop.xlane.xlu0 %4260
        %v4262 = vsel %vm723, %v4228, 0.0
        %4263 = vadd.xlane.f32.xlu0 %v4262
        %v4264 = vpop.xlane.xlu0 %4263
        %v4265 = vsel %vm723, %v4229, 0.0
        %4266 = vadd.xlane.f32.xlu0 %v4265
        %v4267 = vpop.xlane.xlu0 %4266
        %v4268 = vsel %vm723, %v4230, 0.0
        %4269 = vadd.xlane.f32.xlu0 %v4268
        %v4270 = vpop.xlane.xlu0 %4269
        %v4271 = vsel %vm723, %v4231, 0.0
        %4272 = vadd.xlane.f32.xlu0 %v4271
        %v4273 = vpop.xlane.xlu0 %4272
        %v4274 = vsel %vm723, %v4232, 0.0
        %4275 = vadd.xlane.f32.xlu0 %v4274
        %v4276 = vpop.xlane.xlu0 %4275
        %v4277 = vsel %vm723, %v4233, 0.0
        %4278 = vadd.xlane.f32.xlu0 %v4277
        %v4279 = vpop.xlane.xlu0 %4278
        %v4280 = vsel %vm723, %v4234, 0.0
        %4281 = vadd.xlane.f32.xlu0 %v4280
        %v4282 = vpop.xlane.xlu0 %4281
        %v4283 = vadd.f32 %v4165, %v4237
        %v4284 = vadd.f32 %v4168, %v4240
        %v4285 = vadd.f32 %v4171, %v4243
        %v4286 = vadd.f32 %v4174, %v4246
        %v4287 = vadd.f32 %v4177, %v4249
        %v4288 = vadd.f32 %v4180, %v4252
        %v4289 = vadd.f32 %v4183, %v4255
        %v4290 = vadd.f32 %v4186, %v4258
        %v4291 = vadd.f32 %v4189, %v4261
        %v4292 = vadd.f32 %v4192, %v4264
        %v4293 = vadd.f32 %v4195, %v4267
        %v4294 = vadd.f32 %v4198, %v4270
        %v4295 = vadd.f32 %v4201, %v4273
        %v4296 = vadd.f32 %v4204, %v4276
        %v4297 = vadd.f32 %v4207, %v4279
        %v4298 = vadd.f32 %v4210, %v4282
        %v4299 = vadd.f32 %v4283, %v3195
        %v4300 = vadd.f32 %v4284, %v3196
        %v4301 = vadd.f32 %v4285, %v3197
        %v4302 = vadd.f32 %v4286, %v3198
        %v4303 = vadd.f32 %v4287, %v3199
        %v4304 = vadd.f32 %v4288, %v3200
        %v4305 = vadd.f32 %v4289, %v3201
        %v4306 = vadd.f32 %v4290, %v3202
        %v4307 = vadd.f32 %v4291, %v3203
        %v4308 = vadd.f32 %v4292, %v3204
        %v4309 = vadd.f32 %v4293, %v3205
        %v4310 = vadd.f32 %v4294, %v3206
        %v4311 = vadd.f32 %v4295, %v3207
        %v4312 = vadd.f32 %v4296, %v3208
        %v4313 = vadd.f32 %v4297, %v3209
        %v4314 = vadd.f32 %v4298, %v3210
        %v4315 = vsel %vm2851, %v4299, -inf
        %v4316 = vsel %vm2851, %v4301, -inf
        %v4317 = vsel %vm2851, %v4303, -inf
        %v4318 = vmax.f32 %v4315, %v4317
        %v4319 = vsel %vm2851, %v4305, -inf
        %v4320 = vmax.f32 %v4316, %v4319
        %v4321 = vsel %vm2851, %v4307, -inf
        %v4322 = vmax.f32 %v4318, %v4321
        %v4323 = vsel %vm2851, %v4309, -inf
        %v4324 = vmax.f32 %v4320, %v4323
        %v4325 = vsel %vm2851, %v4311, -inf
        %v4326 = vmax.f32 %v4322, %v4325
        %v4327 = vsel %vm2851, %v4313, -inf
        %v4328 = vmax.f32 %v4324, %v4327
        %v4329 = vmax.f32 %v4326, %v4328
        %v4330 = vsel %vm2851, %v4300, -inf
        %v4331 = vsel %vm2851, %v4302, -inf
        %v4332 = vsel %vm2851, %v4304, -inf
        %v4333 = vmax.f32 %v4330, %v4332
        %v4334 = vsel %vm2851, %v4306, -inf
        %v4335 = vmax.f32 %v4331, %v4334
        %v4336 = vsel %vm2851, %v4308, -inf
        %v4337 = vmax.f32 %v4333, %v4336
        %v4338 = vsel %vm2851, %v4310, -inf
        %v4339 = vmax.f32 %v4335, %v4338
        %v4340 = vsel %vm2851, %v4312, -inf
        %v4341 = vmax.f32 %v4337, %v4340
        %v4342 = vsel %vm2851, %v4314, -inf
        %v4343 = vmax.f32 %v4339, %v4342
        %v4344 = vmax.f32 %v4341, %v4343
        %v4345 = vsub.f32 %v4299, %v4329
        %v4346 = vsub.f32 %v4300, %v4344
        %v4347 = vsub.f32 %v4301, %v4329
        %v4348 = vsub.f32 %v4302, %v4344
        %v4349 = vsub.f32 %v4303, %v4329
        %v4350 = vsub.f32 %v4304, %v4344
        %v4351 = vsub.f32 %v4305, %v4329
        %v4352 = vsub.f32 %v4306, %v4344
        %v4353 = vsub.f32 %v4307, %v4329
        %v4354 = vsub.f32 %v4308, %v4344
        %v4355 = vsub.f32 %v4309, %v4329
        %v4356 = vsub.f32 %v4310, %v4344
        %v4357 = vsub.f32 %v4311, %v4329
        %v4358 = vsub.f32 %v4312, %v4344
        %v4359 = vsub.f32 %v4313, %v4329
        %v4360 = vsub.f32 %v4314, %v4344
        %v4361 = vmul.f32 %v4345, 1.442695
        %v4362 = vpow.pop %v4361
        %v4363 = vmul.f32 %v4346, 1.442695
        %v4364 = vpow.pop %v4363
        %v4365 = vmul.f32 %v4347, 1.442695
        %v4366 = vpow.pop %v4365
        %v4367 = vmul.f32 %v4348, 1.442695
        %v4368 = vpow.pop %v4367
        %v4369 = vmul.f32 %v4349, 1.442695
        %v4370 = vpow.pop %v4369
        %v4371 = vmul.f32 %v4350, 1.442695
        %v4372 = vpow.pop %v4371
        %v4373 = vmul.f32 %v4351, 1.442695
        %v4374 = vpow.pop %v4373
        %v4375 = vmul.f32 %v4352, 1.442695
        %v4376 = vpow.pop %v4375
        %v4377 = vmul.f32 %v4353, 1.442695
        %v4378 = vpow.pop %v4377
        %v4379 = vmul.f32 %v4354, 1.442695
        %v4380 = vpow.pop %v4379
        %v4381 = vmul.f32 %v4355, 1.442695
        %v4382 = vpow.pop %v4381
        %v4383 = vmul.f32 %v4356, 1.442695
        %v4384 = vpow.pop %v4383
        %v4385 = vmul.f32 %v4357, 1.442695
        %v4386 = vpow.pop %v4385
        %v4387 = vmul.f32 %v4358, 1.442695
        %v4388 = vpow.pop %v4387
        %v4389 = vmul.f32 %v4359, 1.442695
        %v4390 = vpow.pop %v4389
        %v4391 = vmul.f32 %v4360, 1.442695
        %v4392 = vpow.pop %v4391
        %v4393 = vsel %vm2851, %v4362, 0.0
        %v4394 = vsel %vm2851, %v4366, 0.0
        %v4395 = vadd.f32 %v4393, %v4394
        %v4396 = vsel %vm2851, %v4370, 0.0
        %v4397 = vadd.f32 %v4395, %v4396
        %v4398 = vsel %vm2851, %v4374, 0.0
        %v4399 = vadd.f32 %v4397, %v4398
        %v4400 = vsel %vm2851, %v4378, 0.0
        %v4401 = vadd.f32 %v4399, %v4400
        %v4402 = vsel %vm2851, %v4382, 0.0
        %v4403 = vadd.f32 %v4401, %v4402
        %v4404 = vsel %vm2851, %v4386, 0.0
        %v4405 = vadd.f32 %v4403, %v4404
        %v4406 = vsel %vm2851, %v4390, 0.0
        %v4407 = vadd.f32 %v4405, %v4406
        %v4408 = vsel %vm2851, %v4364, 0.0
        %v4409 = vsel %vm2851, %v4368, 0.0
        %v4410 = vadd.f32 %v4408, %v4409
        %v4411 = vsel %vm2851, %v4372, 0.0
        %v4412 = vadd.f32 %v4410, %v4411
        %v4413 = vsel %vm2851, %v4376, 0.0
        %v4414 = vadd.f32 %v4412, %v4413
        %v4415 = vsel %vm2851, %v4380, 0.0
        %v4416 = vadd.f32 %v4414, %v4415
        %v4417 = vsel %vm2851, %v4384, 0.0
        %v4418 = vadd.f32 %v4416, %v4417
        %v4419 = vsel %vm2851, %v4388, 0.0
        %v4420 = vadd.f32 %v4418, %v4419
        %v4421 = vsel %vm2851, %v4392, 0.0
        %v4422 = vadd.f32 %v4420, %v4421
        %v4423 = vrcp.pop %v4407
        %v4424 = vrcp.pop %v4422
        %v4425 = vmul.f32 %v4362, %v4423
        %v4426 = vmul.f32 %v4364, %v4424
        %v4427 = vmul.f32 %v4366, %v4423
        %v4428 = vmul.f32 %v4368, %v4424
        %v4429 = vmul.f32 %v4370, %v4423
        %v4430 = vmul.f32 %v4372, %v4424
        %v4431 = vmul.f32 %v4374, %v4423
        %v4432 = vmul.f32 %v4376, %v4424
        %v4433 = vmul.f32 %v4378, %v4423
        %v4434 = vmul.f32 %v4380, %v4424
        %v4435 = vmul.f32 %v4382, %v4423
        %v4436 = vmul.f32 %v4384, %v4424
        %v4437 = vmul.f32 %v4386, %v4423
        %v4438 = vmul.f32 %v4388, %v4424
        %v4439 = vmul.f32 %v4390, %v4423
        %v4440 = vmul.f32 %v4392, %v4424
        %4442 = vset.pattern.permute.xlu0 0
        %4443 = vperm.xlu0 %4442, %v4425
        %v4444 = vpop.permute.xlu0 %4443
        %4447 = vset.pattern.permute.xlu0 0
        %4448 = vperm.xlu0 %4447, %v4426
        %v4449 = vpop.permute.xlu0 %4448
        %4452 = vset.pattern.permute.xlu0 0
        %4453 = vperm.xlu0 %4452, %v4427
        %v4454 = vpop.permute.xlu0 %4453
        %4457 = vset.pattern.permute.xlu0 0
        %4458 = vperm.xlu0 %4457, %v4428
        %v4459 = vpop.permute.xlu0 %4458
        %4462 = vset.pattern.permute.xlu0 0
        %4463 = vperm.xlu0 %4462, %v4429
        %v4464 = vpop.permute.xlu0 %4463
        %4467 = vset.pattern.permute.xlu0 0
        %4468 = vperm.xlu0 %4467, %v4430
        %v4469 = vpop.permute.xlu0 %4468
        %4472 = vset.pattern.permute.xlu0 0
        %4473 = vperm.xlu0 %4472, %v4431
        %v4474 = vpop.permute.xlu0 %4473
        %4477 = vset.pattern.permute.xlu0 0
        %4478 = vperm.xlu0 %4477, %v4432
        %v4479 = vpop.permute.xlu0 %4478
        %4482 = vset.pattern.permute.xlu0 0
        %4483 = vperm.xlu0 %4482, %v4433
        %v4484 = vpop.permute.xlu0 %4483
        %4487 = vset.pattern.permute.xlu0 0
        %4488 = vperm.xlu0 %4487, %v4434
        %v4489 = vpop.permute.xlu0 %4488
        %4492 = vset.pattern.permute.xlu0 0
        %4493 = vperm.xlu0 %4492, %v4435
        %v4494 = vpop.permute.xlu0 %4493
        %4497 = vset.pattern.permute.xlu0 0
        %4498 = vperm.xlu0 %4497, %v4436
        %v4499 = vpop.permute.xlu0 %4498
        %4502 = vset.pattern.permute.xlu0 0
        %4503 = vperm.xlu0 %4502, %v4437
        %v4504 = vpop.permute.xlu0 %4503
        %4507 = vset.pattern.permute.xlu0 0
        %4508 = vperm.xlu0 %4507, %v4438
        %v4509 = vpop.permute.xlu0 %4508
        %4512 = vset.pattern.permute.xlu0 0
        %4513 = vperm.xlu0 %4512, %v4439
        %v4514 = vpop.permute.xlu0 %4513
        %4517 = vset.pattern.permute.xlu0 0
        %4518 = vperm.xlu0 %4517, %v4440
        %v4519 = vpop.permute.xlu0 %4518
        %v4521 = vmul.f32 %v4444, %v2779
        %v4522 = vmul.f32 %v4449, %v2780
        %v4523 = vmul.f32 %v4454, %v2781
        %v4524 = vmul.f32 %v4459, %v2782
        %v4525 = vmul.f32 %v4464, %v2783
        %v4526 = vmul.f32 %v4469, %v2784
        %v4527 = vmul.f32 %v4474, %v2785
        %v4528 = vmul.f32 %v4479, %v2786
        %v4529 = vmul.f32 %v4484, %v2787
        %v4530 = vmul.f32 %v4489, %v2788
        %v4531 = vmul.f32 %v4494, %v2789
        %v4532 = vmul.f32 %v4499, %v2790
        %v4533 = vmul.f32 %v4504, %v2791
        %v4534 = vmul.f32 %v4509, %v2792
        %v4535 = vmul.f32 %v4514, %v2793
        %v4536 = vmul.f32 %v4519, %v2794
        %v4537 = vsel %vm723, %v4521, 0.0
        %v4538 = vsel %vm723, %v4523, 0.0
        %v4539 = vadd.f32 %v4537, %v4538
        %v4540 = vsel %vm723, %v4525, 0.0
        %v4541 = vadd.f32 %v4539, %v4540
        %v4542 = vsel %vm723, %v4527, 0.0
        %v4543 = vadd.f32 %v4541, %v4542
        %v4544 = vsel %vm723, %v4529, 0.0
        %v4545 = vadd.f32 %v4543, %v4544
        %v4546 = vsel %vm723, %v4531, 0.0
        %v4547 = vadd.f32 %v4545, %v4546
        %v4548 = vsel %vm723, %v4533, 0.0
        %v4549 = vadd.f32 %v4547, %v4548
        %v4550 = vsel %vm723, %v4535, 0.0
        %v4551 = vadd.f32 %v4549, %v4550
        %v4552 = vsel %vm723, %v4522, 0.0
        %v4553 = vsel %vm723, %v4524, 0.0
        %v4554 = vadd.f32 %v4552, %v4553
        %v4555 = vsel %vm723, %v4526, 0.0
        %v4556 = vadd.f32 %v4554, %v4555
        %v4557 = vsel %vm723, %v4528, 0.0
        %v4558 = vadd.f32 %v4556, %v4557
        %v4559 = vsel %vm723, %v4530, 0.0
        %v4560 = vadd.f32 %v4558, %v4559
        %v4561 = vsel %vm723, %v4532, 0.0
        %v4562 = vadd.f32 %v4560, %v4561
        %v4563 = vsel %vm723, %v4534, 0.0
        %v4564 = vadd.f32 %v4562, %v4563
        %v4565 = vsel %vm723, %v4536, 0.0
        %v4566 = vadd.f32 %v4564, %v4565
        %v4567 = vmul.f32 %v4444, %v2803
        %v4568 = vmul.f32 %v4449, %v2804
        %v4569 = vmul.f32 %v4454, %v2805
        %v4570 = vmul.f32 %v4459, %v2806
        %v4571 = vmul.f32 %v4464, %v2807
        %v4572 = vmul.f32 %v4469, %v2808
        %v4573 = vmul.f32 %v4474, %v2809
        %v4574 = vmul.f32 %v4479, %v2810
        %v4575 = vmul.f32 %v4484, %v2811
        %v4576 = vmul.f32 %v4489, %v2812
        %v4577 = vmul.f32 %v4494, %v2813
        %v4578 = vmul.f32 %v4499, %v2814
        %v4579 = vmul.f32 %v4504, %v2815
        %v4580 = vmul.f32 %v4509, %v2816
        %v4581 = vmul.f32 %v4514, %v2817
        %v4582 = vmul.f32 %v4519, %v2818
        %v4583 = vsel %vm723, %v4567, 0.0
        %v4584 = vsel %vm723, %v4569, 0.0
        %v4585 = vadd.f32 %v4583, %v4584
        %v4586 = vsel %vm723, %v4571, 0.0
        %v4587 = vadd.f32 %v4585, %v4586
        %v4588 = vsel %vm723, %v4573, 0.0
        %v4589 = vadd.f32 %v4587, %v4588
        %v4590 = vsel %vm723, %v4575, 0.0
        %v4591 = vadd.f32 %v4589, %v4590
        %v4592 = vsel %vm723, %v4577, 0.0
        %v4593 = vadd.f32 %v4591, %v4592
        %v4594 = vsel %vm723, %v4579, 0.0
        %v4595 = vadd.f32 %v4593, %v4594
        %v4596 = vsel %vm723, %v4581, 0.0
        %v4597 = vadd.f32 %v4595, %v4596
        %v4598 = vsel %vm723, %v4568, 0.0
        %v4599 = vsel %vm723, %v4570, 0.0
        %v4600 = vadd.f32 %v4598, %v4599
        %v4601 = vsel %vm723, %v4572, 0.0
        %v4602 = vadd.f32 %v4600, %v4601
        %v4603 = vsel %vm723, %v4574, 0.0
        %v4604 = vadd.f32 %v4602, %v4603
        %v4605 = vsel %vm723, %v4576, 0.0
        %v4606 = vadd.f32 %v4604, %v4605
        %v4607 = vsel %vm723, %v4578, 0.0
        %v4608 = vadd.f32 %v4606, %v4607
        %v4609 = vsel %vm723, %v4580, 0.0
        %v4610 = vadd.f32 %v4608, %v4609
        %v4611 = vsel %vm723, %v4582, 0.0
        %v4612 = vadd.f32 %v4610, %v4611
        %4615 = vrot.lane.b32.xlu0 %v4079, 32
        %v4616 = vpop.permute.xlu0 %4615
        %4617 = vrot.lane.b32.xlu0 %v4094, 32
        %v4618 = vpop.permute.xlu0 %4617
        %4623 = vrot.lane.b32.xlu0 %v4551, 64
        %v4624 = vpop.permute.xlu0 %4623
        %4625 = vrot.lane.b32.xlu0 %v4566, 64
        %v4626 = vpop.permute.xlu0 %4625
        %4631 = vrot.lane.b32.xlu0 %v3661, 96
        %v4632 = vpop.permute.xlu0 %4631
        %4633 = vrot.lane.b32.xlu0 %v3676, 96
        %v4634 = vpop.permute.xlu0 %4633
        %4639 = vrot.lane.b32.xlu0 %v4597, 32
        %v4640 = vpop.permute.xlu0 %4639
        %4641 = vrot.lane.b32.xlu0 %v4612, 32
        %v4642 = vpop.permute.xlu0 %4641
        %v4645 = vsel %vm723, %v3615, %v4616
        %v4646 = vsel %vm723, %v3630, %v4618
        %v4647 = vsel %vm942, %v4645, %v4624
        %v4648 = vsel %vm942, %v4646, %v4626
        %vm4649 = vcmask 785408
        %v4650 = vsel %vm4649, %v4647, %v4632
        %v4651 = vsel %vm4649, %v4648, %v4634
        %v4652 = vsel %vm723, %v4125, %v4640
        %v4653 = vsel %vm723, %v4140, %v4642
        %v4654 = vpack.c.bf16 %v4651, %v4650
        %v4655 = vpack.c.bf16 %v4653, %v4652
        %v4656 = vld [vmem:[%s7] sm:$0xf]
        %v4657 = vld [vmem:[%s7 + $0x4] sm:$0xf]
        %v4658 = vld [vmem:[%s7 + $0x8] sm:$0xf]
        %v4659 = vld [vmem:[%s7 + $0xc] sm:$0xf]
        %v4660 = vld [vmem:[%s7 + $0x10] sm:$0xf]
        %v4661 = vld [vmem:[%s7 + $0x14] sm:$0xf]
        %v4662 = vld [vmem:[%s7 + $0x18] sm:$0xf]
        %v4663 = vld [vmem:[%s7 + $0x1c] sm:$0xf]
        %v4664 = vld [vmem:[%s7 + $0x20] sm:$0xf]
        %v4665 = vld [vmem:[%s7 + $0x24] sm:$0xf]
        %v4666 = vld [vmem:[%s7 + $0x28] sm:$0xf]
        %v4667 = vld [vmem:[%s7 + $0x2c] sm:$0xf]
        %v4668 = vld [vmem:[%s7 + $0x30] sm:$0xf]
        %v4669 = vld [vmem:[%s7 + $0x34] sm:$0xf]
        %v4670 = vld [vmem:[%s7 + $0x38] sm:$0xf]
        %v4671 = vld [vmem:[%s7 + $0x3c] sm:$0xf]
        %v4672 = vld [vmem:[%s7 + $0x40] sm:$0xf]
        %v4673 = vld [vmem:[%s7 + $0x44] sm:$0xf]
        %v4674 = vld [vmem:[%s7 + $0x48] sm:$0xf]
        %v4675 = vld [vmem:[%s7 + $0x4c] sm:$0xf]
        %v4676 = vld [vmem:[%s7 + $0x50] sm:$0xf]
        %v4677 = vld [vmem:[%s7 + $0x54] sm:$0xf]
        %v4678 = vld [vmem:[%s7 + $0x58] sm:$0xf]
        %v4679 = vld [vmem:[%s7 + $0x5c] sm:$0xf]
        %v4680 = vld [vmem:[%s8] sm:$0x1]
        %v4682 = vlaneseq
        %v4683 = vshrl.u32 %v4682, 7
        %v4684 = vsub.s32 0, %v4683
        %v4685 = vrot.slane %v4680, %v4684
        %v4711 = vunpack.c.l.b16 %v4656
        %v4712 = vunpack.c.l.b16 %v4657
        %v4713 = vunpack.c.l.b16 %v4658
        %v4714 = vunpack.c.l.b16 %v4659
        %v4715 = vunpack.c.l.b16 %v4660
        %v4716 = vunpack.c.l.b16 %v4661
        %v4717 = vunpack.c.l.b16 %v4662
        %v4718 = vunpack.c.l.b16 %v4663
        %v4719 = vunpack.c.l.b16 %v4664
        %v4720 = vunpack.c.l.b16 %v4665
        %v4721 = vunpack.c.l.b16 %v4666
        %v4722 = vunpack.c.l.b16 %v4667
        %v4723 = vunpack.c.l.b16 %v4668
        %v4724 = vunpack.c.l.b16 %v4669
        %v4725 = vunpack.c.l.b16 %v4670
        %v4726 = vunpack.c.l.b16 %v4671
        %v4727 = vunpack.c.l.b16 %v4672
        %v4728 = vunpack.c.l.b16 %v4673
        %v4729 = vunpack.c.l.b16 %v4674
        %v4730 = vunpack.c.l.b16 %v4675
        %v4731 = vunpack.c.l.b16 %v4676
        %v4732 = vunpack.c.l.b16 %v4677
        %v4733 = vunpack.c.l.b16 %v4678
        %v4734 = vunpack.c.l.b16 %v4679
        %v4735 = vpack.c.b16 %v4712, %v4711
        %v4736 = vpack.c.b16 %v4714, %v4713
        %v4737 = vpack.c.b16 %v4716, %v4715
        %v4738 = vpack.c.b16 %v4718, %v4717
        %v4739 = vpack.c.b16 %v4720, %v4719
        %v4740 = vpack.c.b16 %v4722, %v4721
        %v4741 = vpack.c.b16 %v4724, %v4723
        %v4742 = vpack.c.b16 %v4726, %v4725
        %v4743 = vpack.c.b16 %v4728, %v4727
        %v4744 = vpack.c.b16 %v4730, %v4729
        %v4745 = vpack.c.b16 %v4732, %v4731
        %v4746 = vpack.c.b16 %v4734, %v4733
        %v4760 = vsel %vm942, %v4655, 0
        %4762 = vmatprep.subr.bf16.mxu0 0
        %4763 = vmatpush1.bf16.msra.mxu0 %v4735
        %4764 = vmatprep.subr.bf16.mxu0 0
        %4765 = vmatpush1.bf16.msra.mxu0 %v4736
        %4766 = vmatprep.subr.bf16.mxu0 0
        %4767 = vmatpush1.bf16.msra.mxu0 %v4737
        %4768 = vmatprep.subr.bf16.mxu0 0
        %4769 = vmatpush1.bf16.msra.mxu0 %v4738
        %4770 = vmatprep.subr.bf16.mxu0 0
        %4771 = vmatpush1.bf16.msra.mxu0 %v4739
        %4772 = vmatprep.subr.bf16.mxu0 0
        %4773 = vmatpush1.bf16.msra.mxu0 %v4740
        %4774 = vmatprep.subr.bf16.mxu0 0
        %4775 = vmatpush1.bf16.msra.mxu0 %v4741
        %4776 = vmatprep.subr.bf16.mxu0 0
        %4777 = vmatpush1.bf16.msra.mxu0 %v4742
        %4778 = vmatprep.subr.bf16.mxu0 0
        %4779 = vmatpush1.bf16.msra.mxu0 %v4743
        %4780 = vmatprep.subr.bf16.mxu0 0
        %4781 = vmatpush1.bf16.msra.mxu0 %v4744
        %4782 = vmatprep.subr.bf16.mxu0 0
        %4783 = vmatpush1.bf16.msra.mxu0 %v4745
        %4784 = vmatprep.subr.bf16.mxu0 0
        %4785 = vmatpush1.bf16.msra.mxu0 %v4746
        %4786 = vmatprep.subr.bf16.mxu0 0
        %4787 = vmatpush1.bf16.msra.mxu0 0
        %4788 = vmatprep.subr.bf16.mxu0 0
        %4789 = vmatpush1.bf16.msra.mxu0 0
        %4790 = vmatprep.subr.bf16.mxu0 0
        %4791 = vmatpush1.bf16.msra.mxu0 0
        %4792 = vmatprep.subr.bf16.mxu0 0
        %4793 = vmatpush1.bf16.msra.mxu0 0
        %4794 = vmatprep.mubr.bf16.mxu0 %v4760
        %4795 = vmatmul.mubr.bf16.gmra.mrb[0].mxu0 %v4654
        %v4796 = vpop.f32.mrb[0].mxu0
        %v4797 = vadd.f32 %v4685, %v4796
        %v4798 = vpop.f32.mrb[0].mxu0
        %v4799 = vpop.f32.mrb[0].mxu0
        %v4800 = vadd.f32 %v4685, %v4799
        %v4801 = vpop.f32.mrb[0].mxu0
        %4802 = vdwg.mxu0
        %4803 = vst [vmem:[%s660] sm:$0xff] %v4797
        %4804 = vst [vmem:[%s660 + $0x8] sm:$0xff] %v4800
        %s4805 = smul.u32 2, %s20
        %p4806 = scmp.lt.s32.totalorder %s4805, 3
        %s4807 = scalar_select %p4806, %s4805, 3
        %s4808 = smul.addr %s4807, 8
        %s4809 = scalar_lea.vmem %s9, %s4808
        // Predicated region
        $region171: #{contextualized_forward.1} parent=157 // pred_check
          %p4810 = pneg %p242
        $region172: #{contextualized_forward.1} parent=157 // pred_check_branch
          %4812 = sbr.rel (%p4810) target = $region174
        $region173: #{contextualized_forward.1} parent=157 // pred_region
          %s4813 = smul.u32 2, %s20
        $region174: #{contextualized_forward.1} parent=157 // pred_fallthru
          _
      $region158: #{contextualized_forward.1} parent=5 // pred_fallthru
        _
      %p4814 = scmp.le.s32.totalorder 2, %s15
      // Predicated region
      $region175: #{contextualized_forward.1} parent=5 // pred_check
        %p4815 = pneg %p4814
      $region176: #{contextualized_forward.1} parent=5 // pred_check_branch
        %4817 = sbr.rel (%p4815) target = $region178
      $region177: #{contextualized_forward.1} parent=5 // pred_region
        %s4818 = ssub.s32 %s15, 2
        // Predicated region
        $region179: #{contextualized_forward.1} parent=177 // pred_check
          %p4819 = pneg %p248
        $region180: #{contextualized_forward.1} parent=177 // pred_check_branch
          %4821 = sbr.rel (%p4819) target = $region182
        $region181: #{contextualized_forward.1} parent=177 // pred_region
          %s4822 = smul.u32 2, %s21
          %p4823 = scmp.lt.s32.totalorder %s4822, 3
          %s4824 = scalar_select %p4823, %s4822, 3
          %s4825 = smul.addr %s4824, 8
          %s4826 = scalar_lea.vmem %s9, %s4825
        $region182: #{contextualized_forward.1} parent=177 // pred_fallthru
          _
      $region178: #{contextualized_forward.1} parent=5 // pred_fallthru
        _
    $region6: #{contextualized_forward.1} parent=1 // loop_footer
      %s19 = sadd.s32 1, %s15
    $region7: #{contextualized_forward.1} parent=1 // loop_footer_branch
      %14 = sbr.rel target = $region3
    $region8: #{contextualized_forward.1} parent=1 // loop_exit
      _

</llo_original>
